<compile_context>
chip_gen: v7x
topology: tpu7x:2x2x1
jax: 0.10.0
libtpu: 0.0.40
codegen_flags: <defaults>
</compile_context>

<pallas_src>
import jax
import jax.numpy as jnp
from jax.experimental import pallas as pl
from jax.experimental.pallas import tpu as pltpu

LEAKY_SLOPE = 0.01   # F.leaky_relu default negative slope
BN_EPS = 1e-5        # nn.BatchNorm2d default eps


# =====================================================================
# Kernel
# =====================================================================
def _conv_bn_lrelu(a_bf16, r_ref, g_ref, p_ref, pt_ref, gb_ref):
    """One `conv(3x3, s=2, p=1) -> BatchNorm2d(train) -> leaky_relu` stage.

    a_bf16 : (N*H, W*Cin)        bf16 value, a[(n*H+h), (w*Cin+c)] = act[n,h,w,c]
    r_ref  : (3, N*Ho, N*H)      bf16  0/1 row selector per kernel row kh
    g_ref  : (3, W*Cin, Wo*Cout) bf16  column selection (x) conv weights per kh
    p_ref  : (Wo*Cout, Cout)     f32   0/1 channel-collapse matrix
    pt_ref : (Cout, Wo*Cout)     f32   its transpose (channel tile / broadcast)
    gb_ref : (2, Cout)           f32   [gamma; beta]
    Returns the (N*Ho, Wo*Cout) f32 activation in the same layout.
    """
    # --- conv: y = sum_kh (R_kh @ a) @ G_kh  (6 bf16 MXU matmuls, f32 accumulate) ---
    y = None
    for kh in range(3):
        b = jnp.dot(r_ref[kh], a_bf16,
                    preferred_element_type=jnp.float32).astype(jnp.bfloat16)
        t = jnp.dot(b, g_ref[kh], preferred_element_type=jnp.float32)
        y = t if y is None else y + t                        # (N*Ho, Wo*Cout) f32

    # --- BatchNorm2d training mode: biased batch stats over N*Ho*Wo, all f32 ---
    # Channel c occupies lanes {wo*Cout + c}; P / P^T collapse / re-tile those lanes.
    c_out = p_ref.shape[1]
    count = y.shape[0] * (y.shape[1] // c_out)               # N*Ho*Wo (static)
    inv_cnt = 1.0 / float(count)
    p = p_ref[...]
    pt = pt_ref[...]
    mean_c = jnp.dot(jnp.sum(y, axis=0, keepdims=True), p,
                     preferred_element_type=jnp.float32) * inv_cnt        # (1, Cout)
    d = y - jnp.dot(mean_c, pt, preferred_element_type=jnp.float32)
    var_c = jnp.dot(jnp.sum(d * d, axis=0, keepdims=True), p,
                    preferred_element_type=jnp.float32) * inv_cnt         # (1, Cout)
    scale_c = gb_ref[0:1, :] * jax.lax.rsqrt(var_c + BN_EPS)              # (1, Cout)
    y = (d * jnp.dot(scale_c, pt, preferred_element_type=jnp.float32)
         + jnp.dot(gb_ref[1:2, :], pt, preferred_element_type=jnp.float32))
    return jnp.where(y >= 0.0, y, LEAKY_SLOPE * y)                        # leaky_relu


def _encoder_kernel(x_ref,
                    r1_ref, g1_ref, p1_ref, pt1_ref, gb1_ref,
                    r2_ref, g2_ref, p2_ref, pt2_ref, gb2_ref,
                    r3_ref, g3_ref, p3_ref, pt3_ref, gb3_ref,
                    sh_ref, wh_ref, hb_ref, eps_ref,
                    z_ref, kl_ref):
    n_b = eps_ref.shape[0]
    lat = eps_ref.shape[-1]

    # Three conv -> BN -> leaky_relu stages; activations never touch VMEM.
    a1 = _conv_bn_lrelu(x_ref[...], r1_ref, g1_ref, p1_ref, pt1_ref, gb1_ref)
    a2 = _conv_bn_lrelu(a1.astype(jnp.bfloat16),
                        r2_ref, g2_ref, p2_ref, pt2_ref, gb2_ref)
    a3 = _conv_bn_lrelu(a2.astype(jnp.bfloat16),
                        r3_ref, g3_ref, p3_ref, pt3_ref, gb3_ref)

    # Head: fused proj_mu | proj_log_var, entirely in f32 (accuracy).
    #   res[n] = sum_h3 (S_h3 @ a3)[n] @ Wh[h3] + b
    h3 = sh_ref.shape[0]
    acc = jnp.zeros((n_b, 2 * lat), jnp.float32)
    for h in range(h3):
        feat = jnp.dot(sh_ref[h], a3, preferred_element_type=jnp.float32)  # (N, W3*C3)
        acc = acc + jnp.dot(feat, wh_ref[h], preferred_element_type=jnp.float32)
    acc = acc + hb_ref[...]                                                # (N, 2L)

    mu = acc[:, :lat]
    logvar = acc[:, lat:]
    z_ref[...] = eps_ref[...] * jnp.exp(0.5 * logvar) + mu                 # one store

    kl_terms = 1.0 + logvar - mu * mu - jnp.exp(logvar)                    # (N, L)
    kl_row = jnp.sum(kl_terms, axis=1, keepdims=True)                      # (N, 1)
    kl_ref[...] = -0.5 * jnp.sum(kl_row, axis=0, keepdims=True)            # (1, 1)


# =====================================================================
# Host wrapper: single pallas_call, everything resident in VMEM
# =====================================================================
_VMEM = pl.BlockSpec(memory_space=pltpu.MemorySpace.VMEM)


@jax.jit
def encoder_forward(x_nchw, packed, eps):
    """Encoder.forward: returns (z, kl_div). Input is PyTorch-style NCHW."""
    n_b, c0, h0, w0 = x_nchw.shape
    lat = eps.shape[-1]
    # NCHW -> NHWC -> (N*H, W*C): rows on sublanes, (w, c) packed along lanes.
    x2 = jnp.transpose(x_nchw, (0, 2, 3, 1)).reshape(n_b * h0, w0 * c0)
    x2 = x2.astype(jnp.bfloat16)

    z, kl = pl.pallas_call(
        _encoder_kernel,
        out_shape=(jax.ShapeDtypeStruct((n_b, lat), jnp.float32),
                   jax.ShapeDtypeStruct((1, 1), jnp.float32)),
        in_specs=[_VMEM] * 20,
        out_specs=(_VMEM, _VMEM),
    )(x2,
      packed["r1"], packed["g1"], packed["p1"], packed["pt1"], packed["gb1"],
      packed["r2"], packed["g2"], packed["p2"], packed["pt2"], packed["gb2"],
      packed["r3"], packed["g3"], packed["p3"], packed["pt3"], packed["gb3"],
      packed["sh"], packed["wh"], packed["hb"], eps)
    return z, kl[0, 0]


# =====================================================================
# Parameter packing: fold stride-2 selection into matmul operands (once per model)
# =====================================================================
def _col_select(w_in):
    """sel[kw, w, wo] = 1 iff unpadded input column w == 2*wo + kw - 1 (else 0 = pad)."""
    w = jnp.arange(w_in)[:, None]
    wo = jnp.arange(w_in // 2)[None, :]
    return jnp.stack([(w == 2 * wo + kw - 1) for kw in range(3)]).astype(jnp.float32)


def _row_select(n_batch, h_in):
    """r[kh, n*Ho+ho, n'*H+h] = 1 iff n == n' and h == 2*ho + kh - 1 (all-zero row = pad)."""
    h_out = h_in // 2
    row_n = jnp.arange(n_batch * h_out)[:, None] // h_out
    row_h = jnp.arange(n_batch * h_out)[:, None] % h_out
    col_n = jnp.arange(n_batch * h_in)[None, :] // h_in
    col_h = jnp.arange(n_batch * h_in)[None, :] % h_in
    return jnp.stack([((row_n == col_n) & (col_h == 2 * row_h + kh - 1))
                      for kh in range(3)]).astype(jnp.float32)


def _pack_conv_bn(w_oihw, gamma, beta, n_batch, hw_in):
    """Pack one conv+BN stage into the kernel's matmul operands."""
    c_out, c_in = w_oihw.shape[0], w_oihw.shape[1]
    hw_out = hw_in // 2
    wt = jnp.transpose(w_oihw, (2, 3, 1, 0))                 # (kh, kw, Cin, Cout)
    sel = _col_select(hw_in)                                  # (kw, W, Wo)
    # G[kh][(w, c), (wo, co)] = sum_kw sel[kw, w, wo] * wt[kh, kw, c, co]
    g = jnp.einsum("xwv,kxcd->kwcvd", sel, wt)
    g = g.reshape(3, hw_in * c_in, hw_out * c_out)
    r = _row_select(n_batch, hw_in)
    p = jnp.tile(jnp.eye(c_out, dtype=jnp.float32), (hw_out, 1))   # (Wo*Cout, Cout)
    return dict(r=r.astype(jnp.bfloat16), g=g.astype(jnp.bfloat16),
                p=p, pt=p.T, gb=jnp.stack([gamma, beta]).astype(jnp.float32))


def pack_params(params, n_batch, img_size):
    """Convert PyTorch-layout parameters into kernel operands (run once per model).

    * Conv biases are intentionally dropped: training-mode BatchNorm's mean
      subtraction cancels them exactly (eval-mode / running-stat BN is not modeled).
    * Head weights are re-ordered from PyTorch's (c, h, w) flatten to the kernel's
      (h, w, c) feature layout here, so real checkpoints import correctly.
    """
    assert img_size % 8 == 0, "img_size must be divisible by 8"
    s1, s2, s3 = img_size // 2, img_size // 4, img_size // 8
    l1 = _pack_conv_bn(params["conv1_w"], params["bn1_g"], params["bn1_b"], n_batch, img_size)
    l2 = _pack_conv_bn(params["conv2_w"], params["bn2_g"], params["bn2_b"], n_batch, s1)
    l3 = _pack_conv_bn(params["conv3_w"], params["bn3_g"], params["bn3_b"], n_batch, s2)

    c3 = params["conv3_w"].shape[0]
    lat = params["proj_mu_w"].shape[0]
    # Fused head:  (2L, C3*H3*W3) torch (c,h,w) flatten  ->  (H3, W3*C3, 2L)
    w_cat = jnp.concatenate([params["proj_mu_w"], params["proj_log_var_w"]], axis=0)
    wh = (w_cat.reshape(2 * lat, c3, s3, s3)
          .transpose(2, 3, 1, 0)                              # (H3, W3, C3, 2L)
          .reshape(s3, s3 * c3, 2 * lat)).astype(jnp.float32)
    hb = jnp.concatenate([params["proj_mu_b"], params["proj_log_var_b"]])[None, :]
    # sh[h3, n, n'*H3 + h] = 1 iff n == n' and h == h3  (head row gather, per batch elem)
    row_n = jnp.arange(n_batch)[:, None]
    col_n = jnp.arange(n_batch * s3)[None, :] // s3
    col_h = jnp.arange(n_batch * s3)[None, :] % s3
    sh = jnp.stack([((row_n == col_n) & (col_h == h)) for h in range(s3)]).astype(jnp.float32)

    return {
        "r1": l1["r"], "g1": l1["g"], "p1": l1["p"], "pt1": l1["pt"], "gb1": l1["gb"],
        "r2": l2["r"], "g2": l2["g"], "p2": l2["p"], "pt2": l2["pt"], "gb2": l2["gb"],
        "r3": l3["r"], "g3": l3["g"], "p3": l3["p"], "pt3": l3["pt"], "gb3": l3["gb"],
        "sh": sh, "wh": wh, "hb": hb.astype(jnp.float32),
    }


# =====================================================================
# Synthetic parameters (PyTorch layouts, shapes follow Encoder.__init__)
# =====================================================================
def init_params(key, num_latent_dims, num_img_channels, max_num_filters, img_size):
    """shortcut2 / shortcut3 are defined in __init__ but never used in forward() -> omitted."""
    f1, f2, f3 = max_num_filters // 4, max_num_filters // 2, max_num_filters
    flat = f3 * (img_size // 8) ** 2
    ks = jax.random.split(key, 10)
    rnd = lambda k, shape, s: s * jax.random.normal(k, shape, jnp.float32)
    return {
        "conv1_w": rnd(ks[0], (f1, num_img_channels, 3, 3), 0.1),
        "conv1_b": rnd(ks[1], (f1,), 0.1),
        "conv2_w": rnd(ks[2], (f2, f1, 3, 3), 0.1),
        "conv2_b": rnd(ks[3], (f2,), 0.1),
        "conv3_w": rnd(ks[4], (f3, f2, 3, 3), 0.1),
        "conv3_b": rnd(ks[5], (f3,), 0.1),
        "bn1_g": jnp.ones((f1,), jnp.float32), "bn1_b": jnp.zeros((f1,), jnp.float32),
        "bn2_g": jnp.ones((f2,), jnp.float32), "bn2_b": jnp.zeros((f2,), jnp.float32),
        "bn3_g": jnp.ones((f3,), jnp.float32), "bn3_b": jnp.zeros((f3,), jnp.float32),
        "proj_mu_w": rnd(ks[6], (num_latent_dims, flat), 0.05),
        "proj_mu_b": rnd(ks[7], (num_latent_dims,), 0.05),
        "proj_log_var_w": rnd(ks[8], (num_latent_dims, flat), 0.05),
        "proj_log_var_b": rnd(ks[9], (num_latent_dims,), 0.05),
    }


# =====================================================================
# Pure-JAX f32 reference with exact PyTorch semantics, for validation
# =====================================================================
def encoder_reference(x_nchw, params, eps):
    def block(x, w, b, gamma, beta):
        y = jax.lax.conv_general_dilated(
            x, w, window_strides=(2, 2), padding=((1, 1), (1, 1)),
            dimension_numbers=("NCHW", "OIHW", "NCHW"))
        y = y + b[None, :, None, None]
        mean = jnp.mean(y, axis=(0, 2, 3), keepdims=True)
        var = jnp.mean(jnp.square(y - mean), axis=(0, 2, 3), keepdims=True)
        y = (y - mean) * jax.lax.rsqrt(var + BN_EPS)
        y = y * gamma[None, :, None, None] + beta[None, :, None, None]
        return jnp.where(y >= 0.0, y, LEAKY_SLOPE * y)

    x = block(x_nchw, params["conv1_w"], params["conv1_b"], params["bn1_g"], params["bn1_b"])
    x = block(x, params["conv2_w"], params["conv2_b"], params["bn2_g"], params["bn2_b"])
    x = block(x, params["conv3_w"], params["conv3_b"], params["bn3_g"], params["bn3_b"])
    feat = x.reshape(x.shape[0], -1)                     # torch.flatten(x, 1): (c, h, w)
    mu = feat @ params["proj_mu_w"].T + params["proj_mu_b"]
    logvar = feat @ params["proj_log_var_w"].T + params["proj_log_var_b"]
    z = eps * jnp.exp(0.5 * logvar) + mu
    kl = -0.5 * jnp.sum(1.0 + logvar - mu * mu - jnp.exp(logvar))
    return z, kl


# =====================================================================
if __name__ == "__main__":
    N = 2
    NUM_IMG_CHANNELS = 4
    MAX_NUM_FILTERS = 32
    NUM_LATENT_DIMS = 8
    IMG_SIZE = 16

    key = jax.random.PRNGKey(0)
    k_params, k_x, k_eps = jax.random.split(key, 3)
    params = init_params(k_params, NUM_LATENT_DIMS, NUM_IMG_CHANNELS,
                         MAX_NUM_FILTERS, IMG_SIZE)
    x = jax.random.normal(k_x, (N, NUM_IMG_CHANNELS, IMG_SIZE, IMG_SIZE), jnp.float32)
    # torch.randn_like equivalent, made explicit & deterministic so the reference matches.
    eps = jax.random.normal(k_eps, (N, NUM_LATENT_DIMS), jnp.float32)

    packed = pack_params(params, N, IMG_SIZE)
    z, kl_div = encoder_forward(x, packed, eps)
    jax.block_until_ready((z, kl_div))

    assert z.shape == (N, NUM_LATENT_DIMS) and kl_div.shape == ()
    assert bool(jnp.isfinite(z).all()) and bool(jnp.isfinite(kl_div))

    # Validate against the PyTorch-semantics f32 reference.  Conv matmuls run in
    # bf16; BN / head / reparam / KL are f32, so tolerances are tighter than before.
    z_ref, kl_ref = encoder_reference(x, params, eps)
    z_err = float(jnp.max(jnp.abs(z - z_ref)))
    kl_err = float(jnp.abs(kl_div - kl_ref))
    assert z_err < 0.1, f"z mismatch: max abs err {z_err}"
    assert kl_err < 0.5 + 0.05 * float(jnp.abs(kl_ref)), f"kl mismatch: abs err {kl_err}"
    print("KERNEL_OK")
</pallas_src>

<mosaic_0001>
module attributes {stable_mosaic.version = 11 : i64} {
  func.func @_encoder_kernel(%arg0: memref<32x64xbf16, #tpu.memory_space<vmem>>, %arg1: memref<3x16x32xbf16, #tpu.memory_space<vmem>>, %arg2: memref<3x64x64xbf16, #tpu.memory_space<vmem>>, %arg3: memref<64x8xf32, #tpu.memory_space<vmem>>, %arg4: memref<8x64xf32, #tpu.memory_space<vmem>>, %arg5: memref<2x8xf32, #tpu.memory_space<vmem>>, %arg6: memref<3x8x16xbf16, #tpu.memory_space<vmem>>, %arg7: memref<3x64x64xbf16, #tpu.memory_space<vmem>>, %arg8: memref<64x16xf32, #tpu.memory_space<vmem>>, %arg9: memref<16x64xf32, #tpu.memory_space<vmem>>, %arg10: memref<2x16xf32, #tpu.memory_space<vmem>>, %arg11: memref<3x4x8xbf16, #tpu.memory_space<vmem>>, %arg12: memref<3x64x64xbf16, #tpu.memory_space<vmem>>, %arg13: memref<64x32xf32, #tpu.memory_space<vmem>>, %arg14: memref<32x64xf32, #tpu.memory_space<vmem>>, %arg15: memref<2x32xf32, #tpu.memory_space<vmem>>, %arg16: memref<2x2x4xf32, #tpu.memory_space<vmem>>, %arg17: memref<2x64x16xf32, #tpu.memory_space<vmem>>, %arg18: memref<1x16xf32, #tpu.memory_space<vmem>>, %arg19: memref<2x8xf32, #tpu.memory_space<vmem>>, %arg20: memref<2x8xf32, #tpu.memory_space<vmem>>, %arg21: memref<1x1xf32, #tpu.memory_space<vmem>>) attributes {dimension_semantics = [], scalar_prefetch = 0 : i64, scratch_operands = 0 : i64, tpu.core_type = #tpu.core_type<tc>} {
    %c0 = arith.constant 0 : index
    %c0_0 = arith.constant 0 : index
    %0 = vector.load %arg0[%c0, %c0_0] : memref<32x64xbf16, #tpu.memory_space<vmem>>, vector<32x64xbf16>
    %c0_1 = arith.constant 0 : index
    %c0_2 = arith.constant 0 : index
    %c0_3 = arith.constant 0 : index
    %1 = vector.load %arg1[%c0_1, %c0_2, %c0_3] : memref<3x16x32xbf16, #tpu.memory_space<vmem>>, vector<1x16x32xbf16>
    %2 = vector.shape_cast %1 : vector<1x16x32xbf16> to vector<16x32xbf16>
    %cst = arith.constant dense<0.000000e+00> : vector<16x64xf32>
    %3 = tpu.matmul %2, %0, %cst {dimension_numbers = #tpu.dot_dimension_numbers<[1], [0], [0], [1], [0, 0, 1, 1], [], []>} : vector<16x32xbf16>, vector<32x64xbf16>, vector<16x64xf32> -> vector<16x64xf32>
    %4 = arith.truncf %3 : vector<16x64xf32> to vector<16x64xbf16>
    %c0_4 = arith.constant 0 : index
    %c0_5 = arith.constant 0 : index
    %c0_6 = arith.constant 0 : index
    %5 = vector.load %arg2[%c0_4, %c0_5, %c0_6] : memref<3x64x64xbf16, #tpu.memory_space<vmem>>, vector<1x64x64xbf16>
    %6 = vector.shape_cast %5 : vector<1x64x64xbf16> to vector<64x64xbf16>
    %cst_7 = arith.constant dense<0.000000e+00> : vector<16x64xf32>
    %7 = tpu.matmul %4, %6, %cst_7 {dimension_numbers = #tpu.dot_dimension_numbers<[1], [0], [0], [1], [0, 0, 1, 1], [], []>} : vector<16x64xbf16>, vector<64x64xbf16>, vector<16x64xf32> -> vector<16x64xf32>
    %c1 = arith.constant 1 : index
    %c0_8 = arith.constant 0 : index
    %c0_9 = arith.constant 0 : index
    %8 = vector.load %arg1[%c1, %c0_8, %c0_9] : memref<3x16x32xbf16, #tpu.memory_space<vmem>>, vector<1x16x32xbf16>
    %9 = vector.shape_cast %8 : vector<1x16x32xbf16> to vector<16x32xbf16>
    %cst_10 = arith.constant dense<0.000000e+00> : vector<16x64xf32>
    %10 = tpu.matmul %9, %0, %cst_10 {dimension_numbers = #tpu.dot_dimension_numbers<[1], [0], [0], [1], [0, 0, 1, 1], [], []>} : vector<16x32xbf16>, vector<32x64xbf16>, vector<16x64xf32> -> vector<16x64xf32>
    %11 = arith.truncf %10 : vector<16x64xf32> to vector<16x64xbf16>
    %c1_11 = arith.constant 1 : index
    %c0_12 = arith.constant 0 : index
    %c0_13 = arith.constant 0 : index
    %12 = vector.load %arg2[%c1_11, %c0_12, %c0_13] : memref<3x64x64xbf16, #tpu.memory_space<vmem>>, vector<1x64x64xbf16>
    %13 = vector.shape_cast %12 : vector<1x64x64xbf16> to vector<64x64xbf16>
    %cst_14 = arith.constant dense<0.000000e+00> : vector<16x64xf32>
    %14 = tpu.matmul %11, %13, %cst_14 {dimension_numbers = #tpu.dot_dimension_numbers<[1], [0], [0], [1], [0, 0, 1, 1], [], []>} : vector<16x64xbf16>, vector<64x64xbf16>, vector<16x64xf32> -> vector<16x64xf32>
    %15 = arith.addf %7, %14 : vector<16x64xf32>
    %c2 = arith.constant 2 : index
    %c0_15 = arith.constant 0 : index
    %c0_16 = arith.constant 0 : index
    %16 = vector.load %arg1[%c2, %c0_15, %c0_16] : memref<3x16x32xbf16, #tpu.memory_space<vmem>>, vector<1x16x32xbf16>
    %17 = vector.shape_cast %16 : vector<1x16x32xbf16> to vector<16x32xbf16>
    %cst_17 = arith.constant dense<0.000000e+00> : vector<16x64xf32>
    %18 = tpu.matmul %17, %0, %cst_17 {dimension_numbers = #tpu.dot_dimension_numbers<[1], [0], [0], [1], [0, 0, 1, 1], [], []>} : vector<16x32xbf16>, vector<32x64xbf16>, vector<16x64xf32> -> vector<16x64xf32>
    %19 = arith.truncf %18 : vector<16x64xf32> to vector<16x64xbf16>
    %c2_18 = arith.constant 2 : index
    %c0_19 = arith.constant 0 : index
    %c0_20 = arith.constant 0 : index
    %20 = vector.load %arg2[%c2_18, %c0_19, %c0_20] : memref<3x64x64xbf16, #tpu.memory_space<vmem>>, vector<1x64x64xbf16>
    %21 = vector.shape_cast %20 : vector<1x64x64xbf16> to vector<64x64xbf16>
    %cst_21 = arith.constant dense<0.000000e+00> : vector<16x64xf32>
    %22 = tpu.matmul %19, %21, %cst_21 {dimension_numbers = #tpu.dot_dimension_numbers<[1], [0], [0], [1], [0, 0, 1, 1], [], []>} : vector<16x64xbf16>, vector<64x64xbf16>, vector<16x64xf32> -> vector<16x64xf32>
    %23 = arith.addf %15, %22 : vector<16x64xf32>
    %c0_22 = arith.constant 0 : index
    %c0_23 = arith.constant 0 : index
    %24 = vector.load %arg3[%c0_22, %c0_23] : memref<64x8xf32, #tpu.memory_space<vmem>>, vector<64x8xf32>
    %c0_24 = arith.constant 0 : index
    %c0_25 = arith.constant 0 : index
    %25 = vector.load %arg4[%c0_24, %c0_25] : memref<8x64xf32, #tpu.memory_space<vmem>>, vector<8x64xf32>
    %cst_26 = arith.constant dense<0.000000e+00> : vector<64xf32>
    %26 = vector.multi_reduction <add>, %23, %cst_26 [0] : vector<16x64xf32> to vector<64xf32>
    %27 = vector.shape_cast %26 : vector<64xf32> to vector<1x64xf32>
    %cst_27 = arith.constant dense<0.000000e+00> : vector<1x8xf32>
    %28 = tpu.matmul %27, %24, %cst_27 {dimension_numbers = #tpu.dot_dimension_numbers<[1], [0], [0], [1], [0, 0, 1, 1], [], []>} : vector<1x64xf32>, vector<64x8xf32>, vector<1x8xf32> -> vector<1x8xf32>
    %cst_28 = arith.constant 7.812500e-03 : f32
    %29 = vector.broadcast %cst_28 : f32 to vector<1x8xf32>
    %30 = arith.mulf %28, %29 : vector<1x8xf32>
    %cst_29 = arith.constant dense<0.000000e+00> : vector<1x64xf32>
    %31 = tpu.matmul %30, %25, %cst_29 {dimension_numbers = #tpu.dot_dimension_numbers<[1], [0], [0], [1], [0, 0, 1, 1], [], []>} : vector<1x8xf32>, vector<8x64xf32>, vector<1x64xf32> -> vector<1x64xf32>
    %32 = vector.broadcast %31 : vector<1x64xf32> to vector<16x64xf32>
    %33 = arith.subf %23, %32 : vector<16x64xf32>
    %34 = arith.mulf %33, %33 : vector<16x64xf32>
    %cst_30 = arith.constant dense<0.000000e+00> : vector<64xf32>
    %35 = vector.multi_reduction <add>, %34, %cst_30 [0] : vector<16x64xf32> to vector<64xf32>
    %36 = vector.shape_cast %35 : vector<64xf32> to vector<1x64xf32>
    %cst_31 = arith.constant dense<0.000000e+00> : vector<1x8xf32>
    %37 = tpu.matmul %36, %24, %cst_31 {dimension_numbers = #tpu.dot_dimension_numbers<[1], [0], [0], [1], [0, 0, 1, 1], [], []>} : vector<1x64xf32>, vector<64x8xf32>, vector<1x8xf32> -> vector<1x8xf32>
    %cst_32 = arith.constant 7.812500e-03 : f32
    %38 = vector.broadcast %cst_32 : f32 to vector<1x8xf32>
    %39 = arith.mulf %37, %38 : vector<1x8xf32>
    %c0_33 = arith.constant 0 : index
    %c0_34 = arith.constant 0 : index
    %40 = vector.load %arg5[%c0_33, %c0_34] : memref<2x8xf32, #tpu.memory_space<vmem>>, vector<1x8xf32>
    %cst_35 = arith.constant 9.99999974E-6 : f32
    %41 = vector.broadcast %cst_35 : f32 to vector<1x8xf32>
    %42 = arith.addf %39, %41 : vector<1x8xf32>
    %43 = math.rsqrt %42 : vector<1x8xf32>
    %44 = arith.mulf %40, %43 : vector<1x8xf32>
    %cst_36 = arith.constant dense<0.000000e+00> : vector<1x64xf32>
    %45 = tpu.matmul %44, %25, %cst_36 {dimension_numbers = #tpu.dot_dimension_numbers<[1], [0], [0], [1], [0, 0, 1, 1], [], []>} : vector<1x8xf32>, vector<8x64xf32>, vector<1x64xf32> -> vector<1x64xf32>
    %46 = vector.broadcast %45 : vector<1x64xf32> to vector<16x64xf32>
    %47 = arith.mulf %33, %46 : vector<16x64xf32>
    %c1_37 = arith.constant 1 : index
    %c0_38 = arith.constant 0 : index
    %48 = vector.load %arg5[%c1_37, %c0_38] : memref<2x8xf32, #tpu.memory_space<vmem>>, vector<1x8xf32>
    %cst_39 = arith.constant dense<0.000000e+00> : vector<1x64xf32>
    %49 = tpu.matmul %48, %25, %cst_39 {dimension_numbers = #tpu.dot_dimension_numbers<[1], [0], [0], [1], [0, 0, 1, 1], [], []>} : vector<1x8xf32>, vector<8x64xf32>, vector<1x64xf32> -> vector<1x64xf32>
    %50 = vector.broadcast %49 : vector<1x64xf32> to vector<16x64xf32>
    %51 = arith.addf %47, %50 : vector<16x64xf32>
    %cst_40 = arith.constant 0.000000e+00 : f32
    %52 = vector.broadcast %cst_40 : f32 to vector<16x64xf32>
    %53 = arith.cmpf oge, %51, %52 : vector<16x64xf32>
    %cst_41 = arith.constant 0.00999999977 : f32
    %54 = vector.broadcast %cst_41 : f32 to vector<16x64xf32>
    %55 = arith.mulf %54, %51 : vector<16x64xf32>
    %56 = arith.select %53, %51, %55 : vector<16x64xi1>, vector<16x64xf32>
    %57 = arith.truncf %56 : vector<16x64xf32> to vector<16x64xbf16>
    %c0_42 = arith.constant 0 : index
    %c0_43 = arith.constant 0 : index
    %c0_44 = arith.constant 0 : index
    %58 = vector.load %arg6[%c0_42, %c0_43, %c0_44] : memref<3x8x16xbf16, #tpu.memory_space<vmem>>, vector<1x8x16xbf16>
    %59 = vector.shape_cast %58 : vector<1x8x16xbf16> to vector<8x16xbf16>
    %cst_45 = arith.constant dense<0.000000e+00> : vector<8x64xf32>
    %60 = tpu.matmul %59, %57, %cst_45 {dimension_numbers = #tpu.dot_dimension_numbers<[1], [0], [0], [1], [0, 0, 1, 1], [], []>} : vector<8x16xbf16>, vector<16x64xbf16>, vector<8x64xf32> -> vector<8x64xf32>
    %61 = arith.truncf %60 : vector<8x64xf32> to vector<8x64xbf16>
    %c0_46 = arith.constant 0 : index
    %c0_47 = arith.constant 0 : index
    %c0_48 = arith.constant 0 : index
    %62 = vector.load %arg7[%c0_46, %c0_47, %c0_48] : memref<3x64x64xbf16, #tpu.memory_space<vmem>>, vector<1x64x64xbf16>
    %63 = vector.shape_cast %62 : vector<1x64x64xbf16> to vector<64x64xbf16>
    %cst_49 = arith.constant dense<0.000000e+00> : vector<8x64xf32>
    %64 = tpu.matmul %61, %63, %cst_49 {dimension_numbers = #tpu.dot_dimension_numbers<[1], [0], [0], [1], [0, 0, 1, 1], [], []>} : vector<8x64xbf16>, vector<64x64xbf16>, vector<8x64xf32> -> vector<8x64xf32>
    %c1_50 = arith.constant 1 : index
    %c0_51 = arith.constant 0 : index
    %c0_52 = arith.constant 0 : index
    %65 = vector.load %arg6[%c1_50, %c0_51, %c0_52] : memref<3x8x16xbf16, #tpu.memory_space<vmem>>, vector<1x8x16xbf16>
    %66 = vector.shape_cast %65 : vector<1x8x16xbf16> to vector<8x16xbf16>
    %cst_53 = arith.constant dense<0.000000e+00> : vector<8x64xf32>
    %67 = tpu.matmul %66, %57, %cst_53 {dimension_numbers = #tpu.dot_dimension_numbers<[1], [0], [0], [1], [0, 0, 1, 1], [], []>} : vector<8x16xbf16>, vector<16x64xbf16>, vector<8x64xf32> -> vector<8x64xf32>
    %68 = arith.truncf %67 : vector<8x64xf32> to vector<8x64xbf16>
    %c1_54 = arith.constant 1 : index
    %c0_55 = arith.constant 0 : index
    %c0_56 = arith.constant 0 : index
    %69 = vector.load %arg7[%c1_54, %c0_55, %c0_56] : memref<3x64x64xbf16, #tpu.memory_space<vmem>>, vector<1x64x64xbf16>
    %70 = vector.shape_cast %69 : vector<1x64x64xbf16> to vector<64x64xbf16>
    %cst_57 = arith.constant dense<0.000000e+00> : vector<8x64xf32>
    %71 = tpu.matmul %68, %70, %cst_57 {dimension_numbers = #tpu.dot_dimension_numbers<[1], [0], [0], [1], [0, 0, 1, 1], [], []>} : vector<8x64xbf16>, vector<64x64xbf16>, vector<8x64xf32> -> vector<8x64xf32>
    %72 = arith.addf %64, %71 : vector<8x64xf32>
    %c2_58 = arith.constant 2 : index
    %c0_59 = arith.constant 0 : index
    %c0_60 = arith.constant 0 : index
    %73 = vector.load %arg6[%c2_58, %c0_59, %c0_60] : memref<3x8x16xbf16, #tpu.memory_space<vmem>>, vector<1x8x16xbf16>
    %74 = vector.shape_cast %73 : vector<1x8x16xbf16> to vector<8x16xbf16>
    %cst_61 = arith.constant dense<0.000000e+00> : vector<8x64xf32>
    %75 = tpu.matmul %74, %57, %cst_61 {dimension_numbers = #tpu.dot_dimension_numbers<[1], [0], [0], [1], [0, 0, 1, 1], [], []>} : vector<8x16xbf16>, vector<16x64xbf16>, vector<8x64xf32> -> vector<8x64xf32>
    %76 = arith.truncf %75 : vector<8x64xf32> to vector<8x64xbf16>
    %c2_62 = arith.constant 2 : index
    %c0_63 = arith.constant 0 : index
    %c0_64 = arith.constant 0 : index
    %77 = vector.load %arg7[%c2_62, %c0_63, %c0_64] : memref<3x64x64xbf16, #tpu.memory_space<vmem>>, vector<1x64x64xbf16>
    %78 = vector.shape_cast %77 : vector<1x64x64xbf16> to vector<64x64xbf16>
    %cst_65 = arith.constant dense<0.000000e+00> : vector<8x64xf32>
    %79 = tpu.matmul %76, %78, %cst_65 {dimension_numbers = #tpu.dot_dimension_numbers<[1], [0], [0], [1], [0, 0, 1, 1], [], []>} : vector<8x64xbf16>, vector<64x64xbf16>, vector<8x64xf32> -> vector<8x64xf32>
    %80 = arith.addf %72, %79 : vector<8x64xf32>
    %c0_66 = arith.constant 0 : index
    %c0_67 = arith.constant 0 : index
    %81 = vector.load %arg8[%c0_66, %c0_67] : memref<64x16xf32, #tpu.memory_space<vmem>>, vector<64x16xf32>
    %c0_68 = arith.constant 0 : index
    %c0_69 = arith.constant 0 : index
    %82 = vector.load %arg9[%c0_68, %c0_69] : memref<16x64xf32, #tpu.memory_space<vmem>>, vector<16x64xf32>
    %cst_70 = arith.constant dense<0.000000e+00> : vector<64xf32>
    %83 = vector.multi_reduction <add>, %80, %cst_70 [0] : vector<8x64xf32> to vector<64xf32>
    %84 = vector.shape_cast %83 : vector<64xf32> to vector<1x64xf32>
    %cst_71 = arith.constant dense<0.000000e+00> : vector<1x16xf32>
    %85 = tpu.matmul %84, %81, %cst_71 {dimension_numbers = #tpu.dot_dimension_numbers<[1], [0], [0], [1], [0, 0, 1, 1], [], []>} : vector<1x64xf32>, vector<64x16xf32>, vector<1x16xf32> -> vector<1x16xf32>
    %cst_72 = arith.constant 3.125000e-02 : f32
    %86 = vector.broadcast %cst_72 : f32 to vector<1x16xf32>
    %87 = arith.mulf %85, %86 : vector<1x16xf32>
    %cst_73 = arith.constant dense<0.000000e+00> : vector<1x64xf32>
    %88 = tpu.matmul %87, %82, %cst_73 {dimension_numbers = #tpu.dot_dimension_numbers<[1], [0], [0], [1], [0, 0, 1, 1], [], []>} : vector<1x16xf32>, vector<16x64xf32>, vector<1x64xf32> -> vector<1x64xf32>
    %89 = vector.broadcast %88 : vector<1x64xf32> to vector<8x64xf32>
    %90 = arith.subf %80, %89 : vector<8x64xf32>
    %91 = arith.mulf %90, %90 : vector<8x64xf32>
    %cst_74 = arith.constant dense<0.000000e+00> : vector<64xf32>
    %92 = vector.multi_reduction <add>, %91, %cst_74 [0] : vector<8x64xf32> to vector<64xf32>
    %93 = vector.shape_cast %92 : vector<64xf32> to vector<1x64xf32>
    %cst_75 = arith.constant dense<0.000000e+00> : vector<1x16xf32>
    %94 = tpu.matmul %93, %81, %cst_75 {dimension_numbers = #tpu.dot_dimension_numbers<[1], [0], [0], [1], [0, 0, 1, 1], [], []>} : vector<1x64xf32>, vector<64x16xf32>, vector<1x16xf32> -> vector<1x16xf32>
    %cst_76 = arith.constant 3.125000e-02 : f32
    %95 = vector.broadcast %cst_76 : f32 to vector<1x16xf32>
    %96 = arith.mulf %94, %95 : vector<1x16xf32>
    %c0_77 = arith.constant 0 : index
    %c0_78 = arith.constant 0 : index
    %97 = vector.load %arg10[%c0_77, %c0_78] : memref<2x16xf32, #tpu.memory_space<vmem>>, vector<1x16xf32>
    %cst_79 = arith.constant 9.99999974E-6 : f32
    %98 = vector.broadcast %cst_79 : f32 to vector<1x16xf32>
    %99 = arith.addf %96, %98 : vector<1x16xf32>
    %100 = math.rsqrt %99 : vector<1x16xf32>
    %101 = arith.mulf %97, %100 : vector<1x16xf32>
    %cst_80 = arith.constant dense<0.000000e+00> : vector<1x64xf32>
    %102 = tpu.matmul %101, %82, %cst_80 {dimension_numbers = #tpu.dot_dimension_numbers<[1], [0], [0], [1], [0, 0, 1, 1], [], []>} : vector<1x16xf32>, vector<16x64xf32>, vector<1x64xf32> -> vector<1x64xf32>
    %103 = vector.broadcast %102 : vector<1x64xf32> to vector<8x64xf32>
    %104 = arith.mulf %90, %103 : vector<8x64xf32>
    %c1_81 = arith.constant 1 : index
    %c0_82 = arith.constant 0 : index
    %105 = vector.load %arg10[%c1_81, %c0_82] : memref<2x16xf32, #tpu.memory_space<vmem>>, vector<1x16xf32>
    %cst_83 = arith.constant dense<0.000000e+00> : vector<1x64xf32>
    %106 = tpu.matmul %105, %82, %cst_83 {dimension_numbers = #tpu.dot_dimension_numbers<[1], [0], [0], [1], [0, 0, 1, 1], [], []>} : vector<1x16xf32>, vector<16x64xf32>, vector<1x64xf32> -> vector<1x64xf32>
    %107 = vector.broadcast %106 : vector<1x64xf32> to vector<8x64xf32>
    %108 = arith.addf %104, %107 : vector<8x64xf32>
    %cst_84 = arith.constant 0.000000e+00 : f32
    %109 = vector.broadcast %cst_84 : f32 to vector<8x64xf32>
    %110 = arith.cmpf oge, %108, %109 : vector<8x64xf32>
    %cst_85 = arith.constant 0.00999999977 : f32
    %111 = vector.broadcast %cst_85 : f32 to vector<8x64xf32>
    %112 = arith.mulf %111, %108 : vector<8x64xf32>
    %113 = arith.select %110, %108, %112 : vector<8x64xi1>, vector<8x64xf32>
    %114 = arith.truncf %113 : vector<8x64xf32> to vector<8x64xbf16>
    %c0_86 = arith.constant 0 : index
    %c0_87 = arith.constant 0 : index
    %c0_88 = arith.constant 0 : index
    %115 = vector.load %arg11[%c0_86, %c0_87, %c0_88] : memref<3x4x8xbf16, #tpu.memory_space<vmem>>, vector<1x4x8xbf16>
    %116 = vector.shape_cast %115 : vector<1x4x8xbf16> to vector<4x8xbf16>
    %cst_89 = arith.constant dense<0.000000e+00> : vector<4x64xf32>
    %117 = tpu.matmul %116, %114, %cst_89 {dimension_numbers = #tpu.dot_dimension_numbers<[1], [0], [0], [1], [0, 0, 1, 1], [], []>} : vector<4x8xbf16>, vector<8x64xbf16>, vector<4x64xf32> -> vector<4x64xf32>
    %118 = arith.truncf %117 : vector<4x64xf32> to vector<4x64xbf16>
    %c0_90 = arith.constant 0 : index
    %c0_91 = arith.constant 0 : index
    %c0_92 = arith.constant 0 : index
    %119 = vector.load %arg12[%c0_90, %c0_91, %c0_92] : memref<3x64x64xbf16, #tpu.memory_space<vmem>>, vector<1x64x64xbf16>
    %120 = vector.shape_cast %119 : vector<1x64x64xbf16> to vector<64x64xbf16>
    %cst_93 = arith.constant dense<0.000000e+00> : vector<4x64xf32>
    %121 = tpu.matmul %118, %120, %cst_93 {dimension_numbers = #tpu.dot_dimension_numbers<[1], [0], [0], [1], [0, 0, 1, 1], [], []>} : vector<4x64xbf16>, vector<64x64xbf16>, vector<4x64xf32> -> vector<4x64xf32>
    %c1_94 = arith.constant 1 : index
    %c0_95 = arith.constant 0 : index
    %c0_96 = arith.constant 0 : index
    %122 = vector.load %arg11[%c1_94, %c0_95, %c0_96] : memref<3x4x8xbf16, #tpu.memory_space<vmem>>, vector<1x4x8xbf16>
    %123 = vector.shape_cast %122 : vector<1x4x8xbf16> to vector<4x8xbf16>
    %cst_97 = arith.constant dense<0.000000e+00> : vector<4x64xf32>
    %124 = tpu.matmul %123, %114, %cst_97 {dimension_numbers = #tpu.dot_dimension_numbers<[1], [0], [0], [1], [0, 0, 1, 1], [], []>} : vector<4x8xbf16>, vector<8x64xbf16>, vector<4x64xf32> -> vector<4x64xf32>
    %125 = arith.truncf %124 : vector<4x64xf32> to vector<4x64xbf16>
    %c1_98 = arith.constant 1 : index
    %c0_99 = arith.constant 0 : index
    %c0_100 = arith.constant 0 : index
    %126 = vector.load %arg12[%c1_98, %c0_99, %c0_100] : memref<3x64x64xbf16, #tpu.memory_space<vmem>>, vector<1x64x64xbf16>
    %127 = vector.shape_cast %126 : vector<1x64x64xbf16> to vector<64x64xbf16>
    %cst_101 = arith.constant dense<0.000000e+00> : vector<4x64xf32>
    %128 = tpu.matmul %125, %127, %cst_101 {dimension_numbers = #tpu.dot_dimension_numbers<[1], [0], [0], [1], [0, 0, 1, 1], [], []>} : vector<4x64xbf16>, vector<64x64xbf16>, vector<4x64xf32> -> vector<4x64xf32>
    %129 = arith.addf %121, %128 : vector<4x64xf32>
    %c2_102 = arith.constant 2 : index
    %c0_103 = arith.constant 0 : index
    %c0_104 = arith.constant 0 : index
    %130 = vector.load %arg11[%c2_102, %c0_103, %c0_104] : memref<3x4x8xbf16, #tpu.memory_space<vmem>>, vector<1x4x8xbf16>
    %131 = vector.shape_cast %130 : vector<1x4x8xbf16> to vector<4x8xbf16>
    %cst_105 = arith.constant dense<0.000000e+00> : vector<4x64xf32>
    %132 = tpu.matmul %131, %114, %cst_105 {dimension_numbers = #tpu.dot_dimension_numbers<[1], [0], [0], [1], [0, 0, 1, 1], [], []>} : vector<4x8xbf16>, vector<8x64xbf16>, vector<4x64xf32> -> vector<4x64xf32>
    %133 = arith.truncf %132 : vector<4x64xf32> to vector<4x64xbf16>
    %c2_106 = arith.constant 2 : index
    %c0_107 = arith.constant 0 : index
    %c0_108 = arith.constant 0 : index
    %134 = vector.load %arg12[%c2_106, %c0_107, %c0_108] : memref<3x64x64xbf16, #tpu.memory_space<vmem>>, vector<1x64x64xbf16>
    %135 = vector.shape_cast %134 : vector<1x64x64xbf16> to vector<64x64xbf16>
    %cst_109 = arith.constant dense<0.000000e+00> : vector<4x64xf32>
    %136 = tpu.matmul %133, %135, %cst_109 {dimension_numbers = #tpu.dot_dimension_numbers<[1], [0], [0], [1], [0, 0, 1, 1], [], []>} : vector<4x64xbf16>, vector<64x64xbf16>, vector<4x64xf32> -> vector<4x64xf32>
    %137 = arith.addf %129, %136 : vector<4x64xf32>
    %c0_110 = arith.constant 0 : index
    %c0_111 = arith.constant 0 : index
    %138 = vector.load %arg13[%c0_110, %c0_111] : memref<64x32xf32, #tpu.memory_space<vmem>>, vector<64x32xf32>
    %c0_112 = arith.constant 0 : index
    %c0_113 = arith.constant 0 : index
    %139 = vector.load %arg14[%c0_112, %c0_113] : memref<32x64xf32, #tpu.memory_space<vmem>>, vector<32x64xf32>
    %cst_114 = arith.constant dense<0.000000e+00> : vector<64xf32>
    %140 = vector.multi_reduction <add>, %137, %cst_114 [0] : vector<4x64xf32> to vector<64xf32>
    %141 = vector.shape_cast %140 : vector<64xf32> to vector<1x64xf32>
    %cst_115 = arith.constant dense<0.000000e+00> : vector<1x32xf32>
    %142 = tpu.matmul %141, %138, %cst_115 {dimension_numbers = #tpu.dot_dimension_numbers<[1], [0], [0], [1], [0, 0, 1, 1], [], []>} : vector<1x64xf32>, vector<64x32xf32>, vector<1x32xf32> -> vector<1x32xf32>
    %cst_116 = arith.constant 1.250000e-01 : f32
    %143 = vector.broadcast %cst_116 : f32 to vector<1x32xf32>
    %144 = arith.mulf %142, %143 : vector<1x32xf32>
    %cst_117 = arith.constant dense<0.000000e+00> : vector<1x64xf32>
    %145 = tpu.matmul %144, %139, %cst_117 {dimension_numbers = #tpu.dot_dimension_numbers<[1], [0], [0], [1], [0, 0, 1, 1], [], []>} : vector<1x32xf32>, vector<32x64xf32>, vector<1x64xf32> -> vector<1x64xf32>
    %146 = vector.broadcast %145 : vector<1x64xf32> to vector<4x64xf32>
    %147 = arith.subf %137, %146 : vector<4x64xf32>
    %148 = arith.mulf %147, %147 : vector<4x64xf32>
    %cst_118 = arith.constant dense<0.000000e+00> : vector<64xf32>
    %149 = vector.multi_reduction <add>, %148, %cst_118 [0] : vector<4x64xf32> to vector<64xf32>
    %150 = vector.shape_cast %149 : vector<64xf32> to vector<1x64xf32>
    %cst_119 = arith.constant dense<0.000000e+00> : vector<1x32xf32>
    %151 = tpu.matmul %150, %138, %cst_119 {dimension_numbers = #tpu.dot_dimension_numbers<[1], [0], [0], [1], [0, 0, 1, 1], [], []>} : vector<1x64xf32>, vector<64x32xf32>, vector<1x32xf32> -> vector<1x32xf32>
    %cst_120 = arith.constant 1.250000e-01 : f32
    %152 = vector.broadcast %cst_120 : f32 to vector<1x32xf32>
    %153 = arith.mulf %151, %152 : vector<1x32xf32>
    %c0_121 = arith.constant 0 : index
    %c0_122 = arith.constant 0 : index
    %154 = vector.load %arg15[%c0_121, %c0_122] : memref<2x32xf32, #tpu.memory_space<vmem>>, vector<1x32xf32>
    %cst_123 = arith.constant 9.99999974E-6 : f32
    %155 = vector.broadcast %cst_123 : f32 to vector<1x32xf32>
    %156 = arith.addf %153, %155 : vector<1x32xf32>
    %157 = math.rsqrt %156 : vector<1x32xf32>
    %158 = arith.mulf %154, %157 : vector<1x32xf32>
    %cst_124 = arith.constant dense<0.000000e+00> : vector<1x64xf32>
    %159 = tpu.matmul %158, %139, %cst_124 {dimension_numbers = #tpu.dot_dimension_numbers<[1], [0], [0], [1], [0, 0, 1, 1], [], []>} : vector<1x32xf32>, vector<32x64xf32>, vector<1x64xf32> -> vector<1x64xf32>
    %160 = vector.broadcast %159 : vector<1x64xf32> to vector<4x64xf32>
    %161 = arith.mulf %147, %160 : vector<4x64xf32>
    %c1_125 = arith.constant 1 : index
    %c0_126 = arith.constant 0 : index
    %162 = vector.load %arg15[%c1_125, %c0_126] : memref<2x32xf32, #tpu.memory_space<vmem>>, vector<1x32xf32>
    %cst_127 = arith.constant dense<0.000000e+00> : vector<1x64xf32>
    %163 = tpu.matmul %162, %139, %cst_127 {dimension_numbers = #tpu.dot_dimension_numbers<[1], [0], [0], [1], [0, 0, 1, 1], [], []>} : vector<1x32xf32>, vector<32x64xf32>, vector<1x64xf32> -> vector<1x64xf32>
    %164 = vector.broadcast %163 : vector<1x64xf32> to vector<4x64xf32>
    %165 = arith.addf %161, %164 : vector<4x64xf32>
    %cst_128 = arith.constant 0.000000e+00 : f32
    %166 = vector.broadcast %cst_128 : f32 to vector<4x64xf32>
    %167 = arith.cmpf oge, %165, %166 : vector<4x64xf32>
    %cst_129 = arith.constant 0.00999999977 : f32
    %168 = vector.broadcast %cst_129 : f32 to vector<4x64xf32>
    %169 = arith.mulf %168, %165 : vector<4x64xf32>
    %170 = arith.select %167, %165, %169 : vector<4x64xi1>, vector<4x64xf32>
    %cst_130 = arith.constant 0.000000e+00 : f32
    %171 = vector.broadcast %cst_130 : f32 to vector<2x16xf32>
    %c0_131 = arith.constant 0 : index
    %c0_132 = arith.constant 0 : index
    %c0_133 = arith.constant 0 : index
    %172 = vector.load %arg16[%c0_131, %c0_132, %c0_133] : memref<2x2x4xf32, #tpu.memory_space<vmem>>, vector<1x2x4xf32>
    %173 = vector.shape_cast %172 : vector<1x2x4xf32> to vector<2x4xf32>
    %cst_134 = arith.constant dense<0.000000e+00> : vector<2x64xf32>
    %174 = tpu.matmul %173, %170, %cst_134 {dimension_numbers = #tpu.dot_dimension_numbers<[1], [0], [0], [1], [0, 0, 1, 1], [], []>} : vector<2x4xf32>, vector<4x64xf32>, vector<2x64xf32> -> vector<2x64xf32>
    %c0_135 = arith.constant 0 : index
    %c0_136 = arith.constant 0 : index
    %c0_137 = arith.constant 0 : index
    %175 = vector.load %arg17[%c0_135, %c0_136, %c0_137] : memref<2x64x16xf32, #tpu.memory_space<vmem>>, vector<1x64x16xf32>
    %176 = vector.shape_cast %175 : vector<1x64x16xf32> to vector<64x16xf32>
    %cst_138 = arith.constant dense<0.000000e+00> : vector<2x16xf32>
    %177 = tpu.matmul %174, %176, %cst_138 {dimension_numbers = #tpu.dot_dimension_numbers<[1], [0], [0], [1], [0, 0, 1, 1], [], []>} : vector<2x64xf32>, vector<64x16xf32>, vector<2x16xf32> -> vector<2x16xf32>
    %178 = arith.addf %171, %177 : vector<2x16xf32>
    %c1_139 = arith.constant 1 : index
    %c0_140 = arith.constant 0 : index
    %c0_141 = arith.constant 0 : index
    %179 = vector.load %arg16[%c1_139, %c0_140, %c0_141] : memref<2x2x4xf32, #tpu.memory_space<vmem>>, vector<1x2x4xf32>
    %180 = vector.shape_cast %179 : vector<1x2x4xf32> to vector<2x4xf32>
    %cst_142 = arith.constant dense<0.000000e+00> : vector<2x64xf32>
    %181 = tpu.matmul %180, %170, %cst_142 {dimension_numbers = #tpu.dot_dimension_numbers<[1], [0], [0], [1], [0, 0, 1, 1], [], []>} : vector<2x4xf32>, vector<4x64xf32>, vector<2x64xf32> -> vector<2x64xf32>
    %c1_143 = arith.constant 1 : index
    %c0_144 = arith.constant 0 : index
    %c0_145 = arith.constant 0 : index
    %182 = vector.load %arg17[%c1_143, %c0_144, %c0_145] : memref<2x64x16xf32, #tpu.memory_space<vmem>>, vector<1x64x16xf32>
    %183 = vector.shape_cast %182 : vector<1x64x16xf32> to vector<64x16xf32>
    %cst_146 = arith.constant dense<0.000000e+00> : vector<2x16xf32>
    %184 = tpu.matmul %181, %183, %cst_146 {dimension_numbers = #tpu.dot_dimension_numbers<[1], [0], [0], [1], [0, 0, 1, 1], [], []>} : vector<2x64xf32>, vector<64x16xf32>, vector<2x16xf32> -> vector<2x16xf32>
    %185 = arith.addf %178, %184 : vector<2x16xf32>
    %c0_147 = arith.constant 0 : index
    %c0_148 = arith.constant 0 : index
    %186 = vector.load %arg18[%c0_147, %c0_148] : memref<1x16xf32, #tpu.memory_space<vmem>>, vector<1x16xf32>
    %187 = vector.broadcast %186 : vector<1x16xf32> to vector<2x16xf32>
    %188 = arith.addf %185, %187 : vector<2x16xf32>
    %189 = vector.extract_strided_slice %188 {offsets = [0, 0], sizes = [2, 8], strides = [1, 1]} : vector<2x16xf32> to vector<2x8xf32>
    %190 = vector.extract_strided_slice %188 {offsets = [0, 8], sizes = [2, 8], strides = [1, 1]} : vector<2x16xf32> to vector<2x8xf32>
    %c0_149 = arith.constant 0 : index
    %c0_150 = arith.constant 0 : index
    %191 = vector.load %arg19[%c0_149, %c0_150] : memref<2x8xf32, #tpu.memory_space<vmem>>, vector<2x8xf32>
    %cst_151 = arith.constant 5.000000e-01 : f32
    %192 = vector.broadcast %cst_151 : f32 to vector<2x8xf32>
    %193 = arith.mulf %192, %190 : vector<2x8xf32>
    %194 = math.exp %193 : vector<2x8xf32>
    %195 = arith.mulf %191, %194 : vector<2x8xf32>
    %196 = arith.addf %195, %189 : vector<2x8xf32>
    %c0_152 = arith.constant 0 : index
    %c0_153 = arith.constant 0 : index
    %197 = vector.load %arg20[%c0_152, %c0_153] : memref<2x8xf32, #tpu.memory_space<vmem>>, vector<2x8xf32>
    tpu.vector_store %arg20[%c0_152, %c0_153], %196 {strides = array<i32>} : memref<2x8xf32, #tpu.memory_space<vmem>>, vector<2x8xf32>,
    %cst_154 = arith.constant 1.000000e+00 : f32
    %198 = vector.broadcast %cst_154 : f32 to vector<2x8xf32>
    %199 = arith.addf %198, %190 : vector<2x8xf32>
    %200 = arith.mulf %189, %189 : vector<2x8xf32>
    %201 = arith.subf %199, %200 : vector<2x8xf32>
    %202 = math.exp %190 : vector<2x8xf32>
    %203 = arith.subf %201, %202 : vector<2x8xf32>
    %cst_155 = arith.constant dense<0.000000e+00> : vector<2xf32>
    %204 = vector.multi_reduction <add>, %203, %cst_155 [1] : vector<2x8xf32> to vector<2xf32>
    %205 = vector.shape_cast %204 : vector<2xf32> to vector<2x1xf32>
    %cst_156 = arith.constant dense<0.000000e+00> : vector<1xf32>
    %206 = vector.multi_reduction <add>, %205, %cst_156 [0] : vector<2x1xf32> to vector<1xf32>
    %207 = vector.shape_cast %206 : vector<1xf32> to vector<1x1xf32>
    %cst_157 = arith.constant -5.000000e-01 : f32
    %208 = vector.broadcast %cst_157 : f32 to vector<1x1xf32>
    %209 = arith.mulf %208, %207 : vector<1x1xf32>
    %c0_158 = arith.constant 0 : index
    %c0_159 = arith.constant 0 : index
    %210 = vector.load %arg21[%c0_158, %c0_159] : memref<1x1xf32, #tpu.memory_space<vmem>>, vector<1x1xf32>
    tpu.vector_store %arg21[%c0_158, %c0_159], %209 {strides = array<i32>} : memref<1x1xf32, #tpu.memory_space<vmem>>, vector<1x1xf32>,
    return
  }
}

</mosaic_0001>

<llo_original>
// kernel: encoder_forward.1
$region0: #{encoder_forward.1}
  #allocation0 [shape = 'u32[]', space=smem, size = 0x4, offset = 0x4, fixed_abs, tag = 'smem constant byte address 0x4 - core index']
  #allocation1 [shape = 'u32[144,128]{1,0:T(1,128)}', space=vmem, size = 0x12000, scoped, tag = 'internal scratch']
  %s0 = inlined_call_operand.vmem [shape: bf16[32,64], index: 0, kind: input, shape index: {}]
  %s1 = inlined_call_operand.vmem [shape: bf16[3,16,32], index: 1, kind: input, shape index: {}]
  %s2 = inlined_call_operand.vmem [shape: bf16[3,64,64], index: 2, kind: input, shape index: {}]
  %s3 = inlined_call_operand.vmem [shape: f32[64,8], index: 3, kind: input, shape index: {}]
  %s4 = inlined_call_operand.vmem [shape: f32[8,64], index: 4, kind: input, shape index: {}]
  %s5 = inlined_call_operand.vmem [shape: f32[2,8], index: 5, kind: input, shape index: {}]
  %s6 = inlined_call_operand.vmem [shape: bf16[3,8,16], index: 6, kind: input, shape index: {}]
  %s7 = inlined_call_operand.vmem [shape: bf16[3,64,64], index: 7, kind: input, shape index: {}]
  %s8 = inlined_call_operand.vmem [shape: f32[64,16], index: 8, kind: input, shape index: {}]
  %s9 = inlined_call_operand.vmem [shape: f32[16,64], index: 9, kind: input, shape index: {}]
  %s10 = inlined_call_operand.vmem [shape: f32[2,16], index: 10, kind: input, shape index: {}]
  %s11 = inlined_call_operand.vmem [shape: bf16[3,4,8], index: 11, kind: input, shape index: {}]
  %s12 = inlined_call_operand.vmem [shape: bf16[3,64,64], index: 12, kind: input, shape index: {}]
  %s13 = inlined_call_operand.vmem [shape: f32[64,32], index: 13, kind: input, shape index: {}]
  %s14 = inlined_call_operand.vmem [shape: f32[32,64], index: 14, kind: input, shape index: {}]
  %s15 = inlined_call_operand.vmem [shape: f32[2,32], index: 15, kind: input, shape index: {}]
  %s16 = inlined_call_operand.vmem [shape: f32[2,2,4], index: 16, kind: input, shape index: {}]
  %s17 = inlined_call_operand.vmem [shape: f32[2,64,16], index: 17, kind: input, shape index: {}]
  %s18 = inlined_call_operand.vmem [shape: f32[1,16], index: 18, kind: input, shape index: {}]
  %s19 = inlined_call_operand.vmem [shape: f32[2,8], index: 19, kind: input, shape index: {}]
  %s20 = inlined_call_operand.hbm [shape: f32[2,8], index: 20, kind: output, shape index: {0}]
  %s21 = inlined_call_operand.hbm [shape: f32[1,1], index: 21, kind: output, shape index: {1}]
  %22 = xla_tuple %s20, %s21
  %s23 = sld [smem:[#allocation0]]
  $region98: #{encoder_forward.1} parent=0
    _
  %s25 = ssub.s32 1, %s23
  %s26 = scalar_select 0, %s25, %s23
  $region1: #{encoder_forward.1} parent=0
    #allocation2 [shape = 'u8[1024]{0}', space=vmem, size = 0x400, scoped, tag = 'output window, operand 0, single buffered']
    #allocation3 [shape = 's32[1]{0}', space=sflag, size = 0x4, scoped, tag = 'scoped memory for encoder_forward.1']
    #allocation4 [shape = 'u8[512]{0}', space=vmem, size = 0x400, scoped, tag = 'output window, operand 1, single buffered']
    #allocation5 [shape = 's32[1]{0}', space=sflag, size = 0x4, scoped, tag = 'scoped memory for encoder_forward.1']
    %27 = vsyncpa [#allocation3], 0
    %28 = vsyncpa [#allocation5], 0
    // Predicated region
    $region2: #{encoder_forward.1} parent=1 // pred_check
      _
    $region3: #{encoder_forward.1} parent=1 // pred_check_branch
      %30 = sbr.rel (0) target = $region5
    $region4: #{encoder_forward.1} parent=1 // pred_region
      _
    $region5: #{encoder_forward.1} parent=1 // pred_fallthru
      _
    // Predicated region
    $region6: #{encoder_forward.1} parent=1 // pred_check
      _
    $region7: #{encoder_forward.1} parent=1 // pred_check_branch
      %32 = sbr.rel (0) target = $region9
    $region8: #{encoder_forward.1} parent=1 // pred_region
      _
    $region9: #{encoder_forward.1} parent=1 // pred_fallthru
      _
    // Predicated region
    $region10: #{encoder_forward.1} parent=1 // pred_check
      _
    $region11: #{encoder_forward.1} parent=1 // pred_check_branch
      %34 = sbr.rel (0) target = $region13
    $region12: #{encoder_forward.1} parent=1 // pred_region
      _
    $region13: #{encoder_forward.1} parent=1 // pred_fallthru
      _
    // Predicated region
    $region14: #{encoder_forward.1} parent=1 // pred_check
      _
    $region15: #{encoder_forward.1} parent=1 // pred_check_branch
      %36 = sbr.rel (0) target = $region17
    $region16: #{encoder_forward.1} parent=1 // pred_region
      _
    $region17: #{encoder_forward.1} parent=1 // pred_fallthru
      _
    // Predicated region
    $region18: #{encoder_forward.1} parent=1 // pred_check
      _
    $region19: #{encoder_forward.1} parent=1 // pred_check_branch
      %38 = sbr.rel (0) target = $region21
    $region20: #{encoder_forward.1} parent=1 // pred_region
      _
    $region21: #{encoder_forward.1} parent=1 // pred_fallthru
      _
    // Predicated region
    $region22: #{encoder_forward.1} parent=1 // pred_check
      _
    $region23: #{encoder_forward.1} parent=1 // pred_check_branch
      %40 = sbr.rel (0) target = $region25
    $region24: #{encoder_forward.1} parent=1 // pred_region
      _
    $region25: #{encoder_forward.1} parent=1 // pred_fallthru
      _
    // Predicated region
    $region26: #{encoder_forward.1} parent=1 // pred_check
      _
    $region27: #{encoder_forward.1} parent=1 // pred_check_branch
      %42 = sbr.rel (0) target = $region29
    $region28: #{encoder_forward.1} parent=1 // pred_region
      _
    $region29: #{encoder_forward.1} parent=1 // pred_fallthru
      _
    // Predicated region
    $region30: #{encoder_forward.1} parent=1 // pred_check
      _
    $region31: #{encoder_forward.1} parent=1 // pred_check_branch
      %44 = sbr.rel (0) target = $region33
    $region32: #{encoder_forward.1} parent=1 // pred_region
      _
    $region33: #{encoder_forward.1} parent=1 // pred_fallthru
      _
    // Predicated region
    $region34: #{encoder_forward.1} parent=1 // pred_check
      _
    $region35: #{encoder_forward.1} parent=1 // pred_check_branch
      %46 = sbr.rel (0) target = $region37
    $region36: #{encoder_forward.1} parent=1 // pred_region
      _
    $region37: #{encoder_forward.1} parent=1 // pred_fallthru
      _
    // Predicated region
    $region38: #{encoder_forward.1} parent=1 // pred_check
      _
    $region39: #{encoder_forward.1} parent=1 // pred_check_branch
      %48 = sbr.rel (0) target = $region41
    $region40: #{encoder_forward.1} parent=1 // pred_region
      _
    $region41: #{encoder_forward.1} parent=1 // pred_fallthru
      _
    // Predicated region
    $region42: #{encoder_forward.1} parent=1 // pred_check
      _
    $region43: #{encoder_forward.1} parent=1 // pred_check_branch
      %50 = sbr.rel (0) target = $region45
    $region44: #{encoder_forward.1} parent=1 // pred_region
      _
    $region45: #{encoder_forward.1} parent=1 // pred_fallthru
      _
    // Predicated region
    $region46: #{encoder_forward.1} parent=1 // pred_check
      _
    $region47: #{encoder_forward.1} parent=1 // pred_check_branch
      %52 = sbr.rel (0) target = $region49
    $region48: #{encoder_forward.1} parent=1 // pred_region
      _
    $region49: #{encoder_forward.1} parent=1 // pred_fallthru
      _
    // Predicated region
    $region50: #{encoder_forward.1} parent=1 // pred_check
      _
    $region51: #{encoder_forward.1} parent=1 // pred_check_branch
      %54 = sbr.rel (0) target = $region53
    $region52: #{encoder_forward.1} parent=1 // pred_region
      _
    $region53: #{encoder_forward.1} parent=1 // pred_fallthru
      _
    // Predicated region
    $region54: #{encoder_forward.1} parent=1 // pred_check
      _
    $region55: #{encoder_forward.1} parent=1 // pred_check_branch
      %56 = sbr.rel (0) target = $region57
    $region56: #{encoder_forward.1} parent=1 // pred_region
      _
    $region57: #{encoder_forward.1} parent=1 // pred_fallthru
      _
    // Predicated region
    $region58: #{encoder_forward.1} parent=1 // pred_check
      _
    $region59: #{encoder_forward.1} parent=1 // pred_check_branch
      %58 = sbr.rel (0) target = $region61
    $region60: #{encoder_forward.1} parent=1 // pred_region
      _
    $region61: #{encoder_forward.1} parent=1 // pred_fallthru
      _
    // Predicated region
    $region62: #{encoder_forward.1} parent=1 // pred_check
      _
    $region63: #{encoder_forward.1} parent=1 // pred_check_branch
      %60 = sbr.rel (0) target = $region65
    $region64: #{encoder_forward.1} parent=1 // pred_region
      _
    $region65: #{encoder_forward.1} parent=1 // pred_fallthru
      _
    // Predicated region
    $region66: #{encoder_forward.1} parent=1 // pred_check
      _
    $region67: #{encoder_forward.1} parent=1 // pred_check_branch
      %62 = sbr.rel (0) target = $region69
    $region68: #{encoder_forward.1} parent=1 // pred_region
      _
    $region69: #{encoder_forward.1} parent=1 // pred_fallthru
      _
    // Predicated region
    $region70: #{encoder_forward.1} parent=1 // pred_check
      _
    $region71: #{encoder_forward.1} parent=1 // pred_check_branch
      %64 = sbr.rel (0) target = $region73
    $region72: #{encoder_forward.1} parent=1 // pred_region
      _
    $region73: #{encoder_forward.1} parent=1 // pred_fallthru
      _
    // Predicated region
    $region74: #{encoder_forward.1} parent=1 // pred_check
      _
    $region75: #{encoder_forward.1} parent=1 // pred_check_branch
      %66 = sbr.rel (0) target = $region77
    $region76: #{encoder_forward.1} parent=1 // pred_region
      _
    $region77: #{encoder_forward.1} parent=1 // pred_fallthru
      _
    // Predicated region
    $region78: #{encoder_forward.1} parent=1 // pred_check
      _
    $region79: #{encoder_forward.1} parent=1 // pred_check_branch
      %68 = sbr.rel (0) target = $region81
    $region80: #{encoder_forward.1} parent=1 // pred_region
      _
    $region81: #{encoder_forward.1} parent=1 // pred_fallthru
      _
    %v70 = vld [vmem:[%s0] sm:$0xf]
    %v71 = vld [vmem:[%s0 + $0x4] sm:$0xf]
    %v72 = vld [vmem:[%s0 + $0x8] sm:$0xf]
    %v73 = vld [vmem:[%s0 + $0xc] sm:$0xf]
    %v74 = vld [vmem:[%s1] sm:$0xf]
    %v75 = vld [vmem:[%s1 + $0x4] sm:$0xf]
    %v78 = vunpack.c.l.b16 %v74
    %v79 = vunpack.c.l.b16 %v75
    %v80 = vpack.c.b16 %v79, %v78
    %v85 = vunpack.c.l.b16 %v70
    %v86 = vunpack.c.l.b16 %v71
    %v87 = vunpack.c.l.b16 %v72
    %v88 = vunpack.c.l.b16 %v73
    %v89 = vpack.c.b16 %v86, %v85
    %v90 = vpack.c.b16 %v88, %v87
    %vm93 = vcmask 261120
    %v95 = vsel %vm93, %v80, 0
    %97 = vmatprep.subr.bf16.mxu0 0
    %98 = vmatpush1.bf16.msra.mxu0 %v89
    %99 = vmatprep.subr.bf16.mxu0 0
    %100 = vmatpush1.bf16.msra.mxu0 %v90
    %101 = vmatprep.subr.bf16.mxu0 0
    %102 = vmatpush1.bf16.msra.mxu0 0
    %103 = vmatprep.subr.bf16.mxu0 0
    %104 = vmatpush1.bf16.msra.mxu0 0
    %105 = vmatprep.subr.bf16.mxu0 0
    %106 = vmatpush1.bf16.msra.mxu0 0
    %107 = vmatprep.subr.bf16.mxu0 0
    %108 = vmatpush1.bf16.msra.mxu0 0
    %109 = vmatprep.subr.bf16.mxu0 0
    %110 = vmatpush1.bf16.msra.mxu0 0
    %111 = vmatprep.subr.bf16.mxu0 0
    %112 = vmatpush1.bf16.msra.mxu0 0
    %113 = vmatprep.subr.bf16.mxu0 0
    %114 = vmatpush1.bf16.msra.mxu0 0
    %115 = vmatprep.subr.bf16.mxu0 0
    %116 = vmatpush1.bf16.msra.mxu0 0
    %117 = vmatprep.subr.bf16.mxu0 0
    %118 = vmatpush1.bf16.msra.mxu0 0
    %119 = vmatprep.subr.bf16.mxu0 0
    %120 = vmatpush1.bf16.msra.mxu0 0
    %121 = vmatprep.subr.bf16.mxu0 0
    %122 = vmatpush1.bf16.msra.mxu0 0
    %123 = vmatprep.subr.bf16.mxu0 0
    %124 = vmatpush1.bf16.msra.mxu0 0
    %125 = vmatprep.subr.bf16.mxu0 0
    %126 = vmatpush1.bf16.msra.mxu0 0
    %127 = vmatprep.subr.bf16.mxu0 0
    %128 = vmatpush1.bf16.msra.mxu0 0
    %129 = vmatprep.mubr.bf16.mxu0 0
    %130 = vmatmul.mubr.bf16.gmra.mrb[0].mxu0 %v95
    %v131 = vpop.f32.mrb[0].mxu0
    %v132 = vadd.f32 0.0, %v131
    %v133 = vpop.f32.mrb[0].mxu0
    %v134 = vpop.f32.mrb[0].mxu0
    %v135 = vadd.f32 0.0, %v134
    %v136 = vpop.f32.mrb[0].mxu0
    %137 = vdwg.mxu0
    %v138 = vpack.c.bf16 %v135, %v132
    %v139 = vld [vmem:[%s2] sm:$0xf]
    %v140 = vld [vmem:[%s2 + $0x4] sm:$0xf]
    %v141 = vld [vmem:[%s2 + $0x8] sm:$0xf]
    %v142 = vld [vmem:[%s2 + $0xc] sm:$0xf]
    %v143 = vld [vmem:[%s2 + $0x10] sm:$0xf]
    %v144 = vld [vmem:[%s2 + $0x14] sm:$0xf]
    %v145 = vld [vmem:[%s2 + $0x18] sm:$0xf]
    %v146 = vld [vmem:[%s2 + $0x1c] sm:$0xf]
    %s147 = scalar_lea.vmem %s1, 8
    %v148 = vld [vmem:[%s147] sm:$0xf]
    %v149 = vld [vmem:[%s147 + $0x4] sm:$0xf]
    %v152 = vunpack.c.l.b16 %v148
    %v153 = vunpack.c.l.b16 %v149
    %v154 = vpack.c.b16 %v153, %v152
    %v156 = vsel %vm93, %v154, 0
    %158 = vmatprep.subr.bf16.mxu0 0
    %159 = vmatpush1.bf16.msra.mxu0 %v89
    %160 = vmatprep.subr.bf16.mxu0 0
    %161 = vmatpush1.bf16.msra.mxu0 %v90
    %162 = vmatprep.subr.bf16.mxu0 0
    %163 = vmatpush1.bf16.msra.mxu0 0
    %164 = vmatprep.subr.bf16.mxu0 0
    %165 = vmatpush1.bf16.msra.mxu0 0
    %166 = vmatprep.subr.bf16.mxu0 0
    %167 = vmatpush1.bf16.msra.mxu0 0
    %168 = vmatprep.subr.bf16.mxu0 0
    %169 = vmatpush1.bf16.msra.mxu0 0
    %170 = vmatprep.subr.bf16.mxu0 0
    %171 = vmatpush1.bf16.msra.mxu0 0
    %172 = vmatprep.subr.bf16.mxu0 0
    %173 = vmatpush1.bf16.msra.mxu0 0
    %174 = vmatprep.subr.bf16.mxu0 0
    %175 = vmatpush1.bf16.msra.mxu0 0
    %176 = vmatprep.subr.bf16.mxu0 0
    %177 = vmatpush1.bf16.msra.mxu0 0
    %178 = vmatprep.subr.bf16.mxu0 0
    %179 = vmatpush1.bf16.msra.mxu0 0
    %180 = vmatprep.subr.bf16.mxu0 0
    %181 = vmatpush1.bf16.msra.mxu0 0
    %182 = vmatprep.subr.bf16.mxu0 0
    %183 = vmatpush1.bf16.msra.mxu0 0
    %184 = vmatprep.subr.bf16.mxu0 0
    %185 = vmatpush1.bf16.msra.mxu0 0
    %186 = vmatprep.subr.bf16.mxu0 0
    %187 = vmatpush1.bf16.msra.mxu0 0
    %188 = vmatprep.subr.bf16.mxu0 0
    %189 = vmatpush1.bf16.msra.mxu0 0
    %190 = vmatprep.mubr.bf16.mxu0 0
    %191 = vmatmul.mubr.bf16.gmra.mrb[0].mxu0 %v156
    %v192 = vpop.f32.mrb[0].mxu0
    %v193 = vadd.f32 0.0, %v192
    %v194 = vpop.f32.mrb[0].mxu0
    %v195 = vpop.f32.mrb[0].mxu0
    %v196 = vadd.f32 0.0, %v195
    %v197 = vpop.f32.mrb[0].mxu0
    %198 = vdwg.mxu0
    %v199 = vpack.c.bf16 %v196, %v193
    %s200 = scalar_lea.vmem %s2, 32
    %v201 = vld [vmem:[%s200] sm:$0xf]
    %v202 = vld [vmem:[%s200 + $0x4] sm:$0xf]
    %v203 = vld [vmem:[%s200 + $0x8] sm:$0xf]
    %v204 = vld [vmem:[%s200 + $0xc] sm:$0xf]
    %v205 = vld [vmem:[%s200 + $0x10] sm:$0xf]
    %v206 = vld [vmem:[%s200 + $0x14] sm:$0xf]
    %v207 = vld [vmem:[%s200 + $0x18] sm:$0xf]
    %v208 = vld [vmem:[%s200 + $0x1c] sm:$0xf]
    %v217 = vunpack.c.l.b16 %v201
    %v218 = vunpack.c.l.b16 %v202
    %v219 = vunpack.c.l.b16 %v203
    %v220 = vunpack.c.l.b16 %v204
    %v221 = vunpack.c.l.b16 %v205
    %v222 = vunpack.c.l.b16 %v206
    %v223 = vunpack.c.l.b16 %v207
    %v224 = vunpack.c.l.b16 %v208
    %v225 = vpack.c.b16 %v218, %v217
    %v226 = vpack.c.b16 %v220, %v219
    %v227 = vpack.c.b16 %v222, %v221
    %v228 = vpack.c.b16 %v224, %v223
    %vm233 = vcmask 523264
    %v235 = vsel %vm233, %v199, 0
    %237 = vmatprep.subr.bf16.mxu0 0
    %238 = vmatpush1.bf16.msra.mxu0 %v225
    %239 = vmatprep.subr.bf16.mxu0 0
    %240 = vmatpush1.bf16.msra.mxu0 %v226
    %241 = vmatprep.subr.bf16.mxu0 0
    %242 = vmatpush1.bf16.msra.mxu0 %v227
    %243 = vmatprep.subr.bf16.mxu0 0
    %244 = vmatpush1.bf16.msra.mxu0 %v228
    %245 = vmatprep.subr.bf16.mxu0 0
    %246 = vmatpush1.bf16.msra.mxu0 0
    %247 = vmatprep.subr.bf16.mxu0 0
    %248 = vmatpush1.bf16.msra.mxu0 0
    %249 = vmatprep.subr.bf16.mxu0 0
    %250 = vmatpush1.bf16.msra.mxu0 0
    %251 = vmatprep.subr.bf16.mxu0 0
    %252 = vmatpush1.bf16.msra.mxu0 0
    %253 = vmatprep.subr.bf16.mxu0 0
    %254 = vmatpush1.bf16.msra.mxu0 0
    %255 = vmatprep.subr.bf16.mxu0 0
    %256 = vmatpush1.bf16.msra.mxu0 0
    %257 = vmatprep.subr.bf16.mxu0 0
    %258 = vmatpush1.bf16.msra.mxu0 0
    %259 = vmatprep.subr.bf16.mxu0 0
    %260 = vmatpush1.bf16.msra.mxu0 0
    %261 = vmatprep.subr.bf16.mxu0 0
    %262 = vmatpush1.bf16.msra.mxu0 0
    %263 = vmatprep.subr.bf16.mxu0 0
    %264 = vmatpush1.bf16.msra.mxu0 0
    %265 = vmatprep.subr.bf16.mxu0 0
    %266 = vmatpush1.bf16.msra.mxu0 0
    %267 = vmatprep.subr.bf16.mxu0 0
    %268 = vmatpush1.bf16.msra.mxu0 0
    %269 = vmatprep.mubr.bf16.mxu0 0
    %270 = vmatmul.mubr.bf16.gmra.mrb[0].mxu0 %v235
    %v271 = vpop.f32.mrb[0].mxu0
    %v272 = vadd.f32 0.0, %v271
    %v273 = vpop.f32.mrb[0].mxu0
    %v274 = vpop.f32.mrb[0].mxu0
    %v275 = vadd.f32 0.0, %v274
    %v276 = vpop.f32.mrb[0].mxu0
    %277 = vdwg.mxu0
    %v286 = vunpack.c.l.b16 %v139
    %v287 = vunpack.c.l.b16 %v140
    %v288 = vunpack.c.l.b16 %v141
    %v289 = vunpack.c.l.b16 %v142
    %v290 = vunpack.c.l.b16 %v143
    %v291 = vunpack.c.l.b16 %v144
    %v292 = vunpack.c.l.b16 %v145
    %v293 = vunpack.c.l.b16 %v146
    %v294 = vpack.c.b16 %v287, %v286
    %v295 = vpack.c.b16 %v289, %v288
    %v296 = vpack.c.b16 %v291, %v290
    %v297 = vpack.c.b16 %v293, %v292
    %v303 = vsel %vm233, %v138, 0
    %305 = vmatprep.subr.bf16.mxu0 0
    %306 = vmatpush1.bf16.msra.mxu0 %v294
    %307 = vmatprep.subr.bf16.mxu0 0
    %308 = vmatpush1.bf16.msra.mxu0 %v295
    %309 = vmatprep.subr.bf16.mxu0 0
    %310 = vmatpush1.bf16.msra.mxu0 %v296
    %311 = vmatprep.subr.bf16.mxu0 0
    %312 = vmatpush1.bf16.msra.mxu0 %v297
    %313 = vmatprep.subr.bf16.mxu0 0
    %314 = vmatpush1.bf16.msra.mxu0 0
    %315 = vmatprep.subr.bf16.mxu0 0
    %316 = vmatpush1.bf16.msra.mxu0 0
    %317 = vmatprep.subr.bf16.mxu0 0
    %318 = vmatpush1.bf16.msra.mxu0 0
    %319 = vmatprep.subr.bf16.mxu0 0
    %320 = vmatpush1.bf16.msra.mxu0 0
    %321 = vmatprep.subr.bf16.mxu0 0
    %322 = vmatpush1.bf16.msra.mxu0 0
    %323 = vmatprep.subr.bf16.mxu0 0
    %324 = vmatpush1.bf16.msra.mxu0 0
    %325 = vmatprep.subr.bf16.mxu0 0
    %326 = vmatpush1.bf16.msra.mxu0 0
    %327 = vmatprep.subr.bf16.mxu0 0
    %328 = vmatpush1.bf16.msra.mxu0 0
    %329 = vmatprep.subr.bf16.mxu0 0
    %330 = vmatpush1.bf16.msra.mxu0 0
    %331 = vmatprep.subr.bf16.mxu0 0
    %332 = vmatpush1.bf16.msra.mxu0 0
    %333 = vmatprep.subr.bf16.mxu0 0
    %334 = vmatpush1.bf16.msra.mxu0 0
    %335 = vmatprep.subr.bf16.mxu0 0
    %336 = vmatpush1.bf16.msra.mxu0 0
    %337 = vmatprep.mubr.bf16.mxu0 0
    %338 = vmatmul.mubr.bf16.gmra.mrb[0].mxu0 %v303
    %v339 = vpop.f32.mrb[0].mxu0
    %v340 = vadd.f32 %v272, %v339
    %v341 = vpop.f32.mrb[0].mxu0
    %v342 = vpop.f32.mrb[0].mxu0
    %v343 = vadd.f32 %v275, %v342
    %v344 = vpop.f32.mrb[0].mxu0
    %345 = vdwg.mxu0
    %s346 = scalar_lea.vmem %s1, 16
    %v347 = vld [vmem:[%s346] sm:$0xf]
    %v348 = vld [vmem:[%s346 + $0x4] sm:$0xf]
    %v351 = vunpack.c.l.b16 %v347
    %v352 = vunpack.c.l.b16 %v348
    %v353 = vpack.c.b16 %v352, %v351
    %v355 = vsel %vm93, %v353, 0
    %357 = vmatprep.subr.bf16.mxu0 0
    %358 = vmatpush1.bf16.msra.mxu0 %v89
    %359 = vmatprep.subr.bf16.mxu0 0
    %360 = vmatpush1.bf16.msra.mxu0 %v90
    %361 = vmatprep.subr.bf16.mxu0 0
    %362 = vmatpush1.bf16.msra.mxu0 0
    %363 = vmatprep.subr.bf16.mxu0 0
    %364 = vmatpush1.bf16.msra.mxu0 0
    %365 = vmatprep.subr.bf16.mxu0 0
    %366 = vmatpush1.bf16.msra.mxu0 0
    %367 = vmatprep.subr.bf16.mxu0 0
    %368 = vmatpush1.bf16.msra.mxu0 0
    %369 = vmatprep.subr.bf16.mxu0 0
    %370 = vmatpush1.bf16.msra.mxu0 0
    %371 = vmatprep.subr.bf16.mxu0 0
    %372 = vmatpush1.bf16.msra.mxu0 0
    %373 = vmatprep.subr.bf16.mxu0 0
    %374 = vmatpush1.bf16.msra.mxu0 0
    %375 = vmatprep.subr.bf16.mxu0 0
    %376 = vmatpush1.bf16.msra.mxu0 0
    %377 = vmatprep.subr.bf16.mxu0 0
    %378 = vmatpush1.bf16.msra.mxu0 0
    %379 = vmatprep.subr.bf16.mxu0 0
    %380 = vmatpush1.bf16.msra.mxu0 0
    %381 = vmatprep.subr.bf16.mxu0 0
    %382 = vmatpush1.bf16.msra.mxu0 0
    %383 = vmatprep.subr.bf16.mxu0 0
    %384 = vmatpush1.bf16.msra.mxu0 0
    %385 = vmatprep.subr.bf16.mxu0 0
    %386 = vmatpush1.bf16.msra.mxu0 0
    %387 = vmatprep.subr.bf16.mxu0 0
    %388 = vmatpush1.bf16.msra.mxu0 0
    %389 = vmatprep.mubr.bf16.mxu0 0
    %390 = vmatmul.mubr.bf16.gmra.mrb[0].mxu0 %v355
    %v391 = vpop.f32.mrb[0].mxu0
    %v392 = vadd.f32 0.0, %v391
    %v393 = vpop.f32.mrb[0].mxu0
    %v394 = vpop.f32.mrb[0].mxu0
    %v395 = vadd.f32 0.0, %v394
    %v396 = vpop.f32.mrb[0].mxu0
    %397 = vdwg.mxu0
    %v398 = vpack.c.bf16 %v395, %v392
    %s399 = scalar_lea.vmem %s2, 64
    %v400 = vld [vmem:[%s399] sm:$0xf]
    %v401 = vld [vmem:[%s399 + $0x4] sm:$0xf]
    %v402 = vld [vmem:[%s399 + $0x8] sm:$0xf]
    %v403 = vld [vmem:[%s399 + $0xc] sm:$0xf]
    %v404 = vld [vmem:[%s399 + $0x10] sm:$0xf]
    %v405 = vld [vmem:[%s399 + $0x14] sm:$0xf]
    %v406 = vld [vmem:[%s399 + $0x18] sm:$0xf]
    %v407 = vld [vmem:[%s399 + $0x1c] sm:$0xf]
    %v416 = vunpack.c.l.b16 %v400
    %v417 = vunpack.c.l.b16 %v401
    %v418 = vunpack.c.l.b16 %v402
    %v419 = vunpack.c.l.b16 %v403
    %v420 = vunpack.c.l.b16 %v404
    %v421 = vunpack.c.l.b16 %v405
    %v422 = vunpack.c.l.b16 %v406
    %v423 = vunpack.c.l.b16 %v407
    %v424 = vpack.c.b16 %v417, %v416
    %v425 = vpack.c.b16 %v419, %v418
    %v426 = vpack.c.b16 %v421, %v420
    %v427 = vpack.c.b16 %v423, %v422
    %v433 = vsel %vm233, %v398, 0
    %435 = vmatprep.subr.bf16.mxu0 0
    %436 = vmatpush1.bf16.msra.mxu0 %v424
    %437 = vmatprep.subr.bf16.mxu0 0
    %438 = vmatpush1.bf16.msra.mxu0 %v425
    %439 = vmatprep.subr.bf16.mxu0 0
    %440 = vmatpush1.bf16.msra.mxu0 %v426
    %441 = vmatprep.subr.bf16.mxu0 0
    %442 = vmatpush1.bf16.msra.mxu0 %v427
    %443 = vmatprep.subr.bf16.mxu0 0
    %444 = vmatpush1.bf16.msra.mxu0 0
    %445 = vmatprep.subr.bf16.mxu0 0
    %446 = vmatpush1.bf16.msra.mxu0 0
    %447 = vmatprep.subr.bf16.mxu0 0
    %448 = vmatpush1.bf16.msra.mxu0 0
    %449 = vmatprep.subr.bf16.mxu0 0
    %450 = vmatpush1.bf16.msra.mxu0 0
    %451 = vmatprep.subr.bf16.mxu0 0
    %452 = vmatpush1.bf16.msra.mxu0 0
    %453 = vmatprep.subr.bf16.mxu0 0
    %454 = vmatpush1.bf16.msra.mxu0 0
    %455 = vmatprep.subr.bf16.mxu0 0
    %456 = vmatpush1.bf16.msra.mxu0 0
    %457 = vmatprep.subr.bf16.mxu0 0
    %458 = vmatpush1.bf16.msra.mxu0 0
    %459 = vmatprep.subr.bf16.mxu0 0
    %460 = vmatpush1.bf16.msra.mxu0 0
    %461 = vmatprep.subr.bf16.mxu0 0
    %462 = vmatpush1.bf16.msra.mxu0 0
    %463 = vmatprep.subr.bf16.mxu0 0
    %464 = vmatpush1.bf16.msra.mxu0 0
    %465 = vmatprep.subr.bf16.mxu0 0
    %466 = vmatpush1.bf16.msra.mxu0 0
    %467 = vmatprep.mubr.bf16.mxu0 0
    %468 = vmatmul.mubr.bf16.gmra.mrb[0].mxu0 %v433
    %v469 = vpop.f32.mrb[0].mxu0
    %v470 = vadd.f32 0.0, %v469
    %v471 = vpop.f32.mrb[0].mxu0
    %v472 = vpop.f32.mrb[0].mxu0
    %v473 = vadd.f32 0.0, %v472
    %v474 = vpop.f32.mrb[0].mxu0
    %475 = vdwg.mxu0
    %v476 = vadd.f32 %v340, %v470
    %v477 = vadd.f32 %v343, %v473
    %v478 = vld [vmem:[%s3] sm:$0xff]
    %v479 = vld [vmem:[%s3 + $0x8] sm:$0xff]
    %v480 = vld [vmem:[%s3 + $0x10] sm:$0xff]
    %v481 = vld [vmem:[%s3 + $0x18] sm:$0xff]
    %v482 = vld [vmem:[%s3 + $0x20] sm:$0xff]
    %v483 = vld [vmem:[%s3 + $0x28] sm:$0xff]
    %v484 = vld [vmem:[%s3 + $0x30] sm:$0xff]
    %v485 = vld [vmem:[%s3 + $0x38] sm:$0xff]
    %v486 = vld [vmem:[%s4] sm:$0xff]
    %v487 = vsel %vm233, %v476, 0.0
    %v488 = vsel %vm233, %v477, 0.0
    %v489 = vadd.f32 %v487, %v488
    %v490 = vrot.slane %v489, 4
    %v491 = vadd.f32 %v489, %v490
    %v492 = vrot.slane %v491, 2
    %v493 = vadd.f32 %v491, %v492
    %v494 = vrot.slane %v493, 1
    %v495 = vadd.f32 %v493, %v494
    %v497 = vsel %vm233, %v495, 0
    %499 = vmatprep.subr.mxu0 0.0
    %500 = vmatpush1.msra.mxu0 %v478
    %501 = vmatprep.subr.mxu0 0.0
    %502 = vmatpush1.msra.mxu0 %v479
    %503 = vmatprep.subr.mxu0 0.0
    %504 = vmatpush1.msra.mxu0 %v480
    %505 = vmatprep.subr.mxu0 0.0
    %506 = vmatpush1.msra.mxu0 %v481
    %507 = vmatprep.subr.mxu0 0.0
    %508 = vmatpush1.msra.mxu0 %v482
    %509 = vmatprep.subr.mxu0 0.0
    %510 = vmatpush1.msra.mxu0 %v483
    %511 = vmatprep.subr.mxu0 0.0
    %512 = vmatpush1.msra.mxu0 %v484
    %513 = vmatprep.subr.mxu0 0.0
    %514 = vmatpush1.msra.mxu0 %v485
    %515 = vmatprep.subr.mxu0 0.0
    %516 = vmatpush1.msra.mxu0 0.0
    %517 = vmatprep.subr.mxu0 0.0
    %518 = vmatpush1.msra.mxu0 0.0
    %519 = vmatprep.subr.mxu0 0.0
    %520 = vmatpush1.msra.mxu0 0.0
    %521 = vmatprep.subr.mxu0 0.0
    %522 = vmatpush1.msra.mxu0 0.0
    %523 = vmatprep.subr.mxu0 0.0
    %524 = vmatpush1.msra.mxu0 0.0
    %525 = vmatprep.subr.mxu0 0.0
    %526 = vmatpush1.msra.mxu0 0.0
    %527 = vmatprep.subr.mxu0 0.0
    %528 = vmatpush1.msra.mxu0 0.0
    %529 = vmatprep.subr.mxu0 0.0
    %530 = vmatpush1.msra.mxu0 0.0
    %531 = vmatprep.subr.mxu0 0.0
    %532 = vmatpush1.msra.mxu0 0.0
    %533 = vmatprep.subr.mxu0 0.0
    %534 = vmatpush1.msra.mxu0 0.0
    %535 = vmatprep.subr.mxu0 0.0
    %536 = vmatpush1.msra.mxu0 0.0
    %537 = vmatprep.subr.mxu0 0.0
    %538 = vmatpush1.msra.mxu0 0.0
    %539 = vmatprep.subr.mxu0 0.0
    %540 = vmatpush1.msra.mxu0 0.0
    %541 = vmatprep.subr.mxu0 0.0
    %542 = vmatpush1.msra.mxu0 0.0
    %543 = vmatprep.subr.mxu0 0.0
    %544 = vmatpush1.msra.mxu0 0.0
    %545 = vmatprep.subr.mxu0 0.0
    %546 = vmatpush1.msra.mxu0 0.0
    %547 = vmatprep.subr.mxu0 0.0
    %548 = vmatpush1.msra.mxu0 0.0
    %549 = vmatprep.subr.mxu0 0.0
    %550 = vmatpush1.msra.mxu0 0.0
    %551 = vmatprep.subr.mxu0 0.0
    %552 = vmatpush1.msra.mxu0 0.0
    %553 = vmatprep.subr.mxu0 0.0
    %554 = vmatpush1.msra.mxu0 0.0
    %555 = vmatprep.subr.mxu0 0.0
    %556 = vmatpush1.msra.mxu0 0.0
    %557 = vmatprep.subr.mxu0 0.0
    %558 = vmatpush1.msra.mxu0 0.0
    %559 = vmatprep.subr.mxu0 0.0
    %560 = vmatpush1.msra.mxu0 0.0
    %561 = vmatprep.subr.mxu0 0.0
    %562 = vmatpush1.msra.mxu0 0.0
    %563 = vmatprep.mubr.f32.mxu0 0.0
    %564 = vmatmul.mubr.f32.gmra.mrb[0].mxu0 %v497
    %v565 = vpop.f32.mrb[0].mxu0
    %v566 = vadd.f32 0.0, %v565
    %v567 = vpop.f32.mrb[0].mxu0
    %568 = vdwg.mxu0
    %v569 = vmul.f32 %v566, 0.0078125
    %vm570 = vcmask 64512
    %v572 = vsel %vm570, %v569, 0
    %574 = vmatprep.subr.mxu0 0.0
    %575 = vmatpush1.msra.mxu0 %v486
    %576 = vmatprep.subr.mxu0 0.0
    %577 = vmatpush1.msra.mxu0 0.0
    %578 = vmatprep.subr.mxu0 0.0
    %579 = vmatpush1.msra.mxu0 0.0
    %580 = vmatprep.subr.mxu0 0.0
    %581 = vmatpush1.msra.mxu0 0.0
    %582 = vmatprep.subr.mxu0 0.0
    %583 = vmatpush1.msra.mxu0 0.0
    %584 = vmatprep.subr.mxu0 0.0
    %585 = vmatpush1.msra.mxu0 0.0
    %586 = vmatprep.subr.mxu0 0.0
    %587 = vmatpush1.msra.mxu0 0.0
    %588 = vmatprep.subr.mxu0 0.0
    %589 = vmatpush1.msra.mxu0 0.0
    %590 = vmatprep.subr.mxu0 0.0
    %591 = vmatpush1.msra.mxu0 0.0
    %592 = vmatprep.subr.mxu0 0.0
    %593 = vmatpush1.msra.mxu0 0.0
    %594 = vmatprep.subr.mxu0 0.0
    %595 = vmatpush1.msra.mxu0 0.0
    %596 = vmatprep.subr.mxu0 0.0
    %597 = vmatpush1.msra.mxu0 0.0
    %598 = vmatprep.subr.mxu0 0.0
    %599 = vmatpush1.msra.mxu0 0.0
    %600 = vmatprep.subr.mxu0 0.0
    %601 = vmatpush1.msra.mxu0 0.0
    %602 = vmatprep.subr.mxu0 0.0
    %603 = vmatpush1.msra.mxu0 0.0
    %604 = vmatprep.subr.mxu0 0.0
    %605 = vmatpush1.msra.mxu0 0.0
    %606 = vmatprep.subr.mxu0 0.0
    %607 = vmatpush1.msra.mxu0 0.0
    %608 = vmatprep.subr.mxu0 0.0
    %609 = vmatpush1.msra.mxu0 0.0
    %610 = vmatprep.subr.mxu0 0.0
    %611 = vmatpush1.msra.mxu0 0.0
    %612 = vmatprep.subr.mxu0 0.0
    %613 = vmatpush1.msra.mxu0 0.0
    %614 = vmatprep.subr.mxu0 0.0
    %615 = vmatpush1.msra.mxu0 0.0
    %616 = vmatprep.subr.mxu0 0.0
    %617 = vmatpush1.msra.mxu0 0.0
    %618 = vmatprep.subr.mxu0 0.0
    %619 = vmatpush1.msra.mxu0 0.0
    %620 = vmatprep.subr.mxu0 0.0
    %621 = vmatpush1.msra.mxu0 0.0
    %622 = vmatprep.subr.mxu0 0.0
    %623 = vmatpush1.msra.mxu0 0.0
    %624 = vmatprep.subr.mxu0 0.0
    %625 = vmatpush1.msra.mxu0 0.0
    %626 = vmatprep.subr.mxu0 0.0
    %627 = vmatpush1.msra.mxu0 0.0
    %628 = vmatprep.subr.mxu0 0.0
    %629 = vmatpush1.msra.mxu0 0.0
    %630 = vmatprep.subr.mxu0 0.0
    %631 = vmatpush1.msra.mxu0 0.0
    %632 = vmatprep.subr.mxu0 0.0
    %633 = vmatpush1.msra.mxu0 0.0
    %634 = vmatprep.subr.mxu0 0.0
    %635 = vmatpush1.msra.mxu0 0.0
    %636 = vmatprep.subr.mxu0 0.0
    %637 = vmatpush1.msra.mxu0 0.0
    %638 = vmatprep.mubr.f32.mxu0 0.0
    %639 = vmatmul.mubr.f32.gmra.mrb[0].mxu0 %v572
    %v640 = vpop.f32.mrb[0].mxu0
    %v641 = vadd.f32 0.0, %v640
    %v642 = vpop.f32.mrb[0].mxu0
    %643 = vdwg.mxu0
    %v644 = vlaneseq
    %v645 = vshrl.u32 %v644, 7
    %v646 = vsub.s32 0, %v645
    %v647 = vrot.slane %v641, %v646
    %v648 = vsub.f32 %v476, %v647
    %v649 = vsub.f32 %v477, %v647
    %v650 = vmul.f32 %v648, %v648
    %v651 = vmul.f32 %v649, %v649
    %v652 = vsel %vm233, %v650, 0.0
    %v653 = vsel %vm233, %v651, 0.0
    %v654 = vadd.f32 %v652, %v653
    %v655 = vrot.slane %v654, 4
    %v656 = vadd.f32 %v654, %v655
    %v657 = vrot.slane %v656, 2
    %v658 = vadd.f32 %v656, %v657
    %v659 = vrot.slane %v658, 1
    %v660 = vadd.f32 %v658, %v659
    %v662 = vsel %vm233, %v660, 0
    %664 = vmatprep.subr.mxu0 0.0
    %665 = vmatpush1.msra.mxu0 %v478
    %666 = vmatprep.subr.mxu0 0.0
    %667 = vmatpush1.msra.mxu0 %v479
    %668 = vmatprep.subr.mxu0 0.0
    %669 = vmatpush1.msra.mxu0 %v480
    %670 = vmatprep.subr.mxu0 0.0
    %671 = vmatpush1.msra.mxu0 %v481
    %672 = vmatprep.subr.mxu0 0.0
    %673 = vmatpush1.msra.mxu0 %v482
    %674 = vmatprep.subr.mxu0 0.0
    %675 = vmatpush1.msra.mxu0 %v483
    %676 = vmatprep.subr.mxu0 0.0
    %677 = vmatpush1.msra.mxu0 %v484
    %678 = vmatprep.subr.mxu0 0.0
    %679 = vmatpush1.msra.mxu0 %v485
    %680 = vmatprep.subr.mxu0 0.0
    %681 = vmatpush1.msra.mxu0 0.0
    %682 = vmatprep.subr.mxu0 0.0
    %683 = vmatpush1.msra.mxu0 0.0
    %684 = vmatprep.subr.mxu0 0.0
    %685 = vmatpush1.msra.mxu0 0.0
    %686 = vmatprep.subr.mxu0 0.0
    %687 = vmatpush1.msra.mxu0 0.0
    %688 = vmatprep.subr.mxu0 0.0
    %689 = vmatpush1.msra.mxu0 0.0
    %690 = vmatprep.subr.mxu0 0.0
    %691 = vmatpush1.msra.mxu0 0.0
    %692 = vmatprep.subr.mxu0 0.0
    %693 = vmatpush1.msra.mxu0 0.0
    %694 = vmatprep.subr.mxu0 0.0
    %695 = vmatpush1.msra.mxu0 0.0
    %696 = vmatprep.subr.mxu0 0.0
    %697 = vmatpush1.msra.mxu0 0.0
    %698 = vmatprep.subr.mxu0 0.0
    %699 = vmatpush1.msra.mxu0 0.0
    %700 = vmatprep.subr.mxu0 0.0
    %701 = vmatpush1.msra.mxu0 0.0
    %702 = vmatprep.subr.mxu0 0.0
    %703 = vmatpush1.msra.mxu0 0.0
    %704 = vmatprep.subr.mxu0 0.0
    %705 = vmatpush1.msra.mxu0 0.0
    %706 = vmatprep.subr.mxu0 0.0
    %707 = vmatpush1.msra.mxu0 0.0
    %708 = vmatprep.subr.mxu0 0.0
    %709 = vmatpush1.msra.mxu0 0.0
    %710 = vmatprep.subr.mxu0 0.0
    %711 = vmatpush1.msra.mxu0 0.0
    %712 = vmatprep.subr.mxu0 0.0
    %713 = vmatpush1.msra.mxu0 0.0
    %714 = vmatprep.subr.mxu0 0.0
    %715 = vmatpush1.msra.mxu0 0.0
    %716 = vmatprep.subr.mxu0 0.0
    %717 = vmatpush1.msra.mxu0 0.0
    %718 = vmatprep.subr.mxu0 0.0
    %719 = vmatpush1.msra.mxu0 0.0
    %720 = vmatprep.subr.mxu0 0.0
    %721 = vmatpush1.msra.mxu0 0.0
    %722 = vmatprep.subr.mxu0 0.0
    %723 = vmatpush1.msra.mxu0 0.0
    %724 = vmatprep.subr.mxu0 0.0
    %725 = vmatpush1.msra.mxu0 0.0
    %726 = vmatprep.subr.mxu0 0.0
    %727 = vmatpush1.msra.mxu0 0.0
    %728 = vmatprep.mubr.f32.mxu0 0.0
    %729 = vmatmul.mubr.f32.gmra.mrb[0].mxu0 %v662
    %v730 = vpop.f32.mrb[0].mxu0
    %v731 = vadd.f32 0.0, %v730
    %v732 = vpop.f32.mrb[0].mxu0
    %733 = vdwg.mxu0
    %v734 = vmul.f32 %v731, 0.0078125
    %v735 = vld [vmem:[%s5] sm:$0x1]
    %v736 = vadd.f32 %v734, 1e-05
    %v737 = vrsqrt.pop %v736
    %v738 = vmul.f32 %v735, %v737
    %v740 = vsel %vm570, %v738, 0
    %742 = vmatprep.subr.mxu0 0.0
    %743 = vmatpush1.msra.mxu0 %v486
    %744 = vmatprep.subr.mxu0 0.0
    %745 = vmatpush1.msra.mxu0 0.0
    %746 = vmatprep.subr.mxu0 0.0
    %747 = vmatpush1.msra.mxu0 0.0
    %748 = vmatprep.subr.mxu0 0.0
    %749 = vmatpush1.msra.mxu0 0.0
    %750 = vmatprep.subr.mxu0 0.0
    %751 = vmatpush1.msra.mxu0 0.0
    %752 = vmatprep.subr.mxu0 0.0
    %753 = vmatpush1.msra.mxu0 0.0
    %754 = vmatprep.subr.mxu0 0.0
    %755 = vmatpush1.msra.mxu0 0.0
    %756 = vmatprep.subr.mxu0 0.0
    %757 = vmatpush1.msra.mxu0 0.0
    %758 = vmatprep.subr.mxu0 0.0
    %759 = vmatpush1.msra.mxu0 0.0
    %760 = vmatprep.subr.mxu0 0.0
    %761 = vmatpush1.msra.mxu0 0.0
    %762 = vmatprep.subr.mxu0 0.0
    %763 = vmatpush1.msra.mxu0 0.0
    %764 = vmatprep.subr.mxu0 0.0
    %765 = vmatpush1.msra.mxu0 0.0
    %766 = vmatprep.subr.mxu0 0.0
    %767 = vmatpush1.msra.mxu0 0.0
    %768 = vmatprep.subr.mxu0 0.0
    %769 = vmatpush1.msra.mxu0 0.0
    %770 = vmatprep.subr.mxu0 0.0
    %771 = vmatpush1.msra.mxu0 0.0
    %772 = vmatprep.subr.mxu0 0.0
    %773 = vmatpush1.msra.mxu0 0.0
    %774 = vmatprep.subr.mxu0 0.0
    %775 = vmatpush1.msra.mxu0 0.0
    %776 = vmatprep.subr.mxu0 0.0
    %777 = vmatpush1.msra.mxu0 0.0
    %778 = vmatprep.subr.mxu0 0.0
    %779 = vmatpush1.msra.mxu0 0.0
    %780 = vmatprep.subr.mxu0 0.0
    %781 = vmatpush1.msra.mxu0 0.0
    %782 = vmatprep.subr.mxu0 0.0
    %783 = vmatpush1.msra.mxu0 0.0
    %784 = vmatprep.subr.mxu0 0.0
    %785 = vmatpush1.msra.mxu0 0.0
    %786 = vmatprep.subr.mxu0 0.0
    %787 = vmatpush1.msra.mxu0 0.0
    %788 = vmatprep.subr.mxu0 0.0
    %789 = vmatpush1.msra.mxu0 0.0
    %790 = vmatprep.subr.mxu0 0.0
    %791 = vmatpush1.msra.mxu0 0.0
    %792 = vmatprep.subr.mxu0 0.0
    %793 = vmatpush1.msra.mxu0 0.0
    %794 = vmatprep.subr.mxu0 0.0
    %795 = vmatpush1.msra.mxu0 0.0
    %796 = vmatprep.subr.mxu0 0.0
    %797 = vmatpush1.msra.mxu0 0.0
    %798 = vmatprep.subr.mxu0 0.0
    %799 = vmatpush1.msra.mxu0 0.0
    %800 = vmatprep.subr.mxu0 0.0
    %801 = vmatpush1.msra.mxu0 0.0
    %802 = vmatprep.subr.mxu0 0.0
    %803 = vmatpush1.msra.mxu0 0.0
    %804 = vmatprep.subr.mxu0 0.0
    %805 = vmatpush1.msra.mxu0 0.0
    %806 = vmatprep.mubr.f32.mxu0 0.0
    %807 = vmatmul.mubr.f32.gmra.mrb[0].mxu0 %v740
    %v808 = vpop.f32.mrb[0].mxu0
    %v809 = vadd.f32 0.0, %v808
    %v810 = vpop.f32.mrb[0].mxu0
    %811 = vdwg.mxu0
    %v812 = vlaneseq
    %v813 = vshrl.u32 %v812, 7
    %v814 = vsub.s32 0, %v813
    %v815 = vrot.slane %v809, %v814
    %v816 = vmul.f32 %v648, %v815
    %v817 = vmul.f32 %v649, %v815
    %v818 = vld [vmem:[%s5 + $0x1] sm:$0x1]
    %v820 = vsel %vm570, %v818, 0
    %822 = vmatprep.subr.mxu0 0.0
    %823 = vmatpush1.msra.mxu0 %v486
    %824 = vmatprep.subr.mxu0 0.0
    %825 = vmatpush1.msra.mxu0 0.0
    %826 = vmatprep.subr.mxu0 0.0
    %827 = vmatpush1.msra.mxu0 0.0
    %828 = vmatprep.subr.mxu0 0.0
    %829 = vmatpush1.msra.mxu0 0.0
    %830 = vmatprep.subr.mxu0 0.0
    %831 = vmatpush1.msra.mxu0 0.0
    %832 = vmatprep.subr.mxu0 0.0
    %833 = vmatpush1.msra.mxu0 0.0
    %834 = vmatprep.subr.mxu0 0.0
    %835 = vmatpush1.msra.mxu0 0.0
    %836 = vmatprep.subr.mxu0 0.0
    %837 = vmatpush1.msra.mxu0 0.0
    %838 = vmatprep.subr.mxu0 0.0
    %839 = vmatpush1.msra.mxu0 0.0
    %840 = vmatprep.subr.mxu0 0.0
    %841 = vmatpush1.msra.mxu0 0.0
    %842 = vmatprep.subr.mxu0 0.0
    %843 = vmatpush1.msra.mxu0 0.0
    %844 = vmatprep.subr.mxu0 0.0
    %845 = vmatpush1.msra.mxu0 0.0
    %846 = vmatprep.subr.mxu0 0.0
    %847 = vmatpush1.msra.mxu0 0.0
    %848 = vmatprep.subr.mxu0 0.0
    %849 = vmatpush1.msra.mxu0 0.0
    %850 = vmatprep.subr.mxu0 0.0
    %851 = vmatpush1.msra.mxu0 0.0
    %852 = vmatprep.subr.mxu0 0.0
    %853 = vmatpush1.msra.mxu0 0.0
    %854 = vmatprep.subr.mxu0 0.0
    %855 = vmatpush1.msra.mxu0 0.0
    %856 = vmatprep.subr.mxu0 0.0
    %857 = vmatpush1.msra.mxu0 0.0
    %858 = vmatprep.subr.mxu0 0.0
    %859 = vmatpush1.msra.mxu0 0.0
    %860 = vmatprep.subr.mxu0 0.0
    %861 = vmatpush1.msra.mxu0 0.0
    %862 = vmatprep.subr.mxu0 0.0
    %863 = vmatpush1.msra.mxu0 0.0
    %864 = vmatprep.subr.mxu0 0.0
    %865 = vmatpush1.msra.mxu0 0.0
    %866 = vmatprep.subr.mxu0 0.0
    %867 = vmatpush1.msra.mxu0 0.0
    %868 = vmatprep.subr.mxu0 0.0
    %869 = vmatpush1.msra.mxu0 0.0
    %870 = vmatprep.subr.mxu0 0.0
    %871 = vmatpush1.msra.mxu0 0.0
    %872 = vmatprep.subr.mxu0 0.0
    %873 = vmatpush1.msra.mxu0 0.0
    %874 = vmatprep.subr.mxu0 0.0
    %875 = vmatpush1.msra.mxu0 0.0
    %876 = vmatprep.subr.mxu0 0.0
    %877 = vmatpush1.msra.mxu0 0.0
    %878 = vmatprep.subr.mxu0 0.0
    %879 = vmatpush1.msra.mxu0 0.0
    %880 = vmatprep.subr.mxu0 0.0
    %881 = vmatpush1.msra.mxu0 0.0
    %882 = vmatprep.subr.mxu0 0.0
    %883 = vmatpush1.msra.mxu0 0.0
    %884 = vmatprep.subr.mxu0 0.0
    %885 = vmatpush1.msra.mxu0 0.0
    %886 = vmatprep.mubr.f32.mxu0 0.0
    %887 = vmatmul.mubr.f32.gmra.mrb[0].mxu0 %v820
    %v888 = vpop.f32.mrb[0].mxu0
    %v889 = vadd.f32 0.0, %v888
    %v890 = vpop.f32.mrb[0].mxu0
    %891 = vdwg.mxu0
    %v892 = vlaneseq
    %v893 = vshrl.u32 %v892, 7
    %v894 = vsub.s32 0, %v893
    %v895 = vrot.slane %v889, %v894
    %v896 = vadd.f32 %v816, %v895
    %v897 = vadd.f32 %v817, %v895
    %vm898 = vcmp.ge.f32.partialorder %v896, 0.0
    %vm899 = vcmp.ge.f32.partialorder %v897, 0.0
    %v900 = vmul.f32 %v896, 0.01
    %v901 = vmul.f32 %v897, 0.01
    %v902 = vsel %vm898, %v896, %v900
    %v903 = vsel %vm899, %v897, %v901
    %v904 = vpack.c.bf16 %v903, %v902
    %v905 = vld [vmem:[%s6] sm:$0xf]
    %vm906 = vcmask 130048
    %v908 = vsel %vm906, %v905, 0
    %910 = vmatprep.subr.bf16.mxu0 0
    %911 = vmatpush1.bf16.msra.mxu0 %v904
    %912 = vmatprep.subr.bf16.mxu0 0
    %913 = vmatpush1.bf16.msra.mxu0 0
    %914 = vmatprep.subr.bf16.mxu0 0
    %915 = vmatpush1.bf16.msra.mxu0 0
    %916 = vmatprep.subr.bf16.mxu0 0
    %917 = vmatpush1.bf16.msra.mxu0 0
    %918 = vmatprep.subr.bf16.mxu0 0
    %919 = vmatpush1.bf16.msra.mxu0 0
    %920 = vmatprep.subr.bf16.mxu0 0
    %921 = vmatpush1.bf16.msra.mxu0 0
    %922 = vmatprep.subr.bf16.mxu0 0
    %923 = vmatpush1.bf16.msra.mxu0 0
    %924 = vmatprep.subr.bf16.mxu0 0
    %925 = vmatpush1.bf16.msra.mxu0 0
    %926 = vmatprep.subr.bf16.mxu0 0
    %927 = vmatpush1.bf16.msra.mxu0 0
    %928 = vmatprep.subr.bf16.mxu0 0
    %929 = vmatpush1.bf16.msra.mxu0 0
    %930 = vmatprep.subr.bf16.mxu0 0
    %931 = vmatpush1.bf16.msra.mxu0 0
    %932 = vmatprep.subr.bf16.mxu0 0
    %933 = vmatpush1.bf16.msra.mxu0 0
    %934 = vmatprep.subr.bf16.mxu0 0
    %935 = vmatpush1.bf16.msra.mxu0 0
    %936 = vmatprep.subr.bf16.mxu0 0
    %937 = vmatpush1.bf16.msra.mxu0 0
    %938 = vmatprep.subr.bf16.mxu0 0
    %939 = vmatpush1.bf16.msra.mxu0 0
    %940 = vmatprep.subr.bf16.mxu0 0
    %941 = vmatpush1.bf16.msra.mxu0 0
    %942 = vmatprep.mubr.bf16.mxu0 0
    %943 = vmatmul.mubr.bf16.gmra.mrb[0].mxu0 %v908
    %v944 = vpop.f32.mrb[0].mxu0
    %v945 = vadd.f32 0.0, %v944
    %v946 = vpop.f32.mrb[0].mxu0
    %v947 = vpop.f32.mrb[0].mxu0
    %v948 = vpop.f32.mrb[0].mxu0
    %949 = vdwg.mxu0
    %v950 = vpack.c.bf16 %v945, %v945
    %v951 = vld [vmem:[%s7] sm:$0xf]
    %v952 = vld [vmem:[%s7 + $0x4] sm:$0xf]
    %v953 = vld [vmem:[%s7 + $0x8] sm:$0xf]
    %v954 = vld [vmem:[%s7 + $0xc] sm:$0xf]
    %v955 = vld [vmem:[%s7 + $0x10] sm:$0xf]
    %v956 = vld [vmem:[%s7 + $0x14] sm:$0xf]
    %v957 = vld [vmem:[%s7 + $0x18] sm:$0xf]
    %v958 = vld [vmem:[%s7 + $0x1c] sm:$0xf]
    %s959 = scalar_lea.vmem %s6, 4
    %v960 = vld [vmem:[%s959] sm:$0xf]
    %v962 = vsel %vm906, %v960, 0
    %964 = vmatprep.subr.bf16.mxu0 0
    %965 = vmatpush1.bf16.msra.mxu0 %v904
    %966 = vmatprep.subr.bf16.mxu0 0
    %967 = vmatpush1.bf16.msra.mxu0 0
    %968 = vmatprep.subr.bf16.mxu0 0
    %969 = vmatpush1.bf16.msra.mxu0 0
    %970 = vmatprep.subr.bf16.mxu0 0
    %971 = vmatpush1.bf16.msra.mxu0 0
    %972 = vmatprep.subr.bf16.mxu0 0
    %973 = vmatpush1.bf16.msra.mxu0 0
    %974 = vmatprep.subr.bf16.mxu0 0
    %975 = vmatpush1.bf16.msra.mxu0 0
    %976 = vmatprep.subr.bf16.mxu0 0
    %977 = vmatpush1.bf16.msra.mxu0 0
    %978 = vmatprep.subr.bf16.mxu0 0
    %979 = vmatpush1.bf16.msra.mxu0 0
    %980 = vmatprep.subr.bf16.mxu0 0
    %981 = vmatpush1.bf16.msra.mxu0 0
    %982 = vmatprep.subr.bf16.mxu0 0
    %983 = vmatpush1.bf16.msra.mxu0 0
    %984 = vmatprep.subr.bf16.mxu0 0
    %985 = vmatpush1.bf16.msra.mxu0 0
    %986 = vmatprep.subr.bf16.mxu0 0
    %987 = vmatpush1.bf16.msra.mxu0 0
    %988 = vmatprep.subr.bf16.mxu0 0
    %989 = vmatpush1.bf16.msra.mxu0 0
    %990 = vmatprep.subr.bf16.mxu0 0
    %991 = vmatpush1.bf16.msra.mxu0 0
    %992 = vmatprep.subr.bf16.mxu0 0
    %993 = vmatpush1.bf16.msra.mxu0 0
    %994 = vmatprep.subr.bf16.mxu0 0
    %995 = vmatpush1.bf16.msra.mxu0 0
    %996 = vmatprep.mubr.bf16.mxu0 0
    %997 = vmatmul.mubr.bf16.gmra.mrb[0].mxu0 %v962
    %v998 = vpop.f32.mrb[0].mxu0
    %v999 = vadd.f32 0.0, %v998
    %v1000 = vpop.f32.mrb[0].mxu0
    %v1001 = vpop.f32.mrb[0].mxu0
    %v1002 = vpop.f32.mrb[0].mxu0
    %1003 = vdwg.mxu0
    %v1004 = vpack.c.bf16 %v999, %v999
    %s1005 = scalar_lea.vmem %s7, 32
    %v1006 = vld [vmem:[%s1005] sm:$0xf]
    %v1007 = vld [vmem:[%s1005 + $0x4] sm:$0xf]
    %v1008 = vld [vmem:[%s1005 + $0x8] sm:$0xf]
    %v1009 = vld [vmem:[%s1005 + $0xc] sm:$0xf]
    %v1010 = vld [vmem:[%s1005 + $0x10] sm:$0xf]
    %v1011 = vld [vmem:[%s1005 + $0x14] sm:$0xf]
    %v1012 = vld [vmem:[%s1005 + $0x18] sm:$0xf]
    %v1013 = vld [vmem:[%s1005 + $0x1c] sm:$0xf]
    %v1022 = vunpack.c.l.b16 %v1006
    %v1023 = vunpack.c.l.b16 %v1007
    %v1024 = vunpack.c.l.b16 %v1008
    %v1025 = vunpack.c.l.b16 %v1009
    %v1026 = vunpack.c.l.b16 %v1010
    %v1027 = vunpack.c.l.b16 %v1011
    %v1028 = vunpack.c.l.b16 %v1012
    %v1029 = vunpack.c.l.b16 %v1013
    %v1030 = vpack.c.b16 %v1023, %v1022
    %v1031 = vpack.c.b16 %v1025, %v1024
    %v1032 = vpack.c.b16 %v1027, %v1026
    %v1033 = vpack.c.b16 %v1029, %v1028
    %v1039 = vsel %vm233, %v1004, 0
    %1041 = vmatprep.subr.bf16.mxu0 0
    %1042 = vmatpush1.bf16.msra.mxu0 %v1030
    %1043 = vmatprep.subr.bf16.mxu0 0
    %1044 = vmatpush1.bf16.msra.mxu0 %v1031
    %1045 = vmatprep.subr.bf16.mxu0 0
    %1046 = vmatpush1.bf16.msra.mxu0 %v1032
    %1047 = vmatprep.subr.bf16.mxu0 0
    %1048 = vmatpush1.bf16.msra.mxu0 %v1033
    %1049 = vmatprep.subr.bf16.mxu0 0
    %1050 = vmatpush1.bf16.msra.mxu0 0
    %1051 = vmatprep.subr.bf16.mxu0 0
    %1052 = vmatpush1.bf16.msra.mxu0 0
    %1053 = vmatprep.subr.bf16.mxu0 0
    %1054 = vmatpush1.bf16.msra.mxu0 0
    %1055 = vmatprep.subr.bf16.mxu0 0
    %1056 = vmatpush1.bf16.msra.mxu0 0
    %1057 = vmatprep.subr.bf16.mxu0 0
    %1058 = vmatpush1.bf16.msra.mxu0 0
    %1059 = vmatprep.subr.bf16.mxu0 0
    %1060 = vmatpush1.bf16.msra.mxu0 0
    %1061 = vmatprep.subr.bf16.mxu0 0
    %1062 = vmatpush1.bf16.msra.mxu0 0
    %1063 = vmatprep.subr.bf16.mxu0 0
    %1064 = vmatpush1.bf16.msra.mxu0 0
    %1065 = vmatprep.subr.bf16.mxu0 0
    %1066 = vmatpush1.bf16.msra.mxu0 0
    %1067 = vmatprep.subr.bf16.mxu0 0
    %1068 = vmatpush1.bf16.msra.mxu0 0
    %1069 = vmatprep.subr.bf16.mxu0 0
    %1070 = vmatpush1.bf16.msra.mxu0 0
    %1071 = vmatprep.subr.bf16.mxu0 0
    %1072 = vmatpush1.bf16.msra.mxu0 0
    %1073 = vmatprep.mubr.bf16.mxu0 0
    %1074 = vmatmul.mubr.bf16.gmra.mrb[0].mxu0 %v1039
    %v1075 = vpop.f32.mrb[0].mxu0
    %v1076 = vadd.f32 0.0, %v1075
    %v1077 = vpop.f32.mrb[0].mxu0
    %v1078 = vpop.f32.mrb[0].mxu0
    %v1079 = vpop.f32.mrb[0].mxu0
    %1080 = vdwg.mxu0
    %v1089 = vunpack.c.l.b16 %v951
    %v1090 = vunpack.c.l.b16 %v952
    %v1091 = vunpack.c.l.b16 %v953
    %v1092 = vunpack.c.l.b16 %v954
    %v1093 = vunpack.c.l.b16 %v955
    %v1094 = vunpack.c.l.b16 %v956
    %v1095 = vunpack.c.l.b16 %v957
    %v1096 = vunpack.c.l.b16 %v958
    %v1097 = vpack.c.b16 %v1090, %v1089
    %v1098 = vpack.c.b16 %v1092, %v1091
    %v1099 = vpack.c.b16 %v1094, %v1093
    %v1100 = vpack.c.b16 %v1096, %v1095
    %v1106 = vsel %vm233, %v950, 0
    %1108 = vmatprep.subr.bf16.mxu0 0
    %1109 = vmatpush1.bf16.msra.mxu0 %v1097
    %1110 = vmatprep.subr.bf16.mxu0 0
    %1111 = vmatpush1.bf16.msra.mxu0 %v1098
    %1112 = vmatprep.subr.bf16.mxu0 0
    %1113 = vmatpush1.bf16.msra.mxu0 %v1099
    %1114 = vmatprep.subr.bf16.mxu0 0
    %1115 = vmatpush1.bf16.msra.mxu0 %v1100
    %1116 = vmatprep.subr.bf16.mxu0 0
    %1117 = vmatpush1.bf16.msra.mxu0 0
    %1118 = vmatprep.subr.bf16.mxu0 0
    %1119 = vmatpush1.bf16.msra.mxu0 0
    %1120 = vmatprep.subr.bf16.mxu0 0
    %1121 = vmatpush1.bf16.msra.mxu0 0
    %1122 = vmatprep.subr.bf16.mxu0 0
    %1123 = vmatpush1.bf16.msra.mxu0 0
    %1124 = vmatprep.subr.bf16.mxu0 0
    %1125 = vmatpush1.bf16.msra.mxu0 0
    %1126 = vmatprep.subr.bf16.mxu0 0
    %1127 = vmatpush1.bf16.msra.mxu0 0
    %1128 = vmatprep.subr.bf16.mxu0 0
    %1129 = vmatpush1.bf16.msra.mxu0 0
    %1130 = vmatprep.subr.bf16.mxu0 0
    %1131 = vmatpush1.bf16.msra.mxu0 0
    %1132 = vmatprep.subr.bf16.mxu0 0
    %1133 = vmatpush1.bf16.msra.mxu0 0
    %1134 = vmatprep.subr.bf16.mxu0 0
    %1135 = vmatpush1.bf16.msra.mxu0 0
    %1136 = vmatprep.subr.bf16.mxu0 0
    %1137 = vmatpush1.bf16.msra.mxu0 0
    %1138 = vmatprep.subr.bf16.mxu0 0
    %1139 = vmatpush1.bf16.msra.mxu0 0
    %1140 = vmatprep.mubr.bf16.mxu0 0
    %1141 = vmatmul.mubr.bf16.gmra.mrb[0].mxu0 %v1106
    %v1142 = vpop.f32.mrb[0].mxu0
    %v1143 = vadd.f32 %v1076, %v1142
    %v1144 = vpop.f32.mrb[0].mxu0
    %v1145 = vpop.f32.mrb[0].mxu0
    %v1146 = vpop.f32.mrb[0].mxu0
    %1147 = vdwg.mxu0
    %s1148 = scalar_lea.vmem %s6, 8
    %v1149 = vld [vmem:[%s1148] sm:$0xf]
    %v1151 = vsel %vm906, %v1149, 0
    %1153 = vmatprep.subr.bf16.mxu0 0
    %1154 = vmatpush1.bf16.msra.mxu0 %v904
    %1155 = vmatprep.subr.bf16.mxu0 0
    %1156 = vmatpush1.bf16.msra.mxu0 0
    %1157 = vmatprep.subr.bf16.mxu0 0
    %1158 = vmatpush1.bf16.msra.mxu0 0
    %1159 = vmatprep.subr.bf16.mxu0 0
    %1160 = vmatpush1.bf16.msra.mxu0 0
    %1161 = vmatprep.subr.bf16.mxu0 0
    %1162 = vmatpush1.bf16.msra.mxu0 0
    %1163 = vmatprep.subr.bf16.mxu0 0
    %1164 = vmatpush1.bf16.msra.mxu0 0
    %1165 = vmatprep.subr.bf16.mxu0 0
    %1166 = vmatpush1.bf16.msra.mxu0 0
    %1167 = vmatprep.subr.bf16.mxu0 0
    %1168 = vmatpush1.bf16.msra.mxu0 0
    %1169 = vmatprep.subr.bf16.mxu0 0
    %1170 = vmatpush1.bf16.msra.mxu0 0
    %1171 = vmatprep.subr.bf16.mxu0 0
    %1172 = vmatpush1.bf16.msra.mxu0 0
    %1173 = vmatprep.subr.bf16.mxu0 0
    %1174 = vmatpush1.bf16.msra.mxu0 0
    %1175 = vmatprep.subr.bf16.mxu0 0
    %1176 = vmatpush1.bf16.msra.mxu0 0
    %1177 = vmatprep.subr.bf16.mxu0 0
    %1178 = vmatpush1.bf16.msra.mxu0 0
    %1179 = vmatprep.subr.bf16.mxu0 0
    %1180 = vmatpush1.bf16.msra.mxu0 0
    %1181 = vmatprep.subr.bf16.mxu0 0
    %1182 = vmatpush1.bf16.msra.mxu0 0
    %1183 = vmatprep.subr.bf16.mxu0 0
    %1184 = vmatpush1.bf16.msra.mxu0 0
    %1185 = vmatprep.mubr.bf16.mxu0 0
    %1186 = vmatmul.mubr.bf16.gmra.mrb[0].mxu0 %v1151
    %v1187 = vpop.f32.mrb[0].mxu0
    %v1188 = vadd.f32 0.0, %v1187
    %v1189 = vpop.f32.mrb[0].mxu0
    %v1190 = vpop.f32.mrb[0].mxu0
    %v1191 = vpop.f32.mrb[0].mxu0
    %1192 = vdwg.mxu0
    %v1193 = vpack.c.bf16 %v1188, %v1188
    %s1194 = scalar_lea.vmem %s7, 64
    %v1195 = vld [vmem:[%s1194] sm:$0xf]
    %v1196 = vld [vmem:[%s1194 + $0x4] sm:$0xf]
    %v1197 = vld [vmem:[%s1194 + $0x8] sm:$0xf]
    %v1198 = vld [vmem:[%s1194 + $0xc] sm:$0xf]
    %v1199 = vld [vmem:[%s1194 + $0x10] sm:$0xf]
    %v1200 = vld [vmem:[%s1194 + $0x14] sm:$0xf]
    %v1201 = vld [vmem:[%s1194 + $0x18] sm:$0xf]
    %v1202 = vld [vmem:[%s1194 + $0x1c] sm:$0xf]
    %v1211 = vunpack.c.l.b16 %v1195
    %v1212 = vunpack.c.l.b16 %v1196
    %v1213 = vunpack.c.l.b16 %v1197
    %v1214 = vunpack.c.l.b16 %v1198
    %v1215 = vunpack.c.l.b16 %v1199
    %v1216 = vunpack.c.l.b16 %v1200
    %v1217 = vunpack.c.l.b16 %v1201
    %v1218 = vunpack.c.l.b16 %v1202
    %v1219 = vpack.c.b16 %v1212, %v1211
    %v1220 = vpack.c.b16 %v1214, %v1213
    %v1221 = vpack.c.b16 %v1216, %v1215
    %v1222 = vpack.c.b16 %v1218, %v1217
    %v1228 = vsel %vm233, %v1193, 0
    %1230 = vmatprep.subr.bf16.mxu0 0
    %1231 = vmatpush1.bf16.msra.mxu0 %v1219
    %1232 = vmatprep.subr.bf16.mxu0 0
    %1233 = vmatpush1.bf16.msra.mxu0 %v1220
    %1234 = vmatprep.subr.bf16.mxu0 0
    %1235 = vmatpush1.bf16.msra.mxu0 %v1221
    %1236 = vmatprep.subr.bf16.mxu0 0
    %1237 = vmatpush1.bf16.msra.mxu0 %v1222
    %1238 = vmatprep.subr.bf16.mxu0 0
    %1239 = vmatpush1.bf16.msra.mxu0 0
    %1240 = vmatprep.subr.bf16.mxu0 0
    %1241 = vmatpush1.bf16.msra.mxu0 0
    %1242 = vmatprep.subr.bf16.mxu0 0
    %1243 = vmatpush1.bf16.msra.mxu0 0
    %1244 = vmatprep.subr.bf16.mxu0 0
    %1245 = vmatpush1.bf16.msra.mxu0 0
    %1246 = vmatprep.subr.bf16.mxu0 0
    %1247 = vmatpush1.bf16.msra.mxu0 0
    %1248 = vmatprep.subr.bf16.mxu0 0
    %1249 = vmatpush1.bf16.msra.mxu0 0
    %1250 = vmatprep.subr.bf16.mxu0 0
    %1251 = vmatpush1.bf16.msra.mxu0 0
    %1252 = vmatprep.subr.bf16.mxu0 0
    %1253 = vmatpush1.bf16.msra.mxu0 0
    %1254 = vmatprep.subr.bf16.mxu0 0
    %1255 = vmatpush1.bf16.msra.mxu0 0
    %1256 = vmatprep.subr.bf16.mxu0 0
    %1257 = vmatpush1.bf16.msra.mxu0 0
    %1258 = vmatprep.subr.bf16.mxu0 0
    %1259 = vmatpush1.bf16.msra.mxu0 0
    %1260 = vmatprep.subr.bf16.mxu0 0
    %1261 = vmatpush1.bf16.msra.mxu0 0
    %1262 = vmatprep.mubr.bf16.mxu0 0
    %1263 = vmatmul.mubr.bf16.gmra.mrb[0].mxu0 %v1228
    %v1264 = vpop.f32.mrb[0].mxu0
    %v1265 = vadd.f32 0.0, %v1264
    %v1266 = vpop.f32.mrb[0].mxu0
    %v1267 = vpop.f32.mrb[0].mxu0
    %v1268 = vpop.f32.mrb[0].mxu0
    %1269 = vdwg.mxu0
    %v1270 = vadd.f32 %v1143, %v1265
    %v1271 = vld [vmem:[%s8] sm:$0xff]
    %v1272 = vld [vmem:[%s8 + $0x8] sm:$0xff]
    %v1273 = vld [vmem:[%s8 + $0x10] sm:$0xff]
    %v1274 = vld [vmem:[%s8 + $0x18] sm:$0xff]
    %v1275 = vld [vmem:[%s8 + $0x20] sm:$0xff]
    %v1276 = vld [vmem:[%s8 + $0x28] sm:$0xff]
    %v1277 = vld [vmem:[%s8 + $0x30] sm:$0xff]
    %v1278 = vld [vmem:[%s8 + $0x38] sm:$0xff]
    %v1279 = vld [vmem:[%s9] sm:$0xff]
    %v1280 = vld [vmem:[%s9 + $0x8] sm:$0xff]
    %v1281 = vsel %vm233, %v1270, 0.0
    %v1282 = vrot.slane %v1281, 4
    %v1283 = vadd.f32 %v1281, %v1282
    %v1284 = vrot.slane %v1283, 2
    %v1285 = vadd.f32 %v1283, %v1284
    %v1286 = vrot.slane %v1285, 1
    %v1287 = vadd.f32 %v1285, %v1286
    %v1289 = vsel %vm233, %v1287, 0
    %1291 = vmatprep.subr.mxu0 0.0
    %1292 = vmatpush1.msra.mxu0 %v1271
    %1293 = vmatprep.subr.mxu0 0.0
    %1294 = vmatpush1.msra.mxu0 %v1272
    %1295 = vmatprep.subr.mxu0 0.0
    %1296 = vmatpush1.msra.mxu0 %v1273
    %1297 = vmatprep.subr.mxu0 0.0
    %1298 = vmatpush1.msra.mxu0 %v1274
    %1299 = vmatprep.subr.mxu0 0.0
    %1300 = vmatpush1.msra.mxu0 %v1275
    %1301 = vmatprep.subr.mxu0 0.0
    %1302 = vmatpush1.msra.mxu0 %v1276
    %1303 = vmatprep.subr.mxu0 0.0
    %1304 = vmatpush1.msra.mxu0 %v1277
    %1305 = vmatprep.subr.mxu0 0.0
    %1306 = vmatpush1.msra.mxu0 %v1278
    %1307 = vmatprep.subr.mxu0 0.0
    %1308 = vmatpush1.msra.mxu0 0.0
    %1309 = vmatprep.subr.mxu0 0.0
    %1310 = vmatpush1.msra.mxu0 0.0
    %1311 = vmatprep.subr.mxu0 0.0
    %1312 = vmatpush1.msra.mxu0 0.0
    %1313 = vmatprep.subr.mxu0 0.0
    %1314 = vmatpush1.msra.mxu0 0.0
    %1315 = vmatprep.subr.mxu0 0.0
    %1316 = vmatpush1.msra.mxu0 0.0
    %1317 = vmatprep.subr.mxu0 0.0
    %1318 = vmatpush1.msra.mxu0 0.0
    %1319 = vmatprep.subr.mxu0 0.0
    %1320 = vmatpush1.msra.mxu0 0.0
    %1321 = vmatprep.subr.mxu0 0.0
    %1322 = vmatpush1.msra.mxu0 0.0
    %1323 = vmatprep.subr.mxu0 0.0
    %1324 = vmatpush1.msra.mxu0 0.0
    %1325 = vmatprep.subr.mxu0 0.0
    %1326 = vmatpush1.msra.mxu0 0.0
    %1327 = vmatprep.subr.mxu0 0.0
    %1328 = vmatpush1.msra.mxu0 0.0
    %1329 = vmatprep.subr.mxu0 0.0
    %1330 = vmatpush1.msra.mxu0 0.0
    %1331 = vmatprep.subr.mxu0 0.0
    %1332 = vmatpush1.msra.mxu0 0.0
    %1333 = vmatprep.subr.mxu0 0.0
    %1334 = vmatpush1.msra.mxu0 0.0
    %1335 = vmatprep.subr.mxu0 0.0
    %1336 = vmatpush1.msra.mxu0 0.0
    %1337 = vmatprep.subr.mxu0 0.0
    %1338 = vmatpush1.msra.mxu0 0.0
    %1339 = vmatprep.subr.mxu0 0.0
    %1340 = vmatpush1.msra.mxu0 0.0
    %1341 = vmatprep.subr.mxu0 0.0
    %1342 = vmatpush1.msra.mxu0 0.0
    %1343 = vmatprep.subr.mxu0 0.0
    %1344 = vmatpush1.msra.mxu0 0.0
    %1345 = vmatprep.subr.mxu0 0.0
    %1346 = vmatpush1.msra.mxu0 0.0
    %1347 = vmatprep.subr.mxu0 0.0
    %1348 = vmatpush1.msra.mxu0 0.0
    %1349 = vmatprep.subr.mxu0 0.0
    %1350 = vmatpush1.msra.mxu0 0.0
    %1351 = vmatprep.subr.mxu0 0.0
    %1352 = vmatpush1.msra.mxu0 0.0
    %1353 = vmatprep.subr.mxu0 0.0
    %1354 = vmatpush1.msra.mxu0 0.0
    %1355 = vmatprep.mubr.f32.mxu0 0.0
    %1356 = vmatmul.mubr.f32.gmra.mrb[0].mxu0 %v1289
    %v1357 = vpop.f32.mrb[0].mxu0
    %v1358 = vadd.f32 0.0, %v1357
    %v1359 = vpop.f32.mrb[0].mxu0
    %1360 = vdwg.mxu0
    %v1361 = vmul.f32 %v1358, 0.03125
    %v1363 = vsel %vm906, %v1361, 0
    %1365 = vmatprep.subr.mxu0 0.0
    %1366 = vmatpush1.msra.mxu0 %v1279
    %1367 = vmatprep.subr.mxu0 0.0
    %1368 = vmatpush1.msra.mxu0 %v1280
    %1369 = vmatprep.subr.mxu0 0.0
    %1370 = vmatpush1.msra.mxu0 0.0
    %1371 = vmatprep.subr.mxu0 0.0
    %1372 = vmatpush1.msra.mxu0 0.0
    %1373 = vmatprep.subr.mxu0 0.0
    %1374 = vmatpush1.msra.mxu0 0.0
    %1375 = vmatprep.subr.mxu0 0.0
    %1376 = vmatpush1.msra.mxu0 0.0
    %1377 = vmatprep.subr.mxu0 0.0
    %1378 = vmatpush1.msra.mxu0 0.0
    %1379 = vmatprep.subr.mxu0 0.0
    %1380 = vmatpush1.msra.mxu0 0.0
    %1381 = vmatprep.subr.mxu0 0.0
    %1382 = vmatpush1.msra.mxu0 0.0
    %1383 = vmatprep.subr.mxu0 0.0
    %1384 = vmatpush1.msra.mxu0 0.0
    %1385 = vmatprep.subr.mxu0 0.0
    %1386 = vmatpush1.msra.mxu0 0.0
    %1387 = vmatprep.subr.mxu0 0.0
    %1388 = vmatpush1.msra.mxu0 0.0
    %1389 = vmatprep.subr.mxu0 0.0
    %1390 = vmatpush1.msra.mxu0 0.0
    %1391 = vmatprep.subr.mxu0 0.0
    %1392 = vmatpush1.msra.mxu0 0.0
    %1393 = vmatprep.subr.mxu0 0.0
    %1394 = vmatpush1.msra.mxu0 0.0
    %1395 = vmatprep.subr.mxu0 0.0
    %1396 = vmatpush1.msra.mxu0 0.0
    %1397 = vmatprep.subr.mxu0 0.0
    %1398 = vmatpush1.msra.mxu0 0.0
    %1399 = vmatprep.subr.mxu0 0.0
    %1400 = vmatpush1.msra.mxu0 0.0
    %1401 = vmatprep.subr.mxu0 0.0
    %1402 = vmatpush1.msra.mxu0 0.0
    %1403 = vmatprep.subr.mxu0 0.0
    %1404 = vmatpush1.msra.mxu0 0.0
    %1405 = vmatprep.subr.mxu0 0.0
    %1406 = vmatpush1.msra.mxu0 0.0
    %1407 = vmatprep.subr.mxu0 0.0
    %1408 = vmatpush1.msra.mxu0 0.0
    %1409 = vmatprep.subr.mxu0 0.0
    %1410 = vmatpush1.msra.mxu0 0.0
    %1411 = vmatprep.subr.mxu0 0.0
    %1412 = vmatpush1.msra.mxu0 0.0
    %1413 = vmatprep.subr.mxu0 0.0
    %1414 = vmatpush1.msra.mxu0 0.0
    %1415 = vmatprep.subr.mxu0 0.0
    %1416 = vmatpush1.msra.mxu0 0.0
    %1417 = vmatprep.subr.mxu0 0.0
    %1418 = vmatpush1.msra.mxu0 0.0
    %1419 = vmatprep.subr.mxu0 0.0
    %1420 = vmatpush1.msra.mxu0 0.0
    %1421 = vmatprep.subr.mxu0 0.0
    %1422 = vmatpush1.msra.mxu0 0.0
    %1423 = vmatprep.subr.mxu0 0.0
    %1424 = vmatpush1.msra.mxu0 0.0
    %1425 = vmatprep.subr.mxu0 0.0
    %1426 = vmatpush1.msra.mxu0 0.0
    %1427 = vmatprep.subr.mxu0 0.0
    %1428 = vmatpush1.msra.mxu0 0.0
    %1429 = vmatprep.mubr.f32.mxu0 0.0
    %1430 = vmatmul.mubr.f32.gmra.mrb[0].mxu0 %v1363
    %v1431 = vpop.f32.mrb[0].mxu0
    %v1432 = vadd.f32 0.0, %v1431
    %v1433 = vpop.f32.mrb[0].mxu0
    %1434 = vdwg.mxu0
    %v1435 = vlaneseq
    %v1436 = vshrl.u32 %v1435, 7
    %v1437 = vsub.s32 0, %v1436
    %v1438 = vrot.slane %v1432, %v1437
    %v1439 = vsub.f32 %v1270, %v1438
    %v1440 = vmul.f32 %v1439, %v1439
    %v1441 = vsel %vm233, %v1440, 0.0
    %v1442 = vrot.slane %v1441, 4
    %v1443 = vadd.f32 %v1441, %v1442
    %v1444 = vrot.slane %v1443, 2
    %v1445 = vadd.f32 %v1443, %v1444
    %v1446 = vrot.slane %v1445, 1
    %v1447 = vadd.f32 %v1445, %v1446
    %v1449 = vsel %vm233, %v1447, 0
    %1451 = vmatprep.subr.mxu0 0.0
    %1452 = vmatpush1.msra.mxu0 %v1271
    %1453 = vmatprep.subr.mxu0 0.0
    %1454 = vmatpush1.msra.mxu0 %v1272
    %1455 = vmatprep.subr.mxu0 0.0
    %1456 = vmatpush1.msra.mxu0 %v1273
    %1457 = vmatprep.subr.mxu0 0.0
    %1458 = vmatpush1.msra.mxu0 %v1274
    %1459 = vmatprep.subr.mxu0 0.0
    %1460 = vmatpush1.msra.mxu0 %v1275
    %1461 = vmatprep.subr.mxu0 0.0
    %1462 = vmatpush1.msra.mxu0 %v1276
    %1463 = vmatprep.subr.mxu0 0.0
    %1464 = vmatpush1.msra.mxu0 %v1277
    %1465 = vmatprep.subr.mxu0 0.0
    %1466 = vmatpush1.msra.mxu0 %v1278
    %1467 = vmatprep.subr.mxu0 0.0
    %1468 = vmatpush1.msra.mxu0 0.0
    %1469 = vmatprep.subr.mxu0 0.0
    %1470 = vmatpush1.msra.mxu0 0.0
    %1471 = vmatprep.subr.mxu0 0.0
    %1472 = vmatpush1.msra.mxu0 0.0
    %1473 = vmatprep.subr.mxu0 0.0
    %1474 = vmatpush1.msra.mxu0 0.0
    %1475 = vmatprep.subr.mxu0 0.0
    %1476 = vmatpush1.msra.mxu0 0.0
    %1477 = vmatprep.subr.mxu0 0.0
    %1478 = vmatpush1.msra.mxu0 0.0
    %1479 = vmatprep.subr.mxu0 0.0
    %1480 = vmatpush1.msra.mxu0 0.0
    %1481 = vmatprep.subr.mxu0 0.0
    %1482 = vmatpush1.msra.mxu0 0.0
    %1483 = vmatprep.subr.mxu0 0.0
    %1484 = vmatpush1.msra.mxu0 0.0
    %1485 = vmatprep.subr.mxu0 0.0
    %1486 = vmatpush1.msra.mxu0 0.0
    %1487 = vmatprep.subr.mxu0 0.0
    %1488 = vmatpush1.msra.mxu0 0.0
    %1489 = vmatprep.subr.mxu0 0.0
    %1490 = vmatpush1.msra.mxu0 0.0
    %1491 = vmatprep.subr.mxu0 0.0
    %1492 = vmatpush1.msra.mxu0 0.0
    %1493 = vmatprep.subr.mxu0 0.0
    %1494 = vmatpush1.msra.mxu0 0.0
    %1495 = vmatprep.subr.mxu0 0.0
    %1496 = vmatpush1.msra.mxu0 0.0
    %1497 = vmatprep.subr.mxu0 0.0
    %1498 = vmatpush1.msra.mxu0 0.0
    %1499 = vmatprep.subr.mxu0 0.0
    %1500 = vmatpush1.msra.mxu0 0.0
    %1501 = vmatprep.subr.mxu0 0.0
    %1502 = vmatpush1.msra.mxu0 0.0
    %1503 = vmatprep.subr.mxu0 0.0
    %1504 = vmatpush1.msra.mxu0 0.0
    %1505 = vmatprep.subr.mxu0 0.0
    %1506 = vmatpush1.msra.mxu0 0.0
    %1507 = vmatprep.subr.mxu0 0.0
    %1508 = vmatpush1.msra.mxu0 0.0
    %1509 = vmatprep.subr.mxu0 0.0
    %1510 = vmatpush1.msra.mxu0 0.0
    %1511 = vmatprep.subr.mxu0 0.0
    %1512 = vmatpush1.msra.mxu0 0.0
    %1513 = vmatprep.subr.mxu0 0.0
    %1514 = vmatpush1.msra.mxu0 0.0
    %1515 = vmatprep.mubr.f32.mxu0 0.0
    %1516 = vmatmul.mubr.f32.gmra.mrb[0].mxu0 %v1449
    %v1517 = vpop.f32.mrb[0].mxu0
    %v1518 = vadd.f32 0.0, %v1517
    %v1519 = vpop.f32.mrb[0].mxu0
    %1520 = vdwg.mxu0
    %v1521 = vmul.f32 %v1518, 0.03125
    %v1522 = vld [vmem:[%s10] sm:$0x1]
    %v1523 = vadd.f32 %v1521, 1e-05
    %v1524 = vrsqrt.pop %v1523
    %v1525 = vmul.f32 %v1522, %v1524
    %v1527 = vsel %vm906, %v1525, 0
    %1529 = vmatprep.subr.mxu0 0.0
    %1530 = vmatpush1.msra.mxu0 %v1279
    %1531 = vmatprep.subr.mxu0 0.0
    %1532 = vmatpush1.msra.mxu0 %v1280
    %1533 = vmatprep.subr.mxu0 0.0
    %1534 = vmatpush1.msra.mxu0 0.0
    %1535 = vmatprep.subr.mxu0 0.0
    %1536 = vmatpush1.msra.mxu0 0.0
    %1537 = vmatprep.subr.mxu0 0.0
    %1538 = vmatpush1.msra.mxu0 0.0
    %1539 = vmatprep.subr.mxu0 0.0
    %1540 = vmatpush1.msra.mxu0 0.0
    %1541 = vmatprep.subr.mxu0 0.0
    %1542 = vmatpush1.msra.mxu0 0.0
    %1543 = vmatprep.subr.mxu0 0.0
    %1544 = vmatpush1.msra.mxu0 0.0
    %1545 = vmatprep.subr.mxu0 0.0
    %1546 = vmatpush1.msra.mxu0 0.0
    %1547 = vmatprep.subr.mxu0 0.0
    %1548 = vmatpush1.msra.mxu0 0.0
    %1549 = vmatprep.subr.mxu0 0.0
    %1550 = vmatpush1.msra.mxu0 0.0
    %1551 = vmatprep.subr.mxu0 0.0
    %1552 = vmatpush1.msra.mxu0 0.0
    %1553 = vmatprep.subr.mxu0 0.0
    %1554 = vmatpush1.msra.mxu0 0.0
    %1555 = vmatprep.subr.mxu0 0.0
    %1556 = vmatpush1.msra.mxu0 0.0
    %1557 = vmatprep.subr.mxu0 0.0
    %1558 = vmatpush1.msra.mxu0 0.0
    %1559 = vmatprep.subr.mxu0 0.0
    %1560 = vmatpush1.msra.mxu0 0.0
    %1561 = vmatprep.subr.mxu0 0.0
    %1562 = vmatpush1.msra.mxu0 0.0
    %1563 = vmatprep.subr.mxu0 0.0
    %1564 = vmatpush1.msra.mxu0 0.0
    %1565 = vmatprep.subr.mxu0 0.0
    %1566 = vmatpush1.msra.mxu0 0.0
    %1567 = vmatprep.subr.mxu0 0.0
    %1568 = vmatpush1.msra.mxu0 0.0
    %1569 = vmatprep.subr.mxu0 0.0
    %1570 = vmatpush1.msra.mxu0 0.0
    %1571 = vmatprep.subr.mxu0 0.0
    %1572 = vmatpush1.msra.mxu0 0.0
    %1573 = vmatprep.subr.mxu0 0.0
    %1574 = vmatpush1.msra.mxu0 0.0
    %1575 = vmatprep.subr.mxu0 0.0
    %1576 = vmatpush1.msra.mxu0 0.0
    %1577 = vmatprep.subr.mxu0 0.0
    %1578 = vmatpush1.msra.mxu0 0.0
    %1579 = vmatprep.subr.mxu0 0.0
    %1580 = vmatpush1.msra.mxu0 0.0
    %1581 = vmatprep.subr.mxu0 0.0
    %1582 = vmatpush1.msra.mxu0 0.0
    %1583 = vmatprep.subr.mxu0 0.0
    %1584 = vmatpush1.msra.mxu0 0.0
    %1585 = vmatprep.subr.mxu0 0.0
    %1586 = vmatpush1.msra.mxu0 0.0
    %1587 = vmatprep.subr.mxu0 0.0
    %1588 = vmatpush1.msra.mxu0 0.0
    %1589 = vmatprep.subr.mxu0 0.0
    %1590 = vmatpush1.msra.mxu0 0.0
    %1591 = vmatprep.subr.mxu0 0.0
    %1592 = vmatpush1.msra.mxu0 0.0
    %1593 = vmatprep.mubr.f32.mxu0 0.0
    %1594 = vmatmul.mubr.f32.gmra.mrb[0].mxu0 %v1527
    %v1595 = vpop.f32.mrb[0].mxu0
    %v1596 = vadd.f32 0.0, %v1595
    %v1597 = vpop.f32.mrb[0].mxu0
    %1598 = vdwg.mxu0
    %v1599 = vlaneseq
    %v1600 = vshrl.u32 %v1599, 7
    %v1601 = vsub.s32 0, %v1600
    %v1602 = vrot.slane %v1596, %v1601
    %v1603 = vmul.f32 %v1439, %v1602
    %v1604 = vld [vmem:[%s10 + $0x1] sm:$0x1]
    %v1606 = vsel %vm906, %v1604, 0
    %1608 = vmatprep.subr.mxu0 0.0
    %1609 = vmatpush1.msra.mxu0 %v1279
    %1610 = vmatprep.subr.mxu0 0.0
    %1611 = vmatpush1.msra.mxu0 %v1280
    %1612 = vmatprep.subr.mxu0 0.0
    %1613 = vmatpush1.msra.mxu0 0.0
    %1614 = vmatprep.subr.mxu0 0.0
    %1615 = vmatpush1.msra.mxu0 0.0
    %1616 = vmatprep.subr.mxu0 0.0
    %1617 = vmatpush1.msra.mxu0 0.0
    %1618 = vmatprep.subr.mxu0 0.0
    %1619 = vmatpush1.msra.mxu0 0.0
    %1620 = vmatprep.subr.mxu0 0.0
    %1621 = vmatpush1.msra.mxu0 0.0
    %1622 = vmatprep.subr.mxu0 0.0
    %1623 = vmatpush1.msra.mxu0 0.0
    %1624 = vmatprep.subr.mxu0 0.0
    %1625 = vmatpush1.msra.mxu0 0.0
    %1626 = vmatprep.subr.mxu0 0.0
    %1627 = vmatpush1.msra.mxu0 0.0
    %1628 = vmatprep.subr.mxu0 0.0
    %1629 = vmatpush1.msra.mxu0 0.0
    %1630 = vmatprep.subr.mxu0 0.0
    %1631 = vmatpush1.msra.mxu0 0.0
    %1632 = vmatprep.subr.mxu0 0.0
    %1633 = vmatpush1.msra.mxu0 0.0
    %1634 = vmatprep.subr.mxu0 0.0
    %1635 = vmatpush1.msra.mxu0 0.0
    %1636 = vmatprep.subr.mxu0 0.0
    %1637 = vmatpush1.msra.mxu0 0.0
    %1638 = vmatprep.subr.mxu0 0.0
    %1639 = vmatpush1.msra.mxu0 0.0
    %1640 = vmatprep.subr.mxu0 0.0
    %1641 = vmatpush1.msra.mxu0 0.0
    %1642 = vmatprep.subr.mxu0 0.0
    %1643 = vmatpush1.msra.mxu0 0.0
    %1644 = vmatprep.subr.mxu0 0.0
    %1645 = vmatpush1.msra.mxu0 0.0
    %1646 = vmatprep.subr.mxu0 0.0
    %1647 = vmatpush1.msra.mxu0 0.0
    %1648 = vmatprep.subr.mxu0 0.0
    %1649 = vmatpush1.msra.mxu0 0.0
    %1650 = vmatprep.subr.mxu0 0.0
    %1651 = vmatpush1.msra.mxu0 0.0
    %1652 = vmatprep.subr.mxu0 0.0
    %1653 = vmatpush1.msra.mxu0 0.0
    %1654 = vmatprep.subr.mxu0 0.0
    %1655 = vmatpush1.msra.mxu0 0.0
    %1656 = vmatprep.subr.mxu0 0.0
    %1657 = vmatpush1.msra.mxu0 0.0
    %1658 = vmatprep.subr.mxu0 0.0
    %1659 = vmatpush1.msra.mxu0 0.0
    %1660 = vmatprep.subr.mxu0 0.0
    %1661 = vmatpush1.msra.mxu0 0.0
    %1662 = vmatprep.subr.mxu0 0.0
    %1663 = vmatpush1.msra.mxu0 0.0
    %1664 = vmatprep.subr.mxu0 0.0
    %1665 = vmatpush1.msra.mxu0 0.0
    %1666 = vmatprep.subr.mxu0 0.0
    %1667 = vmatpush1.msra.mxu0 0.0
    %1668 = vmatprep.subr.mxu0 0.0
    %1669 = vmatpush1.msra.mxu0 0.0
    %1670 = vmatprep.subr.mxu0 0.0
    %1671 = vmatpush1.msra.mxu0 0.0
    %1672 = vmatprep.mubr.f32.mxu0 0.0
    %1673 = vmatmul.mubr.f32.gmra.mrb[0].mxu0 %v1606
    %v1674 = vpop.f32.mrb[0].mxu0
    %v1675 = vadd.f32 0.0, %v1674
    %v1676 = vpop.f32.mrb[0].mxu0
    %1677 = vdwg.mxu0
    %v1678 = vlaneseq
    %v1679 = vshrl.u32 %v1678, 7
    %v1680 = vsub.s32 0, %v1679
    %v1681 = vrot.slane %v1675, %v1680
    %v1682 = vadd.f32 %v1603, %v1681
    %vm1683 = vcmp.ge.f32.partialorder %v1682, 0.0
    %v1684 = vmul.f32 %v1682, 0.01
    %v1685 = vsel %vm1683, %v1682, %v1684
    %v1686 = vpack.c.bf16 %v1685, %v1685
    %v1687 = vld [vmem:[%s11] sm:$0x3]
    %v1689 = vsel %vm570, %v1687, 0
    %vm1691 = vcmask 1043456
    %v1693 = vsel %vm1691, %v1686, 0
    %1695 = vmatprep.subr.bf16.mxu0 0
    %1696 = vmatpush1.bf16.msra.mxu0 %v1693
    %1697 = vmatprep.subr.bf16.mxu0 0
    %1698 = vmatpush1.bf16.msra.mxu0 0
    %1699 = vmatprep.subr.bf16.mxu0 0
    %1700 = vmatpush1.bf16.msra.mxu0 0
    %1701 = vmatprep.subr.bf16.mxu0 0
    %1702 = vmatpush1.bf16.msra.mxu0 0
    %1703 = vmatprep.subr.bf16.mxu0 0
    %1704 = vmatpush1.bf16.msra.mxu0 0
    %1705 = vmatprep.subr.bf16.mxu0 0
    %1706 = vmatpush1.bf16.msra.mxu0 0
    %1707 = vmatprep.subr.bf16.mxu0 0
    %1708 = vmatpush1.bf16.msra.mxu0 0
    %1709 = vmatprep.subr.bf16.mxu0 0
    %1710 = vmatpush1.bf16.msra.mxu0 0
    %1711 = vmatprep.subr.bf16.mxu0 0
    %1712 = vmatpush1.bf16.msra.mxu0 0
    %1713 = vmatprep.subr.bf16.mxu0 0
    %1714 = vmatpush1.bf16.msra.mxu0 0
    %1715 = vmatprep.subr.bf16.mxu0 0
    %1716 = vmatpush1.bf16.msra.mxu0 0
    %1717 = vmatprep.subr.bf16.mxu0 0
    %1718 = vmatpush1.bf16.msra.mxu0 0
    %1719 = vmatprep.subr.bf16.mxu0 0
    %1720 = vmatpush1.bf16.msra.mxu0 0
    %1721 = vmatprep.subr.bf16.mxu0 0
    %1722 = vmatpush1.bf16.msra.mxu0 0
    %1723 = vmatprep.subr.bf16.mxu0 0
    %1724 = vmatpush1.bf16.msra.mxu0 0
    %1725 = vmatprep.subr.bf16.mxu0 0
    %1726 = vmatpush1.bf16.msra.mxu0 0
    %1727 = vmatprep.mubr.bf16.mxu0 0
    %1728 = vmatmul.mubr.bf16.gmra.mrb[0].mxu0 %v1689
    %v1729 = vpop.f32.mrb[0].mxu0
    %v1730 = vadd.f32 0.0, %v1729
    %v1731 = vpop.f32.mrb[0].mxu0
    %v1732 = vpop.f32.mrb[0].mxu0
    %v1733 = vpop.f32.mrb[0].mxu0
    %1734 = vdwg.mxu0
    %v1735 = vpack.c.bf16 %v1730, %v1730
    %v1736 = vld [vmem:[%s12] sm:$0xf]
    %v1737 = vld [vmem:[%s12 + $0x4] sm:$0xf]
    %v1738 = vld [vmem:[%s12 + $0x8] sm:$0xf]
    %v1739 = vld [vmem:[%s12 + $0xc] sm:$0xf]
    %v1740 = vld [vmem:[%s12 + $0x10] sm:$0xf]
    %v1741 = vld [vmem:[%s12 + $0x14] sm:$0xf]
    %v1742 = vld [vmem:[%s12 + $0x18] sm:$0xf]
    %v1743 = vld [vmem:[%s12 + $0x1c] sm:$0xf]
    %s1744 = scalar_lea.vmem %s11, 2
    %v1745 = vld [vmem:[%s1744] sm:$0x3]
    %v1747 = vsel %vm570, %v1745, 0
    %1749 = vmatprep.subr.bf16.mxu0 0
    %1750 = vmatpush1.bf16.msra.mxu0 %v1693
    %1751 = vmatprep.subr.bf16.mxu0 0
    %1752 = vmatpush1.bf16.msra.mxu0 0
    %1753 = vmatprep.subr.bf16.mxu0 0
    %1754 = vmatpush1.bf16.msra.mxu0 0
    %1755 = vmatprep.subr.bf16.mxu0 0
    %1756 = vmatpush1.bf16.msra.mxu0 0
    %1757 = vmatprep.subr.bf16.mxu0 0
    %1758 = vmatpush1.bf16.msra.mxu0 0
    %1759 = vmatprep.subr.bf16.mxu0 0
    %1760 = vmatpush1.bf16.msra.mxu0 0
    %1761 = vmatprep.subr.bf16.mxu0 0
    %1762 = vmatpush1.bf16.msra.mxu0 0
    %1763 = vmatprep.subr.bf16.mxu0 0
    %1764 = vmatpush1.bf16.msra.mxu0 0
    %1765 = vmatprep.subr.bf16.mxu0 0
    %1766 = vmatpush1.bf16.msra.mxu0 0
    %1767 = vmatprep.subr.bf16.mxu0 0
    %1768 = vmatpush1.bf16.msra.mxu0 0
    %1769 = vmatprep.subr.bf16.mxu0 0
    %1770 = vmatpush1.bf16.msra.mxu0 0
    %1771 = vmatprep.subr.bf16.mxu0 0
    %1772 = vmatpush1.bf16.msra.mxu0 0
    %1773 = vmatprep.subr.bf16.mxu0 0
    %1774 = vmatpush1.bf16.msra.mxu0 0
    %1775 = vmatprep.subr.bf16.mxu0 0
    %1776 = vmatpush1.bf16.msra.mxu0 0
    %1777 = vmatprep.subr.bf16.mxu0 0
    %1778 = vmatpush1.bf16.msra.mxu0 0
    %1779 = vmatprep.subr.bf16.mxu0 0
    %1780 = vmatpush1.bf16.msra.mxu0 0
    %1781 = vmatprep.mubr.bf16.mxu0 0
    %1782 = vmatmul.mubr.bf16.gmra.mrb[0].mxu0 %v1747
    %v1783 = vpop.f32.mrb[0].mxu0
    %v1784 = vadd.f32 0.0, %v1783
    %v1785 = vpop.f32.mrb[0].mxu0
    %v1786 = vpop.f32.mrb[0].mxu0
    %v1787 = vpop.f32.mrb[0].mxu0
    %1788 = vdwg.mxu0
    %v1789 = vpack.c.bf16 %v1784, %v1784
    %s1790 = scalar_lea.vmem %s12, 32
    %v1791 = vld [vmem:[%s1790] sm:$0xf]
    %v1792 = vld [vmem:[%s1790 + $0x4] sm:$0xf]
    %v1793 = vld [vmem:[%s1790 + $0x8] sm:$0xf]
    %v1794 = vld [vmem:[%s1790 + $0xc] sm:$0xf]
    %v1795 = vld [vmem:[%s1790 + $0x10] sm:$0xf]
    %v1796 = vld [vmem:[%s1790 + $0x14] sm:$0xf]
    %v1797 = vld [vmem:[%s1790 + $0x18] sm:$0xf]
    %v1798 = vld [vmem:[%s1790 + $0x1c] sm:$0xf]
    %v1807 = vunpack.c.l.b16 %v1791
    %v1808 = vunpack.c.l.b16 %v1792
    %v1809 = vunpack.c.l.b16 %v1793
    %v1810 = vunpack.c.l.b16 %v1794
    %v1811 = vunpack.c.l.b16 %v1795
    %v1812 = vunpack.c.l.b16 %v1796
    %v1813 = vunpack.c.l.b16 %v1797
    %v1814 = vunpack.c.l.b16 %v1798
    %v1815 = vpack.c.b16 %v1808, %v1807
    %v1816 = vpack.c.b16 %v1810, %v1809
    %v1817 = vpack.c.b16 %v1812, %v1811
    %v1818 = vpack.c.b16 %v1814, %v1813
    %v1824 = vsel %vm233, %v1789, 0
    %1826 = vmatprep.subr.bf16.mxu0 0
    %1827 = vmatpush1.bf16.msra.mxu0 %v1815
    %1828 = vmatprep.subr.bf16.mxu0 0
    %1829 = vmatpush1.bf16.msra.mxu0 %v1816
    %1830 = vmatprep.subr.bf16.mxu0 0
    %1831 = vmatpush1.bf16.msra.mxu0 %v1817
    %1832 = vmatprep.subr.bf16.mxu0 0
    %1833 = vmatpush1.bf16.msra.mxu0 %v1818
    %1834 = vmatprep.subr.bf16.mxu0 0
    %1835 = vmatpush1.bf16.msra.mxu0 0
    %1836 = vmatprep.subr.bf16.mxu0 0
    %1837 = vmatpush1.bf16.msra.mxu0 0
    %1838 = vmatprep.subr.bf16.mxu0 0
    %1839 = vmatpush1.bf16.msra.mxu0 0
    %1840 = vmatprep.subr.bf16.mxu0 0
    %1841 = vmatpush1.bf16.msra.mxu0 0
    %1842 = vmatprep.subr.bf16.mxu0 0
    %1843 = vmatpush1.bf16.msra.mxu0 0
    %1844 = vmatprep.subr.bf16.mxu0 0
    %1845 = vmatpush1.bf16.msra.mxu0 0
    %1846 = vmatprep.subr.bf16.mxu0 0
    %1847 = vmatpush1.bf16.msra.mxu0 0
    %1848 = vmatprep.subr.bf16.mxu0 0
    %1849 = vmatpush1.bf16.msra.mxu0 0
    %1850 = vmatprep.subr.bf16.mxu0 0
    %1851 = vmatpush1.bf16.msra.mxu0 0
    %1852 = vmatprep.subr.bf16.mxu0 0
    %1853 = vmatpush1.bf16.msra.mxu0 0
    %1854 = vmatprep.subr.bf16.mxu0 0
    %1855 = vmatpush1.bf16.msra.mxu0 0
    %1856 = vmatprep.subr.bf16.mxu0 0
    %1857 = vmatpush1.bf16.msra.mxu0 0
    %1858 = vmatprep.mubr.bf16.mxu0 0
    %1859 = vmatmul.mubr.bf16.gmra.mrb[0].mxu0 %v1824
    %v1860 = vpop.f32.mrb[0].mxu0
    %v1861 = vadd.f32 0.0, %v1860
    %v1862 = vpop.f32.mrb[0].mxu0
    %v1863 = vpop.f32.mrb[0].mxu0
    %v1864 = vpop.f32.mrb[0].mxu0
    %1865 = vdwg.mxu0
    %v1874 = vunpack.c.l.b16 %v1736
    %v1875 = vunpack.c.l.b16 %v1737
    %v1876 = vunpack.c.l.b16 %v1738
    %v1877 = vunpack.c.l.b16 %v1739
    %v1878 = vunpack.c.l.b16 %v1740
    %v1879 = vunpack.c.l.b16 %v1741
    %v1880 = vunpack.c.l.b16 %v1742
    %v1881 = vunpack.c.l.b16 %v1743
    %v1882 = vpack.c.b16 %v1875, %v1874
    %v1883 = vpack.c.b16 %v1877, %v1876
    %v1884 = vpack.c.b16 %v1879, %v1878
    %v1885 = vpack.c.b16 %v1881, %v1880
    %v1891 = vsel %vm233, %v1735, 0
    %1893 = vmatprep.subr.bf16.mxu0 0
    %1894 = vmatpush1.bf16.msra.mxu0 %v1882
    %1895 = vmatprep.subr.bf16.mxu0 0
    %1896 = vmatpush1.bf16.msra.mxu0 %v1883
    %1897 = vmatprep.subr.bf16.mxu0 0
    %1898 = vmatpush1.bf16.msra.mxu0 %v1884
    %1899 = vmatprep.subr.bf16.mxu0 0
    %1900 = vmatpush1.bf16.msra.mxu0 %v1885
    %1901 = vmatprep.subr.bf16.mxu0 0
    %1902 = vmatpush1.bf16.msra.mxu0 0
    %1903 = vmatprep.subr.bf16.mxu0 0
    %1904 = vmatpush1.bf16.msra.mxu0 0
    %1905 = vmatprep.subr.bf16.mxu0 0
    %1906 = vmatpush1.bf16.msra.mxu0 0
    %1907 = vmatprep.subr.bf16.mxu0 0
    %1908 = vmatpush1.bf16.msra.mxu0 0
    %1909 = vmatprep.subr.bf16.mxu0 0
    %1910 = vmatpush1.bf16.msra.mxu0 0
    %1911 = vmatprep.subr.bf16.mxu0 0
    %1912 = vmatpush1.bf16.msra.mxu0 0
    %1913 = vmatprep.subr.bf16.mxu0 0
    %1914 = vmatpush1.bf16.msra.mxu0 0
    %1915 = vmatprep.subr.bf16.mxu0 0
    %1916 = vmatpush1.bf16.msra.mxu0 0
    %1917 = vmatprep.subr.bf16.mxu0 0
    %1918 = vmatpush1.bf16.msra.mxu0 0
    %1919 = vmatprep.subr.bf16.mxu0 0
    %1920 = vmatpush1.bf16.msra.mxu0 0
    %1921 = vmatprep.subr.bf16.mxu0 0
    %1922 = vmatpush1.bf16.msra.mxu0 0
    %1923 = vmatprep.subr.bf16.mxu0 0
    %1924 = vmatpush1.bf16.msra.mxu0 0
    %1925 = vmatprep.mubr.bf16.mxu0 0
    %1926 = vmatmul.mubr.bf16.gmra.mrb[0].mxu0 %v1891
    %v1927 = vpop.f32.mrb[0].mxu0
    %v1928 = vadd.f32 %v1861, %v1927
    %v1929 = vpop.f32.mrb[0].mxu0
    %v1930 = vpop.f32.mrb[0].mxu0
    %v1931 = vpop.f32.mrb[0].mxu0
    %1932 = vdwg.mxu0
    %s1933 = scalar_lea.vmem %s11, 4
    %v1934 = vld [vmem:[%s1933] sm:$0x3]
    %v1936 = vsel %vm570, %v1934, 0
    %1938 = vmatprep.subr.bf16.mxu0 0
    %1939 = vmatpush1.bf16.msra.mxu0 %v1693
    %1940 = vmatprep.subr.bf16.mxu0 0
    %1941 = vmatpush1.bf16.msra.mxu0 0
    %1942 = vmatprep.subr.bf16.mxu0 0
    %1943 = vmatpush1.bf16.msra.mxu0 0
    %1944 = vmatprep.subr.bf16.mxu0 0
    %1945 = vmatpush1.bf16.msra.mxu0 0
    %1946 = vmatprep.subr.bf16.mxu0 0
    %1947 = vmatpush1.bf16.msra.mxu0 0
    %1948 = vmatprep.subr.bf16.mxu0 0
    %1949 = vmatpush1.bf16.msra.mxu0 0
    %1950 = vmatprep.subr.bf16.mxu0 0
    %1951 = vmatpush1.bf16.msra.mxu0 0
    %1952 = vmatprep.subr.bf16.mxu0 0
    %1953 = vmatpush1.bf16.msra.mxu0 0
    %1954 = vmatprep.subr.bf16.mxu0 0
    %1955 = vmatpush1.bf16.msra.mxu0 0
    %1956 = vmatprep.subr.bf16.mxu0 0
    %1957 = vmatpush1.bf16.msra.mxu0 0
    %1958 = vmatprep.subr.bf16.mxu0 0
    %1959 = vmatpush1.bf16.msra.mxu0 0
    %1960 = vmatprep.subr.bf16.mxu0 0
    %1961 = vmatpush1.bf16.msra.mxu0 0
    %1962 = vmatprep.subr.bf16.mxu0 0
    %1963 = vmatpush1.bf16.msra.mxu0 0
    %1964 = vmatprep.subr.bf16.mxu0 0
    %1965 = vmatpush1.bf16.msra.mxu0 0
    %1966 = vmatprep.subr.bf16.mxu0 0
    %1967 = vmatpush1.bf16.msra.mxu0 0
    %1968 = vmatprep.subr.bf16.mxu0 0
    %1969 = vmatpush1.bf16.msra.mxu0 0
    %1970 = vmatprep.mubr.bf16.mxu0 0
    %1971 = vmatmul.mubr.bf16.gmra.mrb[0].mxu0 %v1936
    %v1972 = vpop.f32.mrb[0].mxu0
    %v1973 = vadd.f32 0.0, %v1972
    %v1974 = vpop.f32.mrb[0].mxu0
    %v1975 = vpop.f32.mrb[0].mxu0
    %v1976 = vpop.f32.mrb[0].mxu0
    %1977 = vdwg.mxu0
    %v1978 = vpack.c.bf16 %v1973, %v1973
    %s1979 = scalar_lea.vmem %s12, 64
    %v1980 = vld [vmem:[%s1979] sm:$0xf]
    %v1981 = vld [vmem:[%s1979 + $0x4] sm:$0xf]
    %v1982 = vld [vmem:[%s1979 + $0x8] sm:$0xf]
    %v1983 = vld [vmem:[%s1979 + $0xc] sm:$0xf]
    %v1984 = vld [vmem:[%s1979 + $0x10] sm:$0xf]
    %v1985 = vld [vmem:[%s1979 + $0x14] sm:$0xf]
    %v1986 = vld [vmem:[%s1979 + $0x18] sm:$0xf]
    %v1987 = vld [vmem:[%s1979 + $0x1c] sm:$0xf]
    %v1996 = vunpack.c.l.b16 %v1980
    %v1997 = vunpack.c.l.b16 %v1981
    %v1998 = vunpack.c.l.b16 %v1982
    %v1999 = vunpack.c.l.b16 %v1983
    %v2000 = vunpack.c.l.b16 %v1984
    %v2001 = vunpack.c.l.b16 %v1985
    %v2002 = vunpack.c.l.b16 %v1986
    %v2003 = vunpack.c.l.b16 %v1987
    %v2004 = vpack.c.b16 %v1997, %v1996
    %v2005 = vpack.c.b16 %v1999, %v1998
    %v2006 = vpack.c.b16 %v2001, %v2000
    %v2007 = vpack.c.b16 %v2003, %v2002
    %v2013 = vsel %vm233, %v1978, 0
    %2015 = vmatprep.subr.bf16.mxu0 0
    %2016 = vmatpush1.bf16.msra.mxu0 %v2004
    %2017 = vmatprep.subr.bf16.mxu0 0
    %2018 = vmatpush1.bf16.msra.mxu0 %v2005
    %2019 = vmatprep.subr.bf16.mxu0 0
    %2020 = vmatpush1.bf16.msra.mxu0 %v2006
    %2021 = vmatprep.subr.bf16.mxu0 0
    %2022 = vmatpush1.bf16.msra.mxu0 %v2007
    %2023 = vmatprep.subr.bf16.mxu0 0
    %2024 = vmatpush1.bf16.msra.mxu0 0
    %2025 = vmatprep.subr.bf16.mxu0 0
    %2026 = vmatpush1.bf16.msra.mxu0 0
    %2027 = vmatprep.subr.bf16.mxu0 0
    %2028 = vmatpush1.bf16.msra.mxu0 0
    %2029 = vmatprep.subr.bf16.mxu0 0
    %2030 = vmatpush1.bf16.msra.mxu0 0
    %2031 = vmatprep.subr.bf16.mxu0 0
    %2032 = vmatpush1.bf16.msra.mxu0 0
    %2033 = vmatprep.subr.bf16.mxu0 0
    %2034 = vmatpush1.bf16.msra.mxu0 0
    %2035 = vmatprep.subr.bf16.mxu0 0
    %2036 = vmatpush1.bf16.msra.mxu0 0
    %2037 = vmatprep.subr.bf16.mxu0 0
    %2038 = vmatpush1.bf16.msra.mxu0 0
    %2039 = vmatprep.subr.bf16.mxu0 0
    %2040 = vmatpush1.bf16.msra.mxu0 0
    %2041 = vmatprep.subr.bf16.mxu0 0
    %2042 = vmatpush1.bf16.msra.mxu0 0
    %2043 = vmatprep.subr.bf16.mxu0 0
    %2044 = vmatpush1.bf16.msra.mxu0 0
    %2045 = vmatprep.subr.bf16.mxu0 0
    %2046 = vmatpush1.bf16.msra.mxu0 0
    %2047 = vmatprep.mubr.bf16.mxu0 0
    %2048 = vmatmul.mubr.bf16.gmra.mrb[0].mxu0 %v2013
    %v2049 = vpop.f32.mrb[0].mxu0
    %v2050 = vadd.f32 0.0, %v2049
    %v2051 = vpop.f32.mrb[0].mxu0
    %v2052 = vpop.f32.mrb[0].mxu0
    %v2053 = vpop.f32.mrb[0].mxu0
    %2054 = vdwg.mxu0
    %v2055 = vadd.f32 %v1928, %v2050
    %v2056 = vld [vmem:[%s13] sm:$0xff]
    %v2057 = vld [vmem:[%s13 + $0x8] sm:$0xff]
    %v2058 = vld [vmem:[%s13 + $0x10] sm:$0xff]
    %v2059 = vld [vmem:[%s13 + $0x18] sm:$0xff]
    %v2060 = vld [vmem:[%s13 + $0x20] sm:$0xff]
    %v2061 = vld [vmem:[%s13 + $0x28] sm:$0xff]
    %v2062 = vld [vmem:[%s13 + $0x30] sm:$0xff]
    %v2063 = vld [vmem:[%s13 + $0x38] sm:$0xff]
    %v2064 = vld [vmem:[%s14] sm:$0xff]
    %v2065 = vld [vmem:[%s14 + $0x8] sm:$0xff]
    %v2066 = vld [vmem:[%s14 + $0x10] sm:$0xff]
    %v2067 = vld [vmem:[%s14 + $0x18] sm:$0xff]
    %vm2068 = vcmask 519168
    %v2069 = vsel %vm2068, %v2055, 0.0
    %v2070 = vrot.slane %v2069, 4
    %v2071 = vadd.f32 %v2069, %v2070
    %v2072 = vrot.slane %v2071, 2
    %v2073 = vadd.f32 %v2071, %v2072
    %v2074 = vrot.slane %v2073, 1
    %v2075 = vadd.f32 %v2073, %v2074
    %v2077 = vsel %vm233, %v2075, 0
    %2079 = vmatprep.subr.mxu0 0.0
    %2080 = vmatpush1.msra.mxu0 %v2056
    %2081 = vmatprep.subr.mxu0 0.0
    %2082 = vmatpush1.msra.mxu0 %v2057
    %2083 = vmatprep.subr.mxu0 0.0
    %2084 = vmatpush1.msra.mxu0 %v2058
    %2085 = vmatprep.subr.mxu0 0.0
    %2086 = vmatpush1.msra.mxu0 %v2059
    %2087 = vmatprep.subr.mxu0 0.0
    %2088 = vmatpush1.msra.mxu0 %v2060
    %2089 = vmatprep.subr.mxu0 0.0
    %2090 = vmatpush1.msra.mxu0 %v2061
    %2091 = vmatprep.subr.mxu0 0.0
    %2092 = vmatpush1.msra.mxu0 %v2062
    %2093 = vmatprep.subr.mxu0 0.0
    %2094 = vmatpush1.msra.mxu0 %v2063
    %2095 = vmatprep.subr.mxu0 0.0
    %2096 = vmatpush1.msra.mxu0 0.0
    %2097 = vmatprep.subr.mxu0 0.0
    %2098 = vmatpush1.msra.mxu0 0.0
    %2099 = vmatprep.subr.mxu0 0.0
    %2100 = vmatpush1.msra.mxu0 0.0
    %2101 = vmatprep.subr.mxu0 0.0
    %2102 = vmatpush1.msra.mxu0 0.0
    %2103 = vmatprep.subr.mxu0 0.0
    %2104 = vmatpush1.msra.mxu0 0.0
    %2105 = vmatprep.subr.mxu0 0.0
    %2106 = vmatpush1.msra.mxu0 0.0
    %2107 = vmatprep.subr.mxu0 0.0
    %2108 = vmatpush1.msra.mxu0 0.0
    %2109 = vmatprep.subr.mxu0 0.0
    %2110 = vmatpush1.msra.mxu0 0.0
    %2111 = vmatprep.subr.mxu0 0.0
    %2112 = vmatpush1.msra.mxu0 0.0
    %2113 = vmatprep.subr.mxu0 0.0
    %2114 = vmatpush1.msra.mxu0 0.0
    %2115 = vmatprep.subr.mxu0 0.0
    %2116 = vmatpush1.msra.mxu0 0.0
    %2117 = vmatprep.subr.mxu0 0.0
    %2118 = vmatpush1.msra.mxu0 0.0
    %2119 = vmatprep.subr.mxu0 0.0
    %2120 = vmatpush1.msra.mxu0 0.0
    %2121 = vmatprep.subr.mxu0 0.0
    %2122 = vmatpush1.msra.mxu0 0.0
    %2123 = vmatprep.subr.mxu0 0.0
    %2124 = vmatpush1.msra.mxu0 0.0
    %2125 = vmatprep.subr.mxu0 0.0
    %2126 = vmatpush1.msra.mxu0 0.0
    %2127 = vmatprep.subr.mxu0 0.0
    %2128 = vmatpush1.msra.mxu0 0.0
    %2129 = vmatprep.subr.mxu0 0.0
    %2130 = vmatpush1.msra.mxu0 0.0
    %2131 = vmatprep.subr.mxu0 0.0
    %2132 = vmatpush1.msra.mxu0 0.0
    %2133 = vmatprep.subr.mxu0 0.0
    %2134 = vmatpush1.msra.mxu0 0.0
    %2135 = vmatprep.subr.mxu0 0.0
    %2136 = vmatpush1.msra.mxu0 0.0
    %2137 = vmatprep.subr.mxu0 0.0
    %2138 = vmatpush1.msra.mxu0 0.0
    %2139 = vmatprep.subr.mxu0 0.0
    %2140 = vmatpush1.msra.mxu0 0.0
    %2141 = vmatprep.subr.mxu0 0.0
    %2142 = vmatpush1.msra.mxu0 0.0
    %2143 = vmatprep.mubr.f32.mxu0 0.0
    %2144 = vmatmul.mubr.f32.gmra.mrb[0].mxu0 %v2077
    %v2145 = vpop.f32.mrb[0].mxu0
    %v2146 = vadd.f32 0.0, %v2145
    %v2147 = vpop.f32.mrb[0].mxu0
    %2148 = vdwg.mxu0
    %v2149 = vmul.f32 %v2146, 0.125
    %v2151 = vsel %vm93, %v2149, 0
    %2153 = vmatprep.subr.mxu0 0.0
    %2154 = vmatpush1.msra.mxu0 %v2064
    %2155 = vmatprep.subr.mxu0 0.0
    %2156 = vmatpush1.msra.mxu0 %v2065
    %2157 = vmatprep.subr.mxu0 0.0
    %2158 = vmatpush1.msra.mxu0 %v2066
    %2159 = vmatprep.subr.mxu0 0.0
    %2160 = vmatpush1.msra.mxu0 %v2067
    %2161 = vmatprep.subr.mxu0 0.0
    %2162 = vmatpush1.msra.mxu0 0.0
    %2163 = vmatprep.subr.mxu0 0.0
    %2164 = vmatpush1.msra.mxu0 0.0
    %2165 = vmatprep.subr.mxu0 0.0
    %2166 = vmatpush1.msra.mxu0 0.0
    %2167 = vmatprep.subr.mxu0 0.0
    %2168 = vmatpush1.msra.mxu0 0.0
    %2169 = vmatprep.subr.mxu0 0.0
    %2170 = vmatpush1.msra.mxu0 0.0
    %2171 = vmatprep.subr.mxu0 0.0
    %2172 = vmatpush1.msra.mxu0 0.0
    %2173 = vmatprep.subr.mxu0 0.0
    %2174 = vmatpush1.msra.mxu0 0.0
    %2175 = vmatprep.subr.mxu0 0.0
    %2176 = vmatpush1.msra.mxu0 0.0
    %2177 = vmatprep.subr.mxu0 0.0
    %2178 = vmatpush1.msra.mxu0 0.0
    %2179 = vmatprep.subr.mxu0 0.0
    %2180 = vmatpush1.msra.mxu0 0.0
    %2181 = vmatprep.subr.mxu0 0.0
    %2182 = vmatpush1.msra.mxu0 0.0
    %2183 = vmatprep.subr.mxu0 0.0
    %2184 = vmatpush1.msra.mxu0 0.0
    %2185 = vmatprep.subr.mxu0 0.0
    %2186 = vmatpush1.msra.mxu0 0.0
    %2187 = vmatprep.subr.mxu0 0.0
    %2188 = vmatpush1.msra.mxu0 0.0
    %2189 = vmatprep.subr.mxu0 0.0
    %2190 = vmatpush1.msra.mxu0 0.0
    %2191 = vmatprep.subr.mxu0 0.0
    %2192 = vmatpush1.msra.mxu0 0.0
    %2193 = vmatprep.subr.mxu0 0.0
    %2194 = vmatpush1.msra.mxu0 0.0
    %2195 = vmatprep.subr.mxu0 0.0
    %2196 = vmatpush1.msra.mxu0 0.0
    %2197 = vmatprep.subr.mxu0 0.0
    %2198 = vmatpush1.msra.mxu0 0.0
    %2199 = vmatprep.subr.mxu0 0.0
    %2200 = vmatpush1.msra.mxu0 0.0
    %2201 = vmatprep.subr.mxu0 0.0
    %2202 = vmatpush1.msra.mxu0 0.0
    %2203 = vmatprep.subr.mxu0 0.0
    %2204 = vmatpush1.msra.mxu0 0.0
    %2205 = vmatprep.subr.mxu0 0.0
    %2206 = vmatpush1.msra.mxu0 0.0
    %2207 = vmatprep.subr.mxu0 0.0
    %2208 = vmatpush1.msra.mxu0 0.0
    %2209 = vmatprep.subr.mxu0 0.0
    %2210 = vmatpush1.msra.mxu0 0.0
    %2211 = vmatprep.subr.mxu0 0.0
    %2212 = vmatpush1.msra.mxu0 0.0
    %2213 = vmatprep.subr.mxu0 0.0
    %2214 = vmatpush1.msra.mxu0 0.0
    %2215 = vmatprep.subr.mxu0 0.0
    %2216 = vmatpush1.msra.mxu0 0.0
    %2217 = vmatprep.mubr.f32.mxu0 0.0
    %2218 = vmatmul.mubr.f32.gmra.mrb[0].mxu0 %v2151
    %v2219 = vpop.f32.mrb[0].mxu0
    %v2220 = vadd.f32 0.0, %v2219
    %v2221 = vpop.f32.mrb[0].mxu0
    %2222 = vdwg.mxu0
    %v2223 = vlaneseq
    %v2224 = vshrl.u32 %v2223, 7
    %v2225 = vsub.s32 0, %v2224
    %v2226 = vrot.slane %v2220, %v2225
    %v2227 = vsub.f32 %v2055, %v2226
    %v2228 = vmul.f32 %v2227, %v2227
    %v2229 = vsel %vm2068, %v2228, 0.0
    %v2230 = vrot.slane %v2229, 4
    %v2231 = vadd.f32 %v2229, %v2230
    %v2232 = vrot.slane %v2231, 2
    %v2233 = vadd.f32 %v2231, %v2232
    %v2234 = vrot.slane %v2233, 1
    %v2235 = vadd.f32 %v2233, %v2234
    %v2237 = vsel %vm233, %v2235, 0
    %2239 = vmatprep.subr.mxu0 0.0
    %2240 = vmatpush1.msra.mxu0 %v2056
    %2241 = vmatprep.subr.mxu0 0.0
    %2242 = vmatpush1.msra.mxu0 %v2057
    %2243 = vmatprep.subr.mxu0 0.0
    %2244 = vmatpush1.msra.mxu0 %v2058
    %2245 = vmatprep.subr.mxu0 0.0
    %2246 = vmatpush1.msra.mxu0 %v2059
    %2247 = vmatprep.subr.mxu0 0.0
    %2248 = vmatpush1.msra.mxu0 %v2060
    %2249 = vmatprep.subr.mxu0 0.0
    %2250 = vmatpush1.msra.mxu0 %v2061
    %2251 = vmatprep.subr.mxu0 0.0
    %2252 = vmatpush1.msra.mxu0 %v2062
    %2253 = vmatprep.subr.mxu0 0.0
    %2254 = vmatpush1.msra.mxu0 %v2063
    %2255 = vmatprep.subr.mxu0 0.0
    %2256 = vmatpush1.msra.mxu0 0.0
    %2257 = vmatprep.subr.mxu0 0.0
    %2258 = vmatpush1.msra.mxu0 0.0
    %2259 = vmatprep.subr.mxu0 0.0
    %2260 = vmatpush1.msra.mxu0 0.0
    %2261 = vmatprep.subr.mxu0 0.0
    %2262 = vmatpush1.msra.mxu0 0.0
    %2263 = vmatprep.subr.mxu0 0.0
    %2264 = vmatpush1.msra.mxu0 0.0
    %2265 = vmatprep.subr.mxu0 0.0
    %2266 = vmatpush1.msra.mxu0 0.0
    %2267 = vmatprep.subr.mxu0 0.0
    %2268 = vmatpush1.msra.mxu0 0.0
    %2269 = vmatprep.subr.mxu0 0.0
    %2270 = vmatpush1.msra.mxu0 0.0
    %2271 = vmatprep.subr.mxu0 0.0
    %2272 = vmatpush1.msra.mxu0 0.0
    %2273 = vmatprep.subr.mxu0 0.0
    %2274 = vmatpush1.msra.mxu0 0.0
    %2275 = vmatprep.subr.mxu0 0.0
    %2276 = vmatpush1.msra.mxu0 0.0
    %2277 = vmatprep.subr.mxu0 0.0
    %2278 = vmatpush1.msra.mxu0 0.0
    %2279 = vmatprep.subr.mxu0 0.0
    %2280 = vmatpush1.msra.mxu0 0.0
    %2281 = vmatprep.subr.mxu0 0.0
    %2282 = vmatpush1.msra.mxu0 0.0
    %2283 = vmatprep.subr.mxu0 0.0
    %2284 = vmatpush1.msra.mxu0 0.0
    %2285 = vmatprep.subr.mxu0 0.0
    %2286 = vmatpush1.msra.mxu0 0.0
    %2287 = vmatprep.subr.mxu0 0.0
    %2288 = vmatpush1.msra.mxu0 0.0
    %2289 = vmatprep.subr.mxu0 0.0
    %2290 = vmatpush1.msra.mxu0 0.0
    %2291 = vmatprep.subr.mxu0 0.0
    %2292 = vmatpush1.msra.mxu0 0.0
    %2293 = vmatprep.subr.mxu0 0.0
    %2294 = vmatpush1.msra.mxu0 0.0
    %2295 = vmatprep.subr.mxu0 0.0
    %2296 = vmatpush1.msra.mxu0 0.0
    %2297 = vmatprep.subr.mxu0 0.0
    %2298 = vmatpush1.msra.mxu0 0.0
    %2299 = vmatprep.subr.mxu0 0.0
    %2300 = vmatpush1.msra.mxu0 0.0
    %2301 = vmatprep.subr.mxu0 0.0
    %2302 = vmatpush1.msra.mxu0 0.0
    %2303 = vmatprep.mubr.f32.mxu0 0.0
    %2304 = vmatmul.mubr.f32.gmra.mrb[0].mxu0 %v2237
    %v2305 = vpop.f32.mrb[0].mxu0
    %v2306 = vadd.f32 0.0, %v2305
    %v2307 = vpop.f32.mrb[0].mxu0
    %2308 = vdwg.mxu0
    %v2309 = vmul.f32 %v2306, 0.125
    %v2310 = vld [vmem:[%s15] sm:$0x1]
    %v2311 = vadd.f32 %v2309, 1e-05
    %v2312 = vrsqrt.pop %v2311
    %v2313 = vmul.f32 %v2310, %v2312
    %v2315 = vsel %vm93, %v2313, 0
    %2317 = vmatprep.subr.mxu0 0.0
    %2318 = vmatpush1.msra.mxu0 %v2064
    %2319 = vmatprep.subr.mxu0 0.0
    %2320 = vmatpush1.msra.mxu0 %v2065
    %2321 = vmatprep.subr.mxu0 0.0
    %2322 = vmatpush1.msra.mxu0 %v2066
    %2323 = vmatprep.subr.mxu0 0.0
    %2324 = vmatpush1.msra.mxu0 %v2067
    %2325 = vmatprep.subr.mxu0 0.0
    %2326 = vmatpush1.msra.mxu0 0.0
    %2327 = vmatprep.subr.mxu0 0.0
    %2328 = vmatpush1.msra.mxu0 0.0
    %2329 = vmatprep.subr.mxu0 0.0
    %2330 = vmatpush1.msra.mxu0 0.0
    %2331 = vmatprep.subr.mxu0 0.0
    %2332 = vmatpush1.msra.mxu0 0.0
    %2333 = vmatprep.subr.mxu0 0.0
    %2334 = vmatpush1.msra.mxu0 0.0
    %2335 = vmatprep.subr.mxu0 0.0
    %2336 = vmatpush1.msra.mxu0 0.0
    %2337 = vmatprep.subr.mxu0 0.0
    %2338 = vmatpush1.msra.mxu0 0.0
    %2339 = vmatprep.subr.mxu0 0.0
    %2340 = vmatpush1.msra.mxu0 0.0
    %2341 = vmatprep.subr.mxu0 0.0
    %2342 = vmatpush1.msra.mxu0 0.0
    %2343 = vmatprep.subr.mxu0 0.0
    %2344 = vmatpush1.msra.mxu0 0.0
    %2345 = vmatprep.subr.mxu0 0.0
    %2346 = vmatpush1.msra.mxu0 0.0
    %2347 = vmatprep.subr.mxu0 0.0
    %2348 = vmatpush1.msra.mxu0 0.0
    %2349 = vmatprep.subr.mxu0 0.0
    %2350 = vmatpush1.msra.mxu0 0.0
    %2351 = vmatprep.subr.mxu0 0.0
    %2352 = vmatpush1.msra.mxu0 0.0
    %2353 = vmatprep.subr.mxu0 0.0
    %2354 = vmatpush1.msra.mxu0 0.0
    %2355 = vmatprep.subr.mxu0 0.0
    %2356 = vmatpush1.msra.mxu0 0.0
    %2357 = vmatprep.subr.mxu0 0.0
    %2358 = vmatpush1.msra.mxu0 0.0
    %2359 = vmatprep.subr.mxu0 0.0
    %2360 = vmatpush1.msra.mxu0 0.0
    %2361 = vmatprep.subr.mxu0 0.0
    %2362 = vmatpush1.msra.mxu0 0.0
    %2363 = vmatprep.subr.mxu0 0.0
    %2364 = vmatpush1.msra.mxu0 0.0
    %2365 = vmatprep.subr.mxu0 0.0
    %2366 = vmatpush1.msra.mxu0 0.0
    %2367 = vmatprep.subr.mxu0 0.0
    %2368 = vmatpush1.msra.mxu0 0.0
    %2369 = vmatprep.subr.mxu0 0.0
    %2370 = vmatpush1.msra.mxu0 0.0
    %2371 = vmatprep.subr.mxu0 0.0
    %2372 = vmatpush1.msra.mxu0 0.0
    %2373 = vmatprep.subr.mxu0 0.0
    %2374 = vmatpush1.msra.mxu0 0.0
    %2375 = vmatprep.subr.mxu0 0.0
    %2376 = vmatpush1.msra.mxu0 0.0
    %2377 = vmatprep.subr.mxu0 0.0
    %2378 = vmatpush1.msra.mxu0 0.0
    %2379 = vmatprep.subr.mxu0 0.0
    %2380 = vmatpush1.msra.mxu0 0.0
    %2381 = vmatprep.mubr.f32.mxu0 0.0
    %2382 = vmatmul.mubr.f32.gmra.mrb[0].mxu0 %v2315
    %v2383 = vpop.f32.mrb[0].mxu0
    %v2384 = vadd.f32 0.0, %v2383
    %v2385 = vpop.f32.mrb[0].mxu0
    %2386 = vdwg.mxu0
    %v2387 = vlaneseq
    %v2388 = vshrl.u32 %v2387, 7
    %v2389 = vsub.s32 0, %v2388
    %v2390 = vrot.slane %v2384, %v2389
    %v2391 = vmul.f32 %v2227, %v2390
    %v2392 = vld [vmem:[%s15 + $0x1] sm:$0x1]
    %v2394 = vsel %vm93, %v2392, 0
    %2396 = vmatprep.subr.mxu0 0.0
    %2397 = vmatpush1.msra.mxu0 %v2064
    %2398 = vmatprep.subr.mxu0 0.0
    %2399 = vmatpush1.msra.mxu0 %v2065
    %2400 = vmatprep.subr.mxu0 0.0
    %2401 = vmatpush1.msra.mxu0 %v2066
    %2402 = vmatprep.subr.mxu0 0.0
    %2403 = vmatpush1.msra.mxu0 %v2067
    %2404 = vmatprep.subr.mxu0 0.0
    %2405 = vmatpush1.msra.mxu0 0.0
    %2406 = vmatprep.subr.mxu0 0.0
    %2407 = vmatpush1.msra.mxu0 0.0
    %2408 = vmatprep.subr.mxu0 0.0
    %2409 = vmatpush1.msra.mxu0 0.0
    %2410 = vmatprep.subr.mxu0 0.0
    %2411 = vmatpush1.msra.mxu0 0.0
    %2412 = vmatprep.subr.mxu0 0.0
    %2413 = vmatpush1.msra.mxu0 0.0
    %2414 = vmatprep.subr.mxu0 0.0
    %2415 = vmatpush1.msra.mxu0 0.0
    %2416 = vmatprep.subr.mxu0 0.0
    %2417 = vmatpush1.msra.mxu0 0.0
    %2418 = vmatprep.subr.mxu0 0.0
    %2419 = vmatpush1.msra.mxu0 0.0
    %2420 = vmatprep.subr.mxu0 0.0
    %2421 = vmatpush1.msra.mxu0 0.0
    %2422 = vmatprep.subr.mxu0 0.0
    %2423 = vmatpush1.msra.mxu0 0.0
    %2424 = vmatprep.subr.mxu0 0.0
    %2425 = vmatpush1.msra.mxu0 0.0
    %2426 = vmatprep.subr.mxu0 0.0
    %2427 = vmatpush1.msra.mxu0 0.0
    %2428 = vmatprep.subr.mxu0 0.0
    %2429 = vmatpush1.msra.mxu0 0.0
    %2430 = vmatprep.subr.mxu0 0.0
    %2431 = vmatpush1.msra.mxu0 0.0
    %2432 = vmatprep.subr.mxu0 0.0
    %2433 = vmatpush1.msra.mxu0 0.0
    %2434 = vmatprep.subr.mxu0 0.0
    %2435 = vmatpush1.msra.mxu0 0.0
    %2436 = vmatprep.subr.mxu0 0.0
    %2437 = vmatpush1.msra.mxu0 0.0
    %2438 = vmatprep.subr.mxu0 0.0
    %2439 = vmatpush1.msra.mxu0 0.0
    %2440 = vmatprep.subr.mxu0 0.0
    %2441 = vmatpush1.msra.mxu0 0.0
    %2442 = vmatprep.subr.mxu0 0.0
    %2443 = vmatpush1.msra.mxu0 0.0
    %2444 = vmatprep.subr.mxu0 0.0
    %2445 = vmatpush1.msra.mxu0 0.0
    %2446 = vmatprep.subr.mxu0 0.0
    %2447 = vmatpush1.msra.mxu0 0.0
    %2448 = vmatprep.subr.mxu0 0.0
    %2449 = vmatpush1.msra.mxu0 0.0
    %2450 = vmatprep.subr.mxu0 0.0
    %2451 = vmatpush1.msra.mxu0 0.0
    %2452 = vmatprep.subr.mxu0 0.0
    %2453 = vmatpush1.msra.mxu0 0.0
    %2454 = vmatprep.subr.mxu0 0.0
    %2455 = vmatpush1.msra.mxu0 0.0
    %2456 = vmatprep.subr.mxu0 0.0
    %2457 = vmatpush1.msra.mxu0 0.0
    %2458 = vmatprep.subr.mxu0 0.0
    %2459 = vmatpush1.msra.mxu0 0.0
    %2460 = vmatprep.mubr.f32.mxu0 0.0
    %2461 = vmatmul.mubr.f32.gmra.mrb[0].mxu0 %v2394
    %v2462 = vpop.f32.mrb[0].mxu0
    %v2463 = vadd.f32 0.0, %v2462
    %v2464 = vpop.f32.mrb[0].mxu0
    %2465 = vdwg.mxu0
    %v2466 = vlaneseq
    %v2467 = vshrl.u32 %v2466, 7
    %v2468 = vsub.s32 0, %v2467
    %v2469 = vrot.slane %v2463, %v2468
    %v2470 = vadd.f32 %v2391, %v2469
    %vm2471 = vcmp.ge.f32.partialorder %v2470, 0.0
    %v2472 = vmul.f32 %v2470, 0.01
    %v2473 = vsel %vm2471, %v2470, %v2472
    %v2474 = vld [vmem:[%s16] sm:$0x3]
    %vm2475 = vcmask 31744
    %v2477 = vsel %vm2475, %v2474, 0
    %v2480 = vsel %vm1691, %v2473, 0
    %2482 = vmatprep.subr.mxu0 0.0
    %2483 = vmatpush1.msra.mxu0 %v2480
    %2484 = vmatprep.subr.mxu0 0.0
    %2485 = vmatpush1.msra.mxu0 0.0
    %2486 = vmatprep.subr.mxu0 0.0
    %2487 = vmatpush1.msra.mxu0 0.0
    %2488 = vmatprep.subr.mxu0 0.0
    %2489 = vmatpush1.msra.mxu0 0.0
    %2490 = vmatprep.subr.mxu0 0.0
    %2491 = vmatpush1.msra.mxu0 0.0
    %2492 = vmatprep.subr.mxu0 0.0
    %2493 = vmatpush1.msra.mxu0 0.0
    %2494 = vmatprep.subr.mxu0 0.0
    %2495 = vmatpush1.msra.mxu0 0.0
    %2496 = vmatprep.subr.mxu0 0.0
    %2497 = vmatpush1.msra.mxu0 0.0
    %2498 = vmatprep.subr.mxu0 0.0
    %2499 = vmatpush1.msra.mxu0 0.0
    %2500 = vmatprep.subr.mxu0 0.0
    %2501 = vmatpush1.msra.mxu0 0.0
    %2502 = vmatprep.subr.mxu0 0.0
    %2503 = vmatpush1.msra.mxu0 0.0
    %2504 = vmatprep.subr.mxu0 0.0
    %2505 = vmatpush1.msra.mxu0 0.0
    %2506 = vmatprep.subr.mxu0 0.0
    %2507 = vmatpush1.msra.mxu0 0.0
    %2508 = vmatprep.subr.mxu0 0.0
    %2509 = vmatpush1.msra.mxu0 0.0
    %2510 = vmatprep.subr.mxu0 0.0
    %2511 = vmatpush1.msra.mxu0 0.0
    %2512 = vmatprep.subr.mxu0 0.0
    %2513 = vmatpush1.msra.mxu0 0.0
    %2514 = vmatprep.subr.mxu0 0.0
    %2515 = vmatpush1.msra.mxu0 0.0
    %2516 = vmatprep.subr.mxu0 0.0
    %2517 = vmatpush1.msra.mxu0 0.0
    %2518 = vmatprep.subr.mxu0 0.0
    %2519 = vmatpush1.msra.mxu0 0.0
    %2520 = vmatprep.subr.mxu0 0.0
    %2521 = vmatpush1.msra.mxu0 0.0
    %2522 = vmatprep.subr.mxu0 0.0
    %2523 = vmatpush1.msra.mxu0 0.0
    %2524 = vmatprep.subr.mxu0 0.0
    %2525 = vmatpush1.msra.mxu0 0.0
    %2526 = vmatprep.subr.mxu0 0.0
    %2527 = vmatpush1.msra.mxu0 0.0
    %2528 = vmatprep.subr.mxu0 0.0
    %2529 = vmatpush1.msra.mxu0 0.0
    %2530 = vmatprep.subr.mxu0 0.0
    %2531 = vmatpush1.msra.mxu0 0.0
    %2532 = vmatprep.subr.mxu0 0.0
    %2533 = vmatpush1.msra.mxu0 0.0
    %2534 = vmatprep.subr.mxu0 0.0
    %2535 = vmatpush1.msra.mxu0 0.0
    %2536 = vmatprep.subr.mxu0 0.0
    %2537 = vmatpush1.msra.mxu0 0.0
    %2538 = vmatprep.subr.mxu0 0.0
    %2539 = vmatpush1.msra.mxu0 0.0
    %2540 = vmatprep.subr.mxu0 0.0
    %2541 = vmatpush1.msra.mxu0 0.0
    %2542 = vmatprep.subr.mxu0 0.0
    %2543 = vmatpush1.msra.mxu0 0.0
    %2544 = vmatprep.subr.mxu0 0.0
    %2545 = vmatpush1.msra.mxu0 0.0
    %2546 = vmatprep.mubr.f32.mxu0 0.0
    %2547 = vmatmul.mubr.f32.gmra.mrb[0].mxu0 %v2477
    %v2548 = vpop.f32.mrb[0].mxu0
    %v2549 = vadd.f32 0.0, %v2548
    %v2550 = vpop.f32.mrb[0].mxu0
    %2551 = vdwg.mxu0
    %v2552 = vld [vmem:[%s17] sm:$0xff]
    %v2553 = vld [vmem:[%s17 + $0x8] sm:$0xff]
    %v2554 = vld [vmem:[%s17 + $0x10] sm:$0xff]
    %v2555 = vld [vmem:[%s17 + $0x18] sm:$0xff]
    %v2556 = vld [vmem:[%s17 + $0x20] sm:$0xff]
    %v2557 = vld [vmem:[%s17 + $0x28] sm:$0xff]
    %v2558 = vld [vmem:[%s17 + $0x30] sm:$0xff]
    %v2559 = vld [vmem:[%s17 + $0x38] sm:$0xff]
    %s2560 = scalar_lea.vmem %s16, 2
    %v2561 = vld [vmem:[%s2560] sm:$0x3]
    %v2563 = vsel %vm2475, %v2561, 0
    %2565 = vmatprep.subr.mxu0 0.0
    %2566 = vmatpush1.msra.mxu0 %v2480
    %2567 = vmatprep.subr.mxu0 0.0
    %2568 = vmatpush1.msra.mxu0 0.0
    %2569 = vmatprep.subr.mxu0 0.0
    %2570 = vmatpush1.msra.mxu0 0.0
    %2571 = vmatprep.subr.mxu0 0.0
    %2572 = vmatpush1.msra.mxu0 0.0
    %2573 = vmatprep.subr.mxu0 0.0
    %2574 = vmatpush1.msra.mxu0 0.0
    %2575 = vmatprep.subr.mxu0 0.0
    %2576 = vmatpush1.msra.mxu0 0.0
    %2577 = vmatprep.subr.mxu0 0.0
    %2578 = vmatpush1.msra.mxu0 0.0
    %2579 = vmatprep.subr.mxu0 0.0
    %2580 = vmatpush1.msra.mxu0 0.0
    %2581 = vmatprep.subr.mxu0 0.0
    %2582 = vmatpush1.msra.mxu0 0.0
    %2583 = vmatprep.subr.mxu0 0.0
    %2584 = vmatpush1.msra.mxu0 0.0
    %2585 = vmatprep.subr.mxu0 0.0
    %2586 = vmatpush1.msra.mxu0 0.0
    %2587 = vmatprep.subr.mxu0 0.0
    %2588 = vmatpush1.msra.mxu0 0.0
    %2589 = vmatprep.subr.mxu0 0.0
    %2590 = vmatpush1.msra.mxu0 0.0
    %2591 = vmatprep.subr.mxu0 0.0
    %2592 = vmatpush1.msra.mxu0 0.0
    %2593 = vmatprep.subr.mxu0 0.0
    %2594 = vmatpush1.msra.mxu0 0.0
    %2595 = vmatprep.subr.mxu0 0.0
    %2596 = vmatpush1.msra.mxu0 0.0
    %2597 = vmatprep.subr.mxu0 0.0
    %2598 = vmatpush1.msra.mxu0 0.0
    %2599 = vmatprep.subr.mxu0 0.0
    %2600 = vmatpush1.msra.mxu0 0.0
    %2601 = vmatprep.subr.mxu0 0.0
    %2602 = vmatpush1.msra.mxu0 0.0
    %2603 = vmatprep.subr.mxu0 0.0
    %2604 = vmatpush1.msra.mxu0 0.0
    %2605 = vmatprep.subr.mxu0 0.0
    %2606 = vmatpush1.msra.mxu0 0.0
    %2607 = vmatprep.subr.mxu0 0.0
    %2608 = vmatpush1.msra.mxu0 0.0
    %2609 = vmatprep.subr.mxu0 0.0
    %2610 = vmatpush1.msra.mxu0 0.0
    %2611 = vmatprep.subr.mxu0 0.0
    %2612 = vmatpush1.msra.mxu0 0.0
    %2613 = vmatprep.subr.mxu0 0.0
    %2614 = vmatpush1.msra.mxu0 0.0
    %2615 = vmatprep.subr.mxu0 0.0
    %2616 = vmatpush1.msra.mxu0 0.0
    %2617 = vmatprep.subr.mxu0 0.0
    %2618 = vmatpush1.msra.mxu0 0.0
    %2619 = vmatprep.subr.mxu0 0.0
    %2620 = vmatpush1.msra.mxu0 0.0
    %2621 = vmatprep.subr.mxu0 0.0
    %2622 = vmatpush1.msra.mxu0 0.0
    %2623 = vmatprep.subr.mxu0 0.0
    %2624 = vmatpush1.msra.mxu0 0.0
    %2625 = vmatprep.subr.mxu0 0.0
    %2626 = vmatpush1.msra.mxu0 0.0
    %2627 = vmatprep.subr.mxu0 0.0
    %2628 = vmatpush1.msra.mxu0 0.0
    %2629 = vmatprep.mubr.f32.mxu0 0.0
    %2630 = vmatmul.mubr.f32.gmra.mrb[0].mxu0 %v2563
    %v2631 = vpop.f32.mrb[0].mxu0
    %v2632 = vadd.f32 0.0, %v2631
    %v2633 = vpop.f32.mrb[0].mxu0
    %2634 = vdwg.mxu0
    %s2635 = scalar_lea.vmem %s17, 64
    %v2636 = vld [vmem:[%s2635] sm:$0xff]
    %v2637 = vld [vmem:[%s2635 + $0x8] sm:$0xff]
    %v2638 = vld [vmem:[%s2635 + $0x10] sm:$0xff]
    %v2639 = vld [vmem:[%s2635 + $0x18] sm:$0xff]
    %v2640 = vld [vmem:[%s2635 + $0x20] sm:$0xff]
    %v2641 = vld [vmem:[%s2635 + $0x28] sm:$0xff]
    %v2642 = vld [vmem:[%s2635 + $0x30] sm:$0xff]
    %v2643 = vld [vmem:[%s2635 + $0x38] sm:$0xff]
    %v2645 = vsel %vm233, %v2632, 0
    %2647 = vmatprep.subr.mxu0 0.0
    %2648 = vmatpush1.msra.mxu0 %v2636
    %2649 = vmatprep.subr.mxu0 0.0
    %2650 = vmatpush1.msra.mxu0 %v2637
    %2651 = vmatprep.subr.mxu0 0.0
    %2652 = vmatpush1.msra.mxu0 %v2638
    %2653 = vmatprep.subr.mxu0 0.0
    %2654 = vmatpush1.msra.mxu0 %v2639
    %2655 = vmatprep.subr.mxu0 0.0
    %2656 = vmatpush1.msra.mxu0 %v2640
    %2657 = vmatprep.subr.mxu0 0.0
    %2658 = vmatpush1.msra.mxu0 %v2641
    %2659 = vmatprep.subr.mxu0 0.0
    %2660 = vmatpush1.msra.mxu0 %v2642
    %2661 = vmatprep.subr.mxu0 0.0
    %2662 = vmatpush1.msra.mxu0 %v2643
    %2663 = vmatprep.subr.mxu0 0.0
    %2664 = vmatpush1.msra.mxu0 0.0
    %2665 = vmatprep.subr.mxu0 0.0
    %2666 = vmatpush1.msra.mxu0 0.0
    %2667 = vmatprep.subr.mxu0 0.0
    %2668 = vmatpush1.msra.mxu0 0.0
    %2669 = vmatprep.subr.mxu0 0.0
    %2670 = vmatpush1.msra.mxu0 0.0
    %2671 = vmatprep.subr.mxu0 0.0
    %2672 = vmatpush1.msra.mxu0 0.0
    %2673 = vmatprep.subr.mxu0 0.0
    %2674 = vmatpush1.msra.mxu0 0.0
    %2675 = vmatprep.subr.mxu0 0.0
    %2676 = vmatpush1.msra.mxu0 0.0
    %2677 = vmatprep.subr.mxu0 0.0
    %2678 = vmatpush1.msra.mxu0 0.0
    %2679 = vmatprep.subr.mxu0 0.0
    %2680 = vmatpush1.msra.mxu0 0.0
    %2681 = vmatprep.subr.mxu0 0.0
    %2682 = vmatpush1.msra.mxu0 0.0
    %2683 = vmatprep.subr.mxu0 0.0
    %2684 = vmatpush1.msra.mxu0 0.0
    %2685 = vmatprep.subr.mxu0 0.0
    %2686 = vmatpush1.msra.mxu0 0.0
    %2687 = vmatprep.subr.mxu0 0.0
    %2688 = vmatpush1.msra.mxu0 0.0
    %2689 = vmatprep.subr.mxu0 0.0
    %2690 = vmatpush1.msra.mxu0 0.0
    %2691 = vmatprep.subr.mxu0 0.0
    %2692 = vmatpush1.msra.mxu0 0.0
    %2693 = vmatprep.subr.mxu0 0.0
    %2694 = vmatpush1.msra.mxu0 0.0
    %2695 = vmatprep.subr.mxu0 0.0
    %2696 = vmatpush1.msra.mxu0 0.0
    %2697 = vmatprep.subr.mxu0 0.0
    %2698 = vmatpush1.msra.mxu0 0.0
    %2699 = vmatprep.subr.mxu0 0.0
    %2700 = vmatpush1.msra.mxu0 0.0
    %2701 = vmatprep.subr.mxu0 0.0
    %2702 = vmatpush1.msra.mxu0 0.0
    %2703 = vmatprep.subr.mxu0 0.0
    %2704 = vmatpush1.msra.mxu0 0.0
    %2705 = vmatprep.subr.mxu0 0.0
    %2706 = vmatpush1.msra.mxu0 0.0
    %2707 = vmatprep.subr.mxu0 0.0
    %2708 = vmatpush1.msra.mxu0 0.0
    %2709 = vmatprep.subr.mxu0 0.0
    %2710 = vmatpush1.msra.mxu0 0.0
    %2711 = vmatprep.mubr.f32.mxu0 0.0
    %2712 = vmatmul.mubr.f32.gmra.mrb[0].mxu0 %v2645
    %v2713 = vpop.f32.mrb[0].mxu0
    %v2714 = vadd.f32 0.0, %v2713
    %v2715 = vpop.f32.mrb[0].mxu0
    %2716 = vdwg.mxu0
    %v2718 = vsel %vm233, %v2549, 0
    %2720 = vmatprep.subr.mxu0 0.0
    %2721 = vmatpush1.msra.mxu0 %v2552
    %2722 = vmatprep.subr.mxu0 0.0
    %2723 = vmatpush1.msra.mxu0 %v2553
    %2724 = vmatprep.subr.mxu0 0.0
    %2725 = vmatpush1.msra.mxu0 %v2554
    %2726 = vmatprep.subr.mxu0 0.0
    %2727 = vmatpush1.msra.mxu0 %v2555
    %2728 = vmatprep.subr.mxu0 0.0
    %2729 = vmatpush1.msra.mxu0 %v2556
    %2730 = vmatprep.subr.mxu0 0.0
    %2731 = vmatpush1.msra.mxu0 %v2557
    %2732 = vmatprep.subr.mxu0 0.0
    %2733 = vmatpush1.msra.mxu0 %v2558
    %2734 = vmatprep.subr.mxu0 0.0
    %2735 = vmatpush1.msra.mxu0 %v2559
    %2736 = vmatprep.subr.mxu0 0.0
    %2737 = vmatpush1.msra.mxu0 0.0
    %2738 = vmatprep.subr.mxu0 0.0
    %2739 = vmatpush1.msra.mxu0 0.0
    %2740 = vmatprep.subr.mxu0 0.0
    %2741 = vmatpush1.msra.mxu0 0.0
    %2742 = vmatprep.subr.mxu0 0.0
    %2743 = vmatpush1.msra.mxu0 0.0
    %2744 = vmatprep.subr.mxu0 0.0
    %2745 = vmatpush1.msra.mxu0 0.0
    %2746 = vmatprep.subr.mxu0 0.0
    %2747 = vmatpush1.msra.mxu0 0.0
    %2748 = vmatprep.subr.mxu0 0.0
    %2749 = vmatpush1.msra.mxu0 0.0
    %2750 = vmatprep.subr.mxu0 0.0
    %2751 = vmatpush1.msra.mxu0 0.0
    %2752 = vmatprep.subr.mxu0 0.0
    %2753 = vmatpush1.msra.mxu0 0.0
    %2754 = vmatprep.subr.mxu0 0.0
    %2755 = vmatpush1.msra.mxu0 0.0
    %2756 = vmatprep.subr.mxu0 0.0
    %2757 = vmatpush1.msra.mxu0 0.0
    %2758 = vmatprep.subr.mxu0 0.0
    %2759 = vmatpush1.msra.mxu0 0.0
    %2760 = vmatprep.subr.mxu0 0.0
    %2761 = vmatpush1.msra.mxu0 0.0
    %2762 = vmatprep.subr.mxu0 0.0
    %2763 = vmatpush1.msra.mxu0 0.0
    %2764 = vmatprep.subr.mxu0 0.0
    %2765 = vmatpush1.msra.mxu0 0.0
    %2766 = vmatprep.subr.mxu0 0.0
    %2767 = vmatpush1.msra.mxu0 0.0
    %2768 = vmatprep.subr.mxu0 0.0
    %2769 = vmatpush1.msra.mxu0 0.0
    %2770 = vmatprep.subr.mxu0 0.0
    %2771 = vmatpush1.msra.mxu0 0.0
    %2772 = vmatprep.subr.mxu0 0.0
    %2773 = vmatpush1.msra.mxu0 0.0
    %2774 = vmatprep.subr.mxu0 0.0
    %2775 = vmatpush1.msra.mxu0 0.0
    %2776 = vmatprep.subr.mxu0 0.0
    %2777 = vmatpush1.msra.mxu0 0.0
    %2778 = vmatprep.subr.mxu0 0.0
    %2779 = vmatpush1.msra.mxu0 0.0
    %2780 = vmatprep.subr.mxu0 0.0
    %2781 = vmatpush1.msra.mxu0 0.0
    %2782 = vmatprep.subr.mxu0 0.0
    %2783 = vmatpush1.msra.mxu0 0.0
    %2784 = vmatprep.mubr.f32.mxu0 0.0
    %2785 = vmatmul.mubr.f32.gmra.mrb[0].mxu0 %v2718
    %v2786 = vpop.f32.mrb[0].mxu0
    %v2787 = vadd.f32 %v2714, %v2786
    %v2788 = vpop.f32.mrb[0].mxu0
    %2789 = vdwg.mxu0
    %v2790 = vld [vmem:[%s18] sm:$0x1]
    %v2792 = vlaneseq
    %v2793 = vshrl.u32 %v2792, 7
    %v2794 = vsub.s32 0, %v2793
    %v2795 = vrot.slane %v2790, %v2794
    %v2797 = vadd.f32 %v2787, %v2795
    %v2798 = vld [vmem:[%s19] sm:$0x3]
    %v2799 = vmul.f32 %v2797, 0.5
    %v2800 = vmul.f32 %v2799, 1.442695
    %v2801 = vpow.pop %v2800
    %2803 = vrot.lane.b32.xlu0 %v2801, 120
    %v2804 = vpop.permute.xlu0 %2803
    %v2806 = vmul.f32 %v2798, %v2804
    %v2807 = vadd.f32 %v2806, %v2797
    %vm2808 = vcmask 58368
    %2809 = vst.msk [vmem:[#allocation2] sm:$0x3] %vm2808, %v2807
    %v2810 = vadd.f32 %v2797, 1.0
    %v2811 = vmul.f32 %v2797, %v2797
    %2813 = vrot.lane.b32.xlu0 %v2811, 8
    %v2814 = vpop.permute.xlu0 %2813
    %v2816 = vsub.f32 %v2810, %v2814
    %v2817 = vmul.f32 %v2797, 1.442695
    %v2818 = vpow.pop %v2817
    %v2819 = vsub.f32 %v2816, %v2818
    %2821 = vrot.lane.b32.xlu0 %v2819, 120
    %v2822 = vpop.permute.xlu0 %2821
    %v2824 = vsel %vm2808, %v2822, 0.0
    %2825 = vadd.xlane.f32.xlu0 %v2824
    %v2826 = vpop.xlane.xlu0 %2825
    %vm2827 = vcmask 1041408
    %v2828 = vsel %vm2827, %v2826, 0.0
    %v2829 = vrot.slane %v2828, 4
    %v2830 = vadd.f32 %v2828, %v2829
    %v2831 = vrot.slane %v2830, 2
    %v2832 = vadd.f32 %v2830, %v2831
    %v2833 = vrot.slane %v2832, 1
    %v2834 = vadd.f32 %v2832, %v2833
    %v2835 = vmul.f32 %v2834, -0.5
    %vm2836 = vcmask 0
    %2837 = vst.msk [vmem:[#allocation4] sm:$0x1] %vm2836, %v2835
    // Predicated region
    $region82: #{encoder_forward.1} parent=1 // pred_check
      _
    $region83: #{encoder_forward.1} parent=1 // pred_check_branch
      %2839 = sbr.rel (0) target = $region85
    $region84: #{encoder_forward.1} parent=1 // pred_region
      %s2841 = ssub.s32 32, 32
      %2842 = vsyncadd [#allocation3], %s2841
      %s2844 = sshll.u32 [#allocation2], 4
      %s2845 = int_to_ptr.vmem [resolvable:$true] %s2844
      %2847 = dma.vmem_to_hbm [thread:$0]  %s2845, 32, %s20, [#allocation3]
    $region85: #{encoder_forward.1} parent=1 // pred_fallthru
      _
    // Predicated region
    $region86: #{encoder_forward.1} parent=1 // pred_check
      _
    $region87: #{encoder_forward.1} parent=1 // pred_check_branch
      %2849 = sbr.rel (0) target = $region89
    $region88: #{encoder_forward.1} parent=1 // pred_region
      %s2851 = ssub.s32 16, 16
      %2852 = vsyncadd [#allocation5], %s2851
      %s2854 = sshll.u32 [#allocation4], 4
      %s2855 = int_to_ptr.vmem [resolvable:$true] %s2854
      %2857 = dma.vmem_to_hbm [thread:$0]  %s2855, 16, %s21, [#allocation5]
    $region89: #{encoder_forward.1} parent=1 // pred_fallthru
      _
    // Predicated region
    $region90: #{encoder_forward.1} parent=1 // pred_check
      _
    $region91: #{encoder_forward.1} parent=1 // pred_check_branch
      %2859 = sbr.rel (0) target = $region93
    $region92: #{encoder_forward.1} parent=1 // pred_region
      %2860 = dma.done [#allocation3], 32
    $region93: #{encoder_forward.1} parent=1 // pred_fallthru
      _
    // Predicated region
    $region94: #{encoder_forward.1} parent=1 // pred_check
      _
    $region95: #{encoder_forward.1} parent=1 // pred_check_branch
      %2862 = sbr.rel (0) target = $region97
    $region96: #{encoder_forward.1} parent=1 // pred_region
      %2863 = dma.done [#allocation5], 16
    $region97: #{encoder_forward.1} parent=1 // pred_fallthru
      _
    %2864 = vsyncpa [#allocation3], 1
    %2865 = vsyncpa [#allocation5], 1

</llo_original>
